<compile_context>
chip_gen: v7x
topology: tpu7x:2x2x1
jax: 0.10.0
libtpu: 0.0.40
codegen_flags: <defaults>
</compile_context>

<pallas_src>
import math
from functools import partial

import jax
import jax.numpy as jnp
from jax.experimental import pallas as pl

# ---------------- small BERT-like config ----------------
VOCAB = 30
TYPE_VOCAB = 2
MAX_POS = 16
HIDDEN = 32
N_HEADS = 4
HEAD_DIM = HIDDEN // N_HEADS
N_LAYERS = 2
INTERMEDIATE = 64
NUM_LABELS = 16          # stands in for 2670
NUM_LABELS_PAD = 128     # lane-dense classifier output (multiple of 128)
LN_EPS = 1e-12


def _gelu(x):
    # tanh approximation of GELU (keeps the op on the EUP).
    # TODO(synk): swap to erf-GELU if exact parity with BertModel is needed.
    c = math.sqrt(2.0 / math.pi)
    return 0.5 * x * (1.0 + jnp.tanh(c * (x + 0.044715 * x * x * x)))


def _layernorm(h, g, b):
    mu = jnp.mean(h, axis=-1, keepdims=True)
    var = jnp.mean((h - mu) ** 2, axis=-1, keepdims=True)
    return (h - mu) * jax.lax.rsqrt(var + LN_EPS) * g + b


def _mm(a, w):
    # bf16 MXU path with f32 accumulation; surrounding math stays f32.
    return jnp.dot(a.astype(jnp.bfloat16), w.astype(jnp.bfloat16),
                   preferred_element_type=jnp.float32)


# ---------------- the single fused forward kernel ----------------
def _bert_forward_kernel(
        emb_ref, mask_ref,
        emb_g_ref, emb_b_ref,
        wqkv_ref, bqkv_ref, wo_ref, bo_ref, ln1g_ref, ln1b_ref,
        wi_ref, bi_ref, wff_ref, bff_ref, ln2g_ref, ln2b_ref,
        pool_w_ref, pool_b_ref, cls_w_ref, cls_b_ref,
        logits_ref, *, batch, seq):
    # embeddings LayerNorm (dropout = identity at inference)
    x = _layernorm(emb_ref[...], emb_g_ref[...], emb_b_ref[...])   # (B*S, H)
    mask = mask_ref[...]                                           # (B, S) additive

    scale = 1.0 / math.sqrt(HEAD_DIM)
    n_layers = wqkv_ref.shape[0]

    for l in range(n_layers):          # static unrolled loop over layers
        # fused QKV projection: one (H, 3H) matmul instead of three calls
        qkv = _mm(x, wqkv_ref[l]) + bqkv_ref[l]                    # (B*S, 3H)
        q = qkv[:, 0 * HIDDEN:1 * HIDDEN]
        k = qkv[:, 1 * HIDDEN:2 * HIDDEN]
        v = qkv[:, 2 * HIDDEN:3 * HIDDEN]

        # multi-head attention; heads split by static lane slices in-kernel
        ctx_rows = []
        for b in range(batch):
            qb = q[b * seq:(b + 1) * seq, :]                       # (S, H)
            kb = k[b * seq:(b + 1) * seq, :]
            vb = v[b * seq:(b + 1) * seq, :]
            mb = mask[b:b + 1, :]                                  # (1, S)
            heads = []
            for h in range(N_HEADS):
                lo, hi = h * HEAD_DIM, (h + 1) * HEAD_DIM
                s = _mm(qb[:, lo:hi], kb[:, lo:hi].T) * scale + mb  # (S, S)
                s = s - jnp.max(s, axis=-1, keepdims=True)
                e = jnp.exp(s)
                p = e * pl.reciprocal(jnp.sum(e, axis=-1, keepdims=True),
                                      approx=True)
                heads.append(_mm(p, vb[:, lo:hi]))                  # (S, Dh)
            ctx_rows.append(jnp.concatenate(heads, axis=-1))        # (S, H)
        ctx = jnp.concatenate(ctx_rows, axis=0)                     # (B*S, H)

        # output projection + residual + LayerNorm (dropout = identity)
        attn_out = _mm(ctx, wo_ref[l]) + bo_ref[l]
        x = _layernorm(attn_out + x, ln1g_ref[l], ln1b_ref[l])

        # feed-forward + residual + LayerNorm (dropout = identity)
        inter = _gelu(_mm(x, wi_ref[l]) + bi_ref[l])
        ff = _mm(inter, wff_ref[l]) + bff_ref[l]
        x = _layernorm(ff + x, ln2g_ref[l], ln2b_ref[l])

    # pooler on the [CLS] token of every sequence, then classifier
    cls_tok = jnp.concatenate(
        [x[b * seq:b * seq + 1, :] for b in range(batch)], axis=0)  # (B, H)
    pooled = jnp.tanh(_mm(cls_tok, pool_w_ref[...]) + pool_b_ref[...])
    # dropout(0.1) = identity at inference
    logits_ref[...] = _mm(pooled, cls_w_ref[...]) + cls_b_ref[...]  # (B, 128)


# ---------------- deterministic parameter init ----------------
def init_params(key):
    keys = iter(jax.random.split(key, 64))

    def nrm(shape):
        return 0.02 * jax.random.normal(next(keys), shape, jnp.float32)

    L, H, I = N_LAYERS, HIDDEN, INTERMEDIATE
    cls_w = jnp.zeros((H, NUM_LABELS_PAD), jnp.float32)
    cls_w = cls_w.at[:, :NUM_LABELS].set(nrm((H, NUM_LABELS)))

    return {
        "word_emb": nrm((VOCAB, H)),
        "pos_emb": nrm((MAX_POS, H)),
        "type_emb": nrm((TYPE_VOCAB, H)),
        "emb_ln_g": jnp.ones((1, H), jnp.float32),
        "emb_ln_b": jnp.zeros((1, H), jnp.float32),
        # per-layer weights stacked along a leading layer axis (static-indexed
        # inside the kernel), with Q|K|V fused into a single (H, 3H) matrix
        "wqkv": nrm((L, H, 3 * H)),
        "bqkv": jnp.zeros((L, 1, 3 * H), jnp.float32),
        "wo": nrm((L, H, H)), "bo": jnp.zeros((L, 1, H), jnp.float32),
        "ln1_g": jnp.ones((L, 1, H), jnp.float32),
        "ln1_b": jnp.zeros((L, 1, H), jnp.float32),
        "wi": nrm((L, H, I)), "bi": jnp.zeros((L, 1, I), jnp.float32),
        "wff": nrm((L, I, H)), "bff": jnp.zeros((L, 1, H), jnp.float32),
        "ln2_g": jnp.ones((L, 1, H), jnp.float32),
        "ln2_b": jnp.zeros((L, 1, H), jnp.float32),
        "pool_w": nrm((H, H)), "pool_b": jnp.zeros((1, H), jnp.float32),
        "cls_w": cls_w,                                  # zero-padded columns
        "cls_b": jnp.zeros((1, NUM_LABELS_PAD), jnp.float32),
    }


# ---------------- forward (embedding gather in JAX, rest in one kernel) ------
def forward(params, input_ids, token_type_ids=None, attention_mask=None,
            labels=None):
    B, S = input_ids.shape
    if token_type_ids is None:
        token_type_ids = jnp.zeros_like(input_ids)
    if attention_mask is None:
        attention_mask = jnp.ones_like(input_ids)

    # embedding lookups stay in plain JAX (table gather).
    pos = jnp.arange(S)
    emb = (jnp.take(params["word_emb"], input_ids, axis=0)
           + jnp.take(params["pos_emb"], pos, axis=0)[None, :, :]
           + jnp.take(params["type_emb"], token_type_ids, axis=0))
    emb2d = emb.reshape(B * S, HIDDEN).astype(jnp.float32)

    # additive attention mask, (B, S): 0 for real tokens, -10000 for pads
    ext_mask = (1.0 - attention_mask.astype(jnp.float32)) * -10000.0

    logits_pad = pl.pallas_call(
        partial(_bert_forward_kernel, batch=B, seq=S),
        out_shape=jax.ShapeDtypeStruct((B, NUM_LABELS_PAD), jnp.float32),
    )(emb2d, ext_mask,
      params["emb_ln_g"], params["emb_ln_b"],
      params["wqkv"], params["bqkv"], params["wo"], params["bo"],
      params["ln1_g"], params["ln1_b"],
      params["wi"], params["bi"], params["wff"], params["bff"],
      params["ln2_g"], params["ln2_b"],
      params["pool_w"], params["pool_b"], params["cls_w"], params["cls_b"])
    logits = logits_pad[:, :NUM_LABELS]

    if labels is not None:
        # CrossEntropyLoss(logits, argmax(labels, 1))  (plain-JAX glue)
        gt = jnp.argmax(labels, axis=1)
        logp = jax.nn.log_softmax(logits, axis=-1)
        return -jnp.mean(jnp.take_along_axis(logp, gt[:, None], axis=1))
    return logits


if __name__ == "__main__":
    key = jax.random.PRNGKey(0)
    k_param, k_ids = jax.random.split(key)

    params = init_params(k_param)

    B, S = 2, 8
    input_ids = jax.random.randint(k_ids, (B, S), 0, VOCAB, dtype=jnp.int32)
    token_type_ids = jnp.zeros((B, S), jnp.int32)
    attention_mask = jnp.ones((B, S), jnp.int32)

    logits = forward(params, input_ids, token_type_ids, attention_mask)
    logits = jax.block_until_ready(logits)
    assert logits.shape == (B, NUM_LABELS) and logits.dtype == jnp.float32
    print("KERNEL_OK")
</pallas_src>

<mosaic_0001>
module attributes {stable_mosaic.version = 11 : i64} {
  func.func @_bert_forward_kernel(%arg0: memref<16x32xf32, #tpu.memory_space<vmem>>, %arg1: memref<2x8xf32, #tpu.memory_space<vmem>>, %arg2: memref<1x32xf32, #tpu.memory_space<vmem>>, %arg3: memref<1x32xf32, #tpu.memory_space<vmem>>, %arg4: memref<2x32x96xf32, #tpu.memory_space<vmem>>, %arg5: memref<2x1x96xf32, #tpu.memory_space<vmem>>, %arg6: memref<2x32x32xf32, #tpu.memory_space<vmem>>, %arg7: memref<2x1x32xf32, #tpu.memory_space<vmem>>, %arg8: memref<2x1x32xf32, #tpu.memory_space<vmem>>, %arg9: memref<2x1x32xf32, #tpu.memory_space<vmem>>, %arg10: memref<2x32x64xf32, #tpu.memory_space<vmem>>, %arg11: memref<2x1x64xf32, #tpu.memory_space<vmem>>, %arg12: memref<2x64x32xf32, #tpu.memory_space<vmem>>, %arg13: memref<2x1x32xf32, #tpu.memory_space<vmem>>, %arg14: memref<2x1x32xf32, #tpu.memory_space<vmem>>, %arg15: memref<2x1x32xf32, #tpu.memory_space<vmem>>, %arg16: memref<32x32xf32, #tpu.memory_space<vmem>>, %arg17: memref<1x32xf32, #tpu.memory_space<vmem>>, %arg18: memref<32x128xf32, #tpu.memory_space<vmem>>, %arg19: memref<1x128xf32, #tpu.memory_space<vmem>>, %arg20: memref<2x128xf32, #tpu.memory_space<vmem>>) attributes {dimension_semantics = [], scalar_prefetch = 0 : i64, scratch_operands = 0 : i64, tpu.core_type = #tpu.core_type<tc>} {
    %c0 = arith.constant 0 : index
    %c0_0 = arith.constant 0 : index
    %0 = vector.load %arg0[%c0, %c0_0] : memref<16x32xf32, #tpu.memory_space<vmem>>, vector<16x32xf32>
    %c0_1 = arith.constant 0 : index
    %c0_2 = arith.constant 0 : index
    %1 = vector.load %arg2[%c0_1, %c0_2] : memref<1x32xf32, #tpu.memory_space<vmem>>, vector<1x32xf32>
    %c0_3 = arith.constant 0 : index
    %c0_4 = arith.constant 0 : index
    %2 = vector.load %arg3[%c0_3, %c0_4] : memref<1x32xf32, #tpu.memory_space<vmem>>, vector<1x32xf32>
    %cst = arith.constant dense<0.000000e+00> : vector<16xf32>
    %3 = vector.multi_reduction <add>, %0, %cst [1] : vector<16x32xf32> to vector<16xf32>
    %4 = vector.shape_cast %3 : vector<16xf32> to vector<16x1xf32>
    %cst_5 = arith.constant 3.200000e+01 : f32
    %5 = vector.broadcast %cst_5 : f32 to vector<16x1xf32>
    %6 = arith.divf %4, %5 : vector<16x1xf32>
    %7 = vector.broadcast %6 : vector<16x1xf32> to vector<16x32xf32>
    %8 = arith.subf %0, %7 : vector<16x32xf32>
    %9 = arith.mulf %8, %8 : vector<16x32xf32>
    %cst_6 = arith.constant dense<0.000000e+00> : vector<16xf32>
    %10 = vector.multi_reduction <add>, %9, %cst_6 [1] : vector<16x32xf32> to vector<16xf32>
    %11 = vector.shape_cast %10 : vector<16xf32> to vector<16x1xf32>
    %cst_7 = arith.constant 3.200000e+01 : f32
    %12 = vector.broadcast %cst_7 : f32 to vector<16x1xf32>
    %13 = arith.divf %11, %12 : vector<16x1xf32>
    %14 = vector.broadcast %6 : vector<16x1xf32> to vector<16x32xf32>
    %15 = arith.subf %0, %14 : vector<16x32xf32>
    %cst_8 = arith.constant 9.99999996E-13 : f32
    %16 = vector.broadcast %cst_8 : f32 to vector<16x1xf32>
    %17 = arith.addf %13, %16 : vector<16x1xf32>
    %18 = math.rsqrt %17 : vector<16x1xf32>
    %19 = vector.broadcast %18 : vector<16x1xf32> to vector<16x32xf32>
    %20 = arith.mulf %15, %19 : vector<16x32xf32>
    %21 = vector.broadcast %1 : vector<1x32xf32> to vector<16x32xf32>
    %22 = arith.mulf %20, %21 : vector<16x32xf32>
    %23 = vector.broadcast %2 : vector<1x32xf32> to vector<16x32xf32>
    %24 = arith.addf %22, %23 : vector<16x32xf32>
    %c0_9 = arith.constant 0 : index
    %c0_10 = arith.constant 0 : index
    %25 = vector.load %arg1[%c0_9, %c0_10] : memref<2x8xf32, #tpu.memory_space<vmem>>, vector<2x8xf32>
    %c0_11 = arith.constant 0 : index
    %c0_12 = arith.constant 0 : index
    %c0_13 = arith.constant 0 : index
    %26 = vector.load %arg4[%c0_11, %c0_12, %c0_13] : memref<2x32x96xf32, #tpu.memory_space<vmem>>, vector<1x32x96xf32>
    %27 = vector.shape_cast %26 : vector<1x32x96xf32> to vector<32x96xf32>
    %28 = arith.truncf %24 : vector<16x32xf32> to vector<16x32xbf16>
    %29 = arith.truncf %27 : vector<32x96xf32> to vector<32x96xbf16>
    %cst_14 = arith.constant dense<0.000000e+00> : vector<16x96xf32>
    %30 = tpu.matmul %28, %29, %cst_14 {dimension_numbers = #tpu.dot_dimension_numbers<[1], [0], [0], [1], [0, 0, 1, 1], [], []>} : vector<16x32xbf16>, vector<32x96xbf16>, vector<16x96xf32> -> vector<16x96xf32>
    %c0_15 = arith.constant 0 : index
    %c0_16 = arith.constant 0 : index
    %c0_17 = arith.constant 0 : index
    %31 = vector.load %arg5[%c0_15, %c0_16, %c0_17] : memref<2x1x96xf32, #tpu.memory_space<vmem>>, vector<1x1x96xf32>
    %32 = vector.shape_cast %31 : vector<1x1x96xf32> to vector<1x96xf32>
    %33 = vector.broadcast %32 : vector<1x96xf32> to vector<16x96xf32>
    %34 = arith.addf %30, %33 : vector<16x96xf32>
    %35 = vector.extract_strided_slice %34 {offsets = [0, 0], sizes = [16, 32], strides = [1, 1]} : vector<16x96xf32> to vector<16x32xf32>
    %36 = vector.extract_strided_slice %34 {offsets = [0, 32], sizes = [16, 32], strides = [1, 1]} : vector<16x96xf32> to vector<16x32xf32>
    %37 = vector.extract_strided_slice %34 {offsets = [0, 64], sizes = [16, 32], strides = [1, 1]} : vector<16x96xf32> to vector<16x32xf32>
    %38 = vector.extract_strided_slice %35 {offsets = [0, 0], sizes = [8, 32], strides = [1, 1]} : vector<16x32xf32> to vector<8x32xf32>
    %39 = vector.extract_strided_slice %36 {offsets = [0, 0], sizes = [8, 32], strides = [1, 1]} : vector<16x32xf32> to vector<8x32xf32>
    %40 = vector.extract_strided_slice %37 {offsets = [0, 0], sizes = [8, 32], strides = [1, 1]} : vector<16x32xf32> to vector<8x32xf32>
    %41 = vector.extract_strided_slice %25 {offsets = [0, 0], sizes = [1, 8], strides = [1, 1]} : vector<2x8xf32> to vector<1x8xf32>
    %42 = vector.extract_strided_slice %38 {offsets = [0, 0], sizes = [8, 8], strides = [1, 1]} : vector<8x32xf32> to vector<8x8xf32>
    %43 = vector.extract_strided_slice %39 {offsets = [0, 0], sizes = [8, 8], strides = [1, 1]} : vector<8x32xf32> to vector<8x8xf32>
    %44 = tpu.transpose %43, [1, 0] : vector<8x8xf32> -> vector<8x8xf32>
    %45 = arith.truncf %42 : vector<8x8xf32> to vector<8x8xbf16>
    %46 = arith.truncf %44 : vector<8x8xf32> to vector<8x8xbf16>
    %cst_18 = arith.constant dense<0.000000e+00> : vector<8x8xf32>
    %47 = tpu.matmul %45, %46, %cst_18 {dimension_numbers = #tpu.dot_dimension_numbers<[1], [0], [0], [1], [0, 0, 1, 1], [], []>} : vector<8x8xbf16>, vector<8x8xbf16>, vector<8x8xf32> -> vector<8x8xf32>
    %cst_19 = arith.constant 0.353553385 : f32
    %48 = vector.broadcast %cst_19 : f32 to vector<8x8xf32>
    %49 = arith.mulf %47, %48 : vector<8x8xf32>
    %50 = vector.broadcast %41 : vector<1x8xf32> to vector<8x8xf32>
    %51 = arith.addf %49, %50 : vector<8x8xf32>
    %cst_20 = arith.constant dense<0xFF800000> : vector<8xf32>
    %52 = vector.multi_reduction <maximumf>, %51, %cst_20 [1] : vector<8x8xf32> to vector<8xf32>
    %53 = vector.shape_cast %52 : vector<8xf32> to vector<8x1xf32>
    %54 = vector.broadcast %53 : vector<8x1xf32> to vector<8x8xf32>
    %55 = arith.subf %51, %54 : vector<8x8xf32>
    %56 = math.exp %55 : vector<8x8xf32>
    %cst_21 = arith.constant dense<0.000000e+00> : vector<8xf32>
    %57 = vector.multi_reduction <add>, %56, %cst_21 [1] : vector<8x8xf32> to vector<8xf32>
    %58 = vector.shape_cast %57 : vector<8xf32> to vector<8x1xf32>
    %59 = tpu.reciprocal %58 {approx = true} : vector<8x1xf32> -> vector<8x1xf32>
    %60 = vector.broadcast %59 : vector<8x1xf32> to vector<8x8xf32>
    %61 = arith.mulf %56, %60 : vector<8x8xf32>
    %62 = vector.extract_strided_slice %40 {offsets = [0, 0], sizes = [8, 8], strides = [1, 1]} : vector<8x32xf32> to vector<8x8xf32>
    %63 = arith.truncf %61 : vector<8x8xf32> to vector<8x8xbf16>
    %64 = arith.truncf %62 : vector<8x8xf32> to vector<8x8xbf16>
    %cst_22 = arith.constant dense<0.000000e+00> : vector<8x8xf32>
    %65 = tpu.matmul %63, %64, %cst_22 {dimension_numbers = #tpu.dot_dimension_numbers<[1], [0], [0], [1], [0, 0, 1, 1], [], []>} : vector<8x8xbf16>, vector<8x8xbf16>, vector<8x8xf32> -> vector<8x8xf32>
    %66 = vector.extract_strided_slice %38 {offsets = [0, 8], sizes = [8, 8], strides = [1, 1]} : vector<8x32xf32> to vector<8x8xf32>
    %67 = vector.extract_strided_slice %39 {offsets = [0, 8], sizes = [8, 8], strides = [1, 1]} : vector<8x32xf32> to vector<8x8xf32>
    %68 = tpu.transpose %67, [1, 0] : vector<8x8xf32> -> vector<8x8xf32>
    %69 = arith.truncf %66 : vector<8x8xf32> to vector<8x8xbf16>
    %70 = arith.truncf %68 : vector<8x8xf32> to vector<8x8xbf16>
    %cst_23 = arith.constant dense<0.000000e+00> : vector<8x8xf32>
    %71 = tpu.matmul %69, %70, %cst_23 {dimension_numbers = #tpu.dot_dimension_numbers<[1], [0], [0], [1], [0, 0, 1, 1], [], []>} : vector<8x8xbf16>, vector<8x8xbf16>, vector<8x8xf32> -> vector<8x8xf32>
    %cst_24 = arith.constant 0.353553385 : f32
    %72 = vector.broadcast %cst_24 : f32 to vector<8x8xf32>
    %73 = arith.mulf %71, %72 : vector<8x8xf32>
    %74 = vector.broadcast %41 : vector<1x8xf32> to vector<8x8xf32>
    %75 = arith.addf %73, %74 : vector<8x8xf32>
    %cst_25 = arith.constant dense<0xFF800000> : vector<8xf32>
    %76 = vector.multi_reduction <maximumf>, %75, %cst_25 [1] : vector<8x8xf32> to vector<8xf32>
    %77 = vector.shape_cast %76 : vector<8xf32> to vector<8x1xf32>
    %78 = vector.broadcast %77 : vector<8x1xf32> to vector<8x8xf32>
    %79 = arith.subf %75, %78 : vector<8x8xf32>
    %80 = math.exp %79 : vector<8x8xf32>
    %cst_26 = arith.constant dense<0.000000e+00> : vector<8xf32>
    %81 = vector.multi_reduction <add>, %80, %cst_26 [1] : vector<8x8xf32> to vector<8xf32>
    %82 = vector.shape_cast %81 : vector<8xf32> to vector<8x1xf32>
    %83 = tpu.reciprocal %82 {approx = true} : vector<8x1xf32> -> vector<8x1xf32>
    %84 = vector.broadcast %83 : vector<8x1xf32> to vector<8x8xf32>
    %85 = arith.mulf %80, %84 : vector<8x8xf32>
    %86 = vector.extract_strided_slice %40 {offsets = [0, 8], sizes = [8, 8], strides = [1, 1]} : vector<8x32xf32> to vector<8x8xf32>
    %87 = arith.truncf %85 : vector<8x8xf32> to vector<8x8xbf16>
    %88 = arith.truncf %86 : vector<8x8xf32> to vector<8x8xbf16>
    %cst_27 = arith.constant dense<0.000000e+00> : vector<8x8xf32>
    %89 = tpu.matmul %87, %88, %cst_27 {dimension_numbers = #tpu.dot_dimension_numbers<[1], [0], [0], [1], [0, 0, 1, 1], [], []>} : vector<8x8xbf16>, vector<8x8xbf16>, vector<8x8xf32> -> vector<8x8xf32>
    %90 = vector.extract_strided_slice %38 {offsets = [0, 16], sizes = [8, 8], strides = [1, 1]} : vector<8x32xf32> to vector<8x8xf32>
    %91 = vector.extract_strided_slice %39 {offsets = [0, 16], sizes = [8, 8], strides = [1, 1]} : vector<8x32xf32> to vector<8x8xf32>
    %92 = tpu.transpose %91, [1, 0] : vector<8x8xf32> -> vector<8x8xf32>
    %93 = arith.truncf %90 : vector<8x8xf32> to vector<8x8xbf16>
    %94 = arith.truncf %92 : vector<8x8xf32> to vector<8x8xbf16>
    %cst_28 = arith.constant dense<0.000000e+00> : vector<8x8xf32>
    %95 = tpu.matmul %93, %94, %cst_28 {dimension_numbers = #tpu.dot_dimension_numbers<[1], [0], [0], [1], [0, 0, 1, 1], [], []>} : vector<8x8xbf16>, vector<8x8xbf16>, vector<8x8xf32> -> vector<8x8xf32>
    %cst_29 = arith.constant 0.353553385 : f32
    %96 = vector.broadcast %cst_29 : f32 to vector<8x8xf32>
    %97 = arith.mulf %95, %96 : vector<8x8xf32>
    %98 = vector.broadcast %41 : vector<1x8xf32> to vector<8x8xf32>
    %99 = arith.addf %97, %98 : vector<8x8xf32>
    %cst_30 = arith.constant dense<0xFF800000> : vector<8xf32>
    %100 = vector.multi_reduction <maximumf>, %99, %cst_30 [1] : vector<8x8xf32> to vector<8xf32>
    %101 = vector.shape_cast %100 : vector<8xf32> to vector<8x1xf32>
    %102 = vector.broadcast %101 : vector<8x1xf32> to vector<8x8xf32>
    %103 = arith.subf %99, %102 : vector<8x8xf32>
    %104 = math.exp %103 : vector<8x8xf32>
    %cst_31 = arith.constant dense<0.000000e+00> : vector<8xf32>
    %105 = vector.multi_reduction <add>, %104, %cst_31 [1] : vector<8x8xf32> to vector<8xf32>
    %106 = vector.shape_cast %105 : vector<8xf32> to vector<8x1xf32>
    %107 = tpu.reciprocal %106 {approx = true} : vector<8x1xf32> -> vector<8x1xf32>
    %108 = vector.broadcast %107 : vector<8x1xf32> to vector<8x8xf32>
    %109 = arith.mulf %104, %108 : vector<8x8xf32>
    %110 = vector.extract_strided_slice %40 {offsets = [0, 16], sizes = [8, 8], strides = [1, 1]} : vector<8x32xf32> to vector<8x8xf32>
    %111 = arith.truncf %109 : vector<8x8xf32> to vector<8x8xbf16>
    %112 = arith.truncf %110 : vector<8x8xf32> to vector<8x8xbf16>
    %cst_32 = arith.constant dense<0.000000e+00> : vector<8x8xf32>
    %113 = tpu.matmul %111, %112, %cst_32 {dimension_numbers = #tpu.dot_dimension_numbers<[1], [0], [0], [1], [0, 0, 1, 1], [], []>} : vector<8x8xbf16>, vector<8x8xbf16>, vector<8x8xf32> -> vector<8x8xf32>
    %114 = vector.extract_strided_slice %38 {offsets = [0, 24], sizes = [8, 8], strides = [1, 1]} : vector<8x32xf32> to vector<8x8xf32>
    %115 = vector.extract_strided_slice %39 {offsets = [0, 24], sizes = [8, 8], strides = [1, 1]} : vector<8x32xf32> to vector<8x8xf32>
    %116 = tpu.transpose %115, [1, 0] : vector<8x8xf32> -> vector<8x8xf32>
    %117 = arith.truncf %114 : vector<8x8xf32> to vector<8x8xbf16>
    %118 = arith.truncf %116 : vector<8x8xf32> to vector<8x8xbf16>
    %cst_33 = arith.constant dense<0.000000e+00> : vector<8x8xf32>
    %119 = tpu.matmul %117, %118, %cst_33 {dimension_numbers = #tpu.dot_dimension_numbers<[1], [0], [0], [1], [0, 0, 1, 1], [], []>} : vector<8x8xbf16>, vector<8x8xbf16>, vector<8x8xf32> -> vector<8x8xf32>
    %cst_34 = arith.constant 0.353553385 : f32
    %120 = vector.broadcast %cst_34 : f32 to vector<8x8xf32>
    %121 = arith.mulf %119, %120 : vector<8x8xf32>
    %122 = vector.broadcast %41 : vector<1x8xf32> to vector<8x8xf32>
    %123 = arith.addf %121, %122 : vector<8x8xf32>
    %cst_35 = arith.constant dense<0xFF800000> : vector<8xf32>
    %124 = vector.multi_reduction <maximumf>, %123, %cst_35 [1] : vector<8x8xf32> to vector<8xf32>
    %125 = vector.shape_cast %124 : vector<8xf32> to vector<8x1xf32>
    %126 = vector.broadcast %125 : vector<8x1xf32> to vector<8x8xf32>
    %127 = arith.subf %123, %126 : vector<8x8xf32>
    %128 = math.exp %127 : vector<8x8xf32>
    %cst_36 = arith.constant dense<0.000000e+00> : vector<8xf32>
    %129 = vector.multi_reduction <add>, %128, %cst_36 [1] : vector<8x8xf32> to vector<8xf32>
    %130 = vector.shape_cast %129 : vector<8xf32> to vector<8x1xf32>
    %131 = tpu.reciprocal %130 {approx = true} : vector<8x1xf32> -> vector<8x1xf32>
    %132 = vector.broadcast %131 : vector<8x1xf32> to vector<8x8xf32>
    %133 = arith.mulf %128, %132 : vector<8x8xf32>
    %134 = vector.extract_strided_slice %40 {offsets = [0, 24], sizes = [8, 8], strides = [1, 1]} : vector<8x32xf32> to vector<8x8xf32>
    %135 = arith.truncf %133 : vector<8x8xf32> to vector<8x8xbf16>
    %136 = arith.truncf %134 : vector<8x8xf32> to vector<8x8xbf16>
    %cst_37 = arith.constant dense<0.000000e+00> : vector<8x8xf32>
    %137 = tpu.matmul %135, %136, %cst_37 {dimension_numbers = #tpu.dot_dimension_numbers<[1], [0], [0], [1], [0, 0, 1, 1], [], []>} : vector<8x8xbf16>, vector<8x8xbf16>, vector<8x8xf32> -> vector<8x8xf32>
    %138 = tpu.concatenate %65, %89, %113, %137 in 1 : vector<8x8xf32>, vector<8x8xf32>, vector<8x8xf32>, vector<8x8xf32> -> vector<8x32xf32>
    %139 = vector.extract_strided_slice %35 {offsets = [8, 0], sizes = [8, 32], strides = [1, 1]} : vector<16x32xf32> to vector<8x32xf32>
    %140 = vector.extract_strided_slice %36 {offsets = [8, 0], sizes = [8, 32], strides = [1, 1]} : vector<16x32xf32> to vector<8x32xf32>
    %141 = vector.extract_strided_slice %37 {offsets = [8, 0], sizes = [8, 32], strides = [1, 1]} : vector<16x32xf32> to vector<8x32xf32>
    %142 = vector.extract_strided_slice %25 {offsets = [1, 0], sizes = [1, 8], strides = [1, 1]} : vector<2x8xf32> to vector<1x8xf32>
    %143 = vector.extract_strided_slice %139 {offsets = [0, 0], sizes = [8, 8], strides = [1, 1]} : vector<8x32xf32> to vector<8x8xf32>
    %144 = vector.extract_strided_slice %140 {offsets = [0, 0], sizes = [8, 8], strides = [1, 1]} : vector<8x32xf32> to vector<8x8xf32>
    %145 = tpu.transpose %144, [1, 0] : vector<8x8xf32> -> vector<8x8xf32>
    %146 = arith.truncf %143 : vector<8x8xf32> to vector<8x8xbf16>
    %147 = arith.truncf %145 : vector<8x8xf32> to vector<8x8xbf16>
    %cst_38 = arith.constant dense<0.000000e+00> : vector<8x8xf32>
    %148 = tpu.matmul %146, %147, %cst_38 {dimension_numbers = #tpu.dot_dimension_numbers<[1], [0], [0], [1], [0, 0, 1, 1], [], []>} : vector<8x8xbf16>, vector<8x8xbf16>, vector<8x8xf32> -> vector<8x8xf32>
    %cst_39 = arith.constant 0.353553385 : f32
    %149 = vector.broadcast %cst_39 : f32 to vector<8x8xf32>
    %150 = arith.mulf %148, %149 : vector<8x8xf32>
    %151 = vector.broadcast %142 : vector<1x8xf32> to vector<8x8xf32>
    %152 = arith.addf %150, %151 : vector<8x8xf32>
    %cst_40 = arith.constant dense<0xFF800000> : vector<8xf32>
    %153 = vector.multi_reduction <maximumf>, %152, %cst_40 [1] : vector<8x8xf32> to vector<8xf32>
    %154 = vector.shape_cast %153 : vector<8xf32> to vector<8x1xf32>
    %155 = vector.broadcast %154 : vector<8x1xf32> to vector<8x8xf32>
    %156 = arith.subf %152, %155 : vector<8x8xf32>
    %157 = math.exp %156 : vector<8x8xf32>
    %cst_41 = arith.constant dense<0.000000e+00> : vector<8xf32>
    %158 = vector.multi_reduction <add>, %157, %cst_41 [1] : vector<8x8xf32> to vector<8xf32>
    %159 = vector.shape_cast %158 : vector<8xf32> to vector<8x1xf32>
    %160 = tpu.reciprocal %159 {approx = true} : vector<8x1xf32> -> vector<8x1xf32>
    %161 = vector.broadcast %160 : vector<8x1xf32> to vector<8x8xf32>
    %162 = arith.mulf %157, %161 : vector<8x8xf32>
    %163 = vector.extract_strided_slice %141 {offsets = [0, 0], sizes = [8, 8], strides = [1, 1]} : vector<8x32xf32> to vector<8x8xf32>
    %164 = arith.truncf %162 : vector<8x8xf32> to vector<8x8xbf16>
    %165 = arith.truncf %163 : vector<8x8xf32> to vector<8x8xbf16>
    %cst_42 = arith.constant dense<0.000000e+00> : vector<8x8xf32>
    %166 = tpu.matmul %164, %165, %cst_42 {dimension_numbers = #tpu.dot_dimension_numbers<[1], [0], [0], [1], [0, 0, 1, 1], [], []>} : vector<8x8xbf16>, vector<8x8xbf16>, vector<8x8xf32> -> vector<8x8xf32>
    %167 = vector.extract_strided_slice %139 {offsets = [0, 8], sizes = [8, 8], strides = [1, 1]} : vector<8x32xf32> to vector<8x8xf32>
    %168 = vector.extract_strided_slice %140 {offsets = [0, 8], sizes = [8, 8], strides = [1, 1]} : vector<8x32xf32> to vector<8x8xf32>
    %169 = tpu.transpose %168, [1, 0] : vector<8x8xf32> -> vector<8x8xf32>
    %170 = arith.truncf %167 : vector<8x8xf32> to vector<8x8xbf16>
    %171 = arith.truncf %169 : vector<8x8xf32> to vector<8x8xbf16>
    %cst_43 = arith.constant dense<0.000000e+00> : vector<8x8xf32>
    %172 = tpu.matmul %170, %171, %cst_43 {dimension_numbers = #tpu.dot_dimension_numbers<[1], [0], [0], [1], [0, 0, 1, 1], [], []>} : vector<8x8xbf16>, vector<8x8xbf16>, vector<8x8xf32> -> vector<8x8xf32>
    %cst_44 = arith.constant 0.353553385 : f32
    %173 = vector.broadcast %cst_44 : f32 to vector<8x8xf32>
    %174 = arith.mulf %172, %173 : vector<8x8xf32>
    %175 = vector.broadcast %142 : vector<1x8xf32> to vector<8x8xf32>
    %176 = arith.addf %174, %175 : vector<8x8xf32>
    %cst_45 = arith.constant dense<0xFF800000> : vector<8xf32>
    %177 = vector.multi_reduction <maximumf>, %176, %cst_45 [1] : vector<8x8xf32> to vector<8xf32>
    %178 = vector.shape_cast %177 : vector<8xf32> to vector<8x1xf32>
    %179 = vector.broadcast %178 : vector<8x1xf32> to vector<8x8xf32>
    %180 = arith.subf %176, %179 : vector<8x8xf32>
    %181 = math.exp %180 : vector<8x8xf32>
    %cst_46 = arith.constant dense<0.000000e+00> : vector<8xf32>
    %182 = vector.multi_reduction <add>, %181, %cst_46 [1] : vector<8x8xf32> to vector<8xf32>
    %183 = vector.shape_cast %182 : vector<8xf32> to vector<8x1xf32>
    %184 = tpu.reciprocal %183 {approx = true} : vector<8x1xf32> -> vector<8x1xf32>
    %185 = vector.broadcast %184 : vector<8x1xf32> to vector<8x8xf32>
    %186 = arith.mulf %181, %185 : vector<8x8xf32>
    %187 = vector.extract_strided_slice %141 {offsets = [0, 8], sizes = [8, 8], strides = [1, 1]} : vector<8x32xf32> to vector<8x8xf32>
    %188 = arith.truncf %186 : vector<8x8xf32> to vector<8x8xbf16>
    %189 = arith.truncf %187 : vector<8x8xf32> to vector<8x8xbf16>
    %cst_47 = arith.constant dense<0.000000e+00> : vector<8x8xf32>
    %190 = tpu.matmul %188, %189, %cst_47 {dimension_numbers = #tpu.dot_dimension_numbers<[1], [0], [0], [1], [0, 0, 1, 1], [], []>} : vector<8x8xbf16>, vector<8x8xbf16>, vector<8x8xf32> -> vector<8x8xf32>
    %191 = vector.extract_strided_slice %139 {offsets = [0, 16], sizes = [8, 8], strides = [1, 1]} : vector<8x32xf32> to vector<8x8xf32>
    %192 = vector.extract_strided_slice %140 {offsets = [0, 16], sizes = [8, 8], strides = [1, 1]} : vector<8x32xf32> to vector<8x8xf32>
    %193 = tpu.transpose %192, [1, 0] : vector<8x8xf32> -> vector<8x8xf32>
    %194 = arith.truncf %191 : vector<8x8xf32> to vector<8x8xbf16>
    %195 = arith.truncf %193 : vector<8x8xf32> to vector<8x8xbf16>
    %cst_48 = arith.constant dense<0.000000e+00> : vector<8x8xf32>
    %196 = tpu.matmul %194, %195, %cst_48 {dimension_numbers = #tpu.dot_dimension_numbers<[1], [0], [0], [1], [0, 0, 1, 1], [], []>} : vector<8x8xbf16>, vector<8x8xbf16>, vector<8x8xf32> -> vector<8x8xf32>
    %cst_49 = arith.constant 0.353553385 : f32
    %197 = vector.broadcast %cst_49 : f32 to vector<8x8xf32>
    %198 = arith.mulf %196, %197 : vector<8x8xf32>
    %199 = vector.broadcast %142 : vector<1x8xf32> to vector<8x8xf32>
    %200 = arith.addf %198, %199 : vector<8x8xf32>
    %cst_50 = arith.constant dense<0xFF800000> : vector<8xf32>
    %201 = vector.multi_reduction <maximumf>, %200, %cst_50 [1] : vector<8x8xf32> to vector<8xf32>
    %202 = vector.shape_cast %201 : vector<8xf32> to vector<8x1xf32>
    %203 = vector.broadcast %202 : vector<8x1xf32> to vector<8x8xf32>
    %204 = arith.subf %200, %203 : vector<8x8xf32>
    %205 = math.exp %204 : vector<8x8xf32>
    %cst_51 = arith.constant dense<0.000000e+00> : vector<8xf32>
    %206 = vector.multi_reduction <add>, %205, %cst_51 [1] : vector<8x8xf32> to vector<8xf32>
    %207 = vector.shape_cast %206 : vector<8xf32> to vector<8x1xf32>
    %208 = tpu.reciprocal %207 {approx = true} : vector<8x1xf32> -> vector<8x1xf32>
    %209 = vector.broadcast %208 : vector<8x1xf32> to vector<8x8xf32>
    %210 = arith.mulf %205, %209 : vector<8x8xf32>
    %211 = vector.extract_strided_slice %141 {offsets = [0, 16], sizes = [8, 8], strides = [1, 1]} : vector<8x32xf32> to vector<8x8xf32>
    %212 = arith.truncf %210 : vector<8x8xf32> to vector<8x8xbf16>
    %213 = arith.truncf %211 : vector<8x8xf32> to vector<8x8xbf16>
    %cst_52 = arith.constant dense<0.000000e+00> : vector<8x8xf32>
    %214 = tpu.matmul %212, %213, %cst_52 {dimension_numbers = #tpu.dot_dimension_numbers<[1], [0], [0], [1], [0, 0, 1, 1], [], []>} : vector<8x8xbf16>, vector<8x8xbf16>, vector<8x8xf32> -> vector<8x8xf32>
    %215 = vector.extract_strided_slice %139 {offsets = [0, 24], sizes = [8, 8], strides = [1, 1]} : vector<8x32xf32> to vector<8x8xf32>
    %216 = vector.extract_strided_slice %140 {offsets = [0, 24], sizes = [8, 8], strides = [1, 1]} : vector<8x32xf32> to vector<8x8xf32>
    %217 = tpu.transpose %216, [1, 0] : vector<8x8xf32> -> vector<8x8xf32>
    %218 = arith.truncf %215 : vector<8x8xf32> to vector<8x8xbf16>
    %219 = arith.truncf %217 : vector<8x8xf32> to vector<8x8xbf16>
    %cst_53 = arith.constant dense<0.000000e+00> : vector<8x8xf32>
    %220 = tpu.matmul %218, %219, %cst_53 {dimension_numbers = #tpu.dot_dimension_numbers<[1], [0], [0], [1], [0, 0, 1, 1], [], []>} : vector<8x8xbf16>, vector<8x8xbf16>, vector<8x8xf32> -> vector<8x8xf32>
    %cst_54 = arith.constant 0.353553385 : f32
    %221 = vector.broadcast %cst_54 : f32 to vector<8x8xf32>
    %222 = arith.mulf %220, %221 : vector<8x8xf32>
    %223 = vector.broadcast %142 : vector<1x8xf32> to vector<8x8xf32>
    %224 = arith.addf %222, %223 : vector<8x8xf32>
    %cst_55 = arith.constant dense<0xFF800000> : vector<8xf32>
    %225 = vector.multi_reduction <maximumf>, %224, %cst_55 [1] : vector<8x8xf32> to vector<8xf32>
    %226 = vector.shape_cast %225 : vector<8xf32> to vector<8x1xf32>
    %227 = vector.broadcast %226 : vector<8x1xf32> to vector<8x8xf32>
    %228 = arith.subf %224, %227 : vector<8x8xf32>
    %229 = math.exp %228 : vector<8x8xf32>
    %cst_56 = arith.constant dense<0.000000e+00> : vector<8xf32>
    %230 = vector.multi_reduction <add>, %229, %cst_56 [1] : vector<8x8xf32> to vector<8xf32>
    %231 = vector.shape_cast %230 : vector<8xf32> to vector<8x1xf32>
    %232 = tpu.reciprocal %231 {approx = true} : vector<8x1xf32> -> vector<8x1xf32>
    %233 = vector.broadcast %232 : vector<8x1xf32> to vector<8x8xf32>
    %234 = arith.mulf %229, %233 : vector<8x8xf32>
    %235 = vector.extract_strided_slice %141 {offsets = [0, 24], sizes = [8, 8], strides = [1, 1]} : vector<8x32xf32> to vector<8x8xf32>
    %236 = arith.truncf %234 : vector<8x8xf32> to vector<8x8xbf16>
    %237 = arith.truncf %235 : vector<8x8xf32> to vector<8x8xbf16>
    %cst_57 = arith.constant dense<0.000000e+00> : vector<8x8xf32>
    %238 = tpu.matmul %236, %237, %cst_57 {dimension_numbers = #tpu.dot_dimension_numbers<[1], [0], [0], [1], [0, 0, 1, 1], [], []>} : vector<8x8xbf16>, vector<8x8xbf16>, vector<8x8xf32> -> vector<8x8xf32>
    %239 = tpu.concatenate %166, %190, %214, %238 in 1 : vector<8x8xf32>, vector<8x8xf32>, vector<8x8xf32>, vector<8x8xf32> -> vector<8x32xf32>
    %240 = tpu.concatenate %138, %239 in 0 : vector<8x32xf32>, vector<8x32xf32> -> vector<16x32xf32>
    %c0_58 = arith.constant 0 : index
    %c0_59 = arith.constant 0 : index
    %c0_60 = arith.constant 0 : index
    %241 = vector.load %arg6[%c0_58, %c0_59, %c0_60] : memref<2x32x32xf32, #tpu.memory_space<vmem>>, vector<1x32x32xf32>
    %242 = vector.shape_cast %241 : vector<1x32x32xf32> to vector<32x32xf32>
    %243 = arith.truncf %240 : vector<16x32xf32> to vector<16x32xbf16>
    %244 = arith.truncf %242 : vector<32x32xf32> to vector<32x32xbf16>
    %cst_61 = arith.constant dense<0.000000e+00> : vector<16x32xf32>
    %245 = tpu.matmul %243, %244, %cst_61 {dimension_numbers = #tpu.dot_dimension_numbers<[1], [0], [0], [1], [0, 0, 1, 1], [], []>} : vector<16x32xbf16>, vector<32x32xbf16>, vector<16x32xf32> -> vector<16x32xf32>
    %c0_62 = arith.constant 0 : index
    %c0_63 = arith.constant 0 : index
    %c0_64 = arith.constant 0 : index
    %246 = vector.load %arg7[%c0_62, %c0_63, %c0_64] : memref<2x1x32xf32, #tpu.memory_space<vmem>>, vector<1x1x32xf32>
    %247 = vector.shape_cast %246 : vector<1x1x32xf32> to vector<1x32xf32>
    %248 = vector.broadcast %247 : vector<1x32xf32> to vector<16x32xf32>
    %249 = arith.addf %245, %248 : vector<16x32xf32>
    %250 = arith.addf %249, %24 : vector<16x32xf32>
    %c0_65 = arith.constant 0 : index
    %c0_66 = arith.constant 0 : index
    %c0_67 = arith.constant 0 : index
    %251 = vector.load %arg8[%c0_65, %c0_66, %c0_67] : memref<2x1x32xf32, #tpu.memory_space<vmem>>, vector<1x1x32xf32>
    %252 = vector.shape_cast %251 : vector<1x1x32xf32> to vector<1x32xf32>
    %c0_68 = arith.constant 0 : index
    %c0_69 = arith.constant 0 : index
    %c0_70 = arith.constant 0 : index
    %253 = vector.load %arg9[%c0_68, %c0_69, %c0_70] : memref<2x1x32xf32, #tpu.memory_space<vmem>>, vector<1x1x32xf32>
    %254 = vector.shape_cast %253 : vector<1x1x32xf32> to vector<1x32xf32>
    %cst_71 = arith.constant dense<0.000000e+00> : vector<16xf32>
    %255 = vector.multi_reduction <add>, %250, %cst_71 [1] : vector<16x32xf32> to vector<16xf32>
    %256 = vector.shape_cast %255 : vector<16xf32> to vector<16x1xf32>
    %cst_72 = arith.constant 3.200000e+01 : f32
    %257 = vector.broadcast %cst_72 : f32 to vector<16x1xf32>
    %258 = arith.divf %256, %257 : vector<16x1xf32>
    %259 = vector.broadcast %258 : vector<16x1xf32> to vector<16x32xf32>
    %260 = arith.subf %250, %259 : vector<16x32xf32>
    %261 = arith.mulf %260, %260 : vector<16x32xf32>
    %cst_73 = arith.constant dense<0.000000e+00> : vector<16xf32>
    %262 = vector.multi_reduction <add>, %261, %cst_73 [1] : vector<16x32xf32> to vector<16xf32>
    %263 = vector.shape_cast %262 : vector<16xf32> to vector<16x1xf32>
    %cst_74 = arith.constant 3.200000e+01 : f32
    %264 = vector.broadcast %cst_74 : f32 to vector<16x1xf32>
    %265 = arith.divf %263, %264 : vector<16x1xf32>
    %266 = vector.broadcast %258 : vector<16x1xf32> to vector<16x32xf32>
    %267 = arith.subf %250, %266 : vector<16x32xf32>
    %cst_75 = arith.constant 9.99999996E-13 : f32
    %268 = vector.broadcast %cst_75 : f32 to vector<16x1xf32>
    %269 = arith.addf %265, %268 : vector<16x1xf32>
    %270 = math.rsqrt %269 : vector<16x1xf32>
    %271 = vector.broadcast %270 : vector<16x1xf32> to vector<16x32xf32>
    %272 = arith.mulf %267, %271 : vector<16x32xf32>
    %273 = vector.broadcast %252 : vector<1x32xf32> to vector<16x32xf32>
    %274 = arith.mulf %272, %273 : vector<16x32xf32>
    %275 = vector.broadcast %254 : vector<1x32xf32> to vector<16x32xf32>
    %276 = arith.addf %274, %275 : vector<16x32xf32>
    %c0_76 = arith.constant 0 : index
    %c0_77 = arith.constant 0 : index
    %c0_78 = arith.constant 0 : index
    %277 = vector.load %arg10[%c0_76, %c0_77, %c0_78] : memref<2x32x64xf32, #tpu.memory_space<vmem>>, vector<1x32x64xf32>
    %278 = vector.shape_cast %277 : vector<1x32x64xf32> to vector<32x64xf32>
    %279 = arith.truncf %276 : vector<16x32xf32> to vector<16x32xbf16>
    %280 = arith.truncf %278 : vector<32x64xf32> to vector<32x64xbf16>
    %cst_79 = arith.constant dense<0.000000e+00> : vector<16x64xf32>
    %281 = tpu.matmul %279, %280, %cst_79 {dimension_numbers = #tpu.dot_dimension_numbers<[1], [0], [0], [1], [0, 0, 1, 1], [], []>} : vector<16x32xbf16>, vector<32x64xbf16>, vector<16x64xf32> -> vector<16x64xf32>
    %c0_80 = arith.constant 0 : index
    %c0_81 = arith.constant 0 : index
    %c0_82 = arith.constant 0 : index
    %282 = vector.load %arg11[%c0_80, %c0_81, %c0_82] : memref<2x1x64xf32, #tpu.memory_space<vmem>>, vector<1x1x64xf32>
    %283 = vector.shape_cast %282 : vector<1x1x64xf32> to vector<1x64xf32>
    %284 = vector.broadcast %283 : vector<1x64xf32> to vector<16x64xf32>
    %285 = arith.addf %281, %284 : vector<16x64xf32>
    %cst_83 = arith.constant 5.000000e-01 : f32
    %286 = vector.broadcast %cst_83 : f32 to vector<16x64xf32>
    %287 = arith.mulf %286, %285 : vector<16x64xf32>
    %cst_84 = arith.constant 4.471500e-02 : f32
    %288 = vector.broadcast %cst_84 : f32 to vector<16x64xf32>
    %289 = arith.mulf %288, %285 : vector<16x64xf32>
    %290 = arith.mulf %289, %285 : vector<16x64xf32>
    %291 = arith.mulf %290, %285 : vector<16x64xf32>
    %292 = arith.addf %285, %291 : vector<16x64xf32>
    %cst_85 = arith.constant 0.797884583 : f32
    %293 = vector.broadcast %cst_85 : f32 to vector<16x64xf32>
    %294 = arith.mulf %293, %292 : vector<16x64xf32>
    %295 = math.tanh %294 : vector<16x64xf32>
    %cst_86 = arith.constant 1.000000e+00 : f32
    %296 = vector.broadcast %cst_86 : f32 to vector<16x64xf32>
    %297 = arith.addf %296, %295 : vector<16x64xf32>
    %298 = arith.mulf %287, %297 : vector<16x64xf32>
    %c0_87 = arith.constant 0 : index
    %c0_88 = arith.constant 0 : index
    %c0_89 = arith.constant 0 : index
    %299 = vector.load %arg12[%c0_87, %c0_88, %c0_89] : memref<2x64x32xf32, #tpu.memory_space<vmem>>, vector<1x64x32xf32>
    %300 = vector.shape_cast %299 : vector<1x64x32xf32> to vector<64x32xf32>
    %301 = arith.truncf %298 : vector<16x64xf32> to vector<16x64xbf16>
    %302 = arith.truncf %300 : vector<64x32xf32> to vector<64x32xbf16>
    %cst_90 = arith.constant dense<0.000000e+00> : vector<16x32xf32>
    %303 = tpu.matmul %301, %302, %cst_90 {dimension_numbers = #tpu.dot_dimension_numbers<[1], [0], [0], [1], [0, 0, 1, 1], [], []>} : vector<16x64xbf16>, vector<64x32xbf16>, vector<16x32xf32> -> vector<16x32xf32>
    %c0_91 = arith.constant 0 : index
    %c0_92 = arith.constant 0 : index
    %c0_93 = arith.constant 0 : index
    %304 = vector.load %arg13[%c0_91, %c0_92, %c0_93] : memref<2x1x32xf32, #tpu.memory_space<vmem>>, vector<1x1x32xf32>
    %305 = vector.shape_cast %304 : vector<1x1x32xf32> to vector<1x32xf32>
    %306 = vector.broadcast %305 : vector<1x32xf32> to vector<16x32xf32>
    %307 = arith.addf %303, %306 : vector<16x32xf32>
    %308 = arith.addf %307, %276 : vector<16x32xf32>
    %c0_94 = arith.constant 0 : index
    %c0_95 = arith.constant 0 : index
    %c0_96 = arith.constant 0 : index
    %309 = vector.load %arg14[%c0_94, %c0_95, %c0_96] : memref<2x1x32xf32, #tpu.memory_space<vmem>>, vector<1x1x32xf32>
    %310 = vector.shape_cast %309 : vector<1x1x32xf32> to vector<1x32xf32>
    %c0_97 = arith.constant 0 : index
    %c0_98 = arith.constant 0 : index
    %c0_99 = arith.constant 0 : index
    %311 = vector.load %arg15[%c0_97, %c0_98, %c0_99] : memref<2x1x32xf32, #tpu.memory_space<vmem>>, vector<1x1x32xf32>
    %312 = vector.shape_cast %311 : vector<1x1x32xf32> to vector<1x32xf32>
    %cst_100 = arith.constant dense<0.000000e+00> : vector<16xf32>
    %313 = vector.multi_reduction <add>, %308, %cst_100 [1] : vector<16x32xf32> to vector<16xf32>
    %314 = vector.shape_cast %313 : vector<16xf32> to vector<16x1xf32>
    %cst_101 = arith.constant 3.200000e+01 : f32
    %315 = vector.broadcast %cst_101 : f32 to vector<16x1xf32>
    %316 = arith.divf %314, %315 : vector<16x1xf32>
    %317 = vector.broadcast %316 : vector<16x1xf32> to vector<16x32xf32>
    %318 = arith.subf %308, %317 : vector<16x32xf32>
    %319 = arith.mulf %318, %318 : vector<16x32xf32>
    %cst_102 = arith.constant dense<0.000000e+00> : vector<16xf32>
    %320 = vector.multi_reduction <add>, %319, %cst_102 [1] : vector<16x32xf32> to vector<16xf32>
    %321 = vector.shape_cast %320 : vector<16xf32> to vector<16x1xf32>
    %cst_103 = arith.constant 3.200000e+01 : f32
    %322 = vector.broadcast %cst_103 : f32 to vector<16x1xf32>
    %323 = arith.divf %321, %322 : vector<16x1xf32>
    %324 = vector.broadcast %316 : vector<16x1xf32> to vector<16x32xf32>
    %325 = arith.subf %308, %324 : vector<16x32xf32>
    %cst_104 = arith.constant 9.99999996E-13 : f32
    %326 = vector.broadcast %cst_104 : f32 to vector<16x1xf32>
    %327 = arith.addf %323, %326 : vector<16x1xf32>
    %328 = math.rsqrt %327 : vector<16x1xf32>
    %329 = vector.broadcast %328 : vector<16x1xf32> to vector<16x32xf32>
    %330 = arith.mulf %325, %329 : vector<16x32xf32>
    %331 = vector.broadcast %310 : vector<1x32xf32> to vector<16x32xf32>
    %332 = arith.mulf %330, %331 : vector<16x32xf32>
    %333 = vector.broadcast %312 : vector<1x32xf32> to vector<16x32xf32>
    %334 = arith.addf %332, %333 : vector<16x32xf32>
    %c1 = arith.constant 1 : index
    %c0_105 = arith.constant 0 : index
    %c0_106 = arith.constant 0 : index
    %335 = vector.load %arg4[%c1, %c0_105, %c0_106] : memref<2x32x96xf32, #tpu.memory_space<vmem>>, vector<1x32x96xf32>
    %336 = vector.shape_cast %335 : vector<1x32x96xf32> to vector<32x96xf32>
    %337 = arith.truncf %334 : vector<16x32xf32> to vector<16x32xbf16>
    %338 = arith.truncf %336 : vector<32x96xf32> to vector<32x96xbf16>
    %cst_107 = arith.constant dense<0.000000e+00> : vector<16x96xf32>
    %339 = tpu.matmul %337, %338, %cst_107 {dimension_numbers = #tpu.dot_dimension_numbers<[1], [0], [0], [1], [0, 0, 1, 1], [], []>} : vector<16x32xbf16>, vector<32x96xbf16>, vector<16x96xf32> -> vector<16x96xf32>
    %c1_108 = arith.constant 1 : index
    %c0_109 = arith.constant 0 : index
    %c0_110 = arith.constant 0 : index
    %340 = vector.load %arg5[%c1_108, %c0_109, %c0_110] : memref<2x1x96xf32, #tpu.memory_space<vmem>>, vector<1x1x96xf32>
    %341 = vector.shape_cast %340 : vector<1x1x96xf32> to vector<1x96xf32>
    %342 = vector.broadcast %341 : vector<1x96xf32> to vector<16x96xf32>
    %343 = arith.addf %339, %342 : vector<16x96xf32>
    %344 = vector.extract_strided_slice %343 {offsets = [0, 0], sizes = [16, 32], strides = [1, 1]} : vector<16x96xf32> to vector<16x32xf32>
    %345 = vector.extract_strided_slice %343 {offsets = [0, 32], sizes = [16, 32], strides = [1, 1]} : vector<16x96xf32> to vector<16x32xf32>
    %346 = vector.extract_strided_slice %343 {offsets = [0, 64], sizes = [16, 32], strides = [1, 1]} : vector<16x96xf32> to vector<16x32xf32>
    %347 = vector.extract_strided_slice %344 {offsets = [0, 0], sizes = [8, 32], strides = [1, 1]} : vector<16x32xf32> to vector<8x32xf32>
    %348 = vector.extract_strided_slice %345 {offsets = [0, 0], sizes = [8, 32], strides = [1, 1]} : vector<16x32xf32> to vector<8x32xf32>
    %349 = vector.extract_strided_slice %346 {offsets = [0, 0], sizes = [8, 32], strides = [1, 1]} : vector<16x32xf32> to vector<8x32xf32>
    %350 = vector.extract_strided_slice %25 {offsets = [0, 0], sizes = [1, 8], strides = [1, 1]} : vector<2x8xf32> to vector<1x8xf32>
    %351 = vector.extract_strided_slice %347 {offsets = [0, 0], sizes = [8, 8], strides = [1, 1]} : vector<8x32xf32> to vector<8x8xf32>
    %352 = vector.extract_strided_slice %348 {offsets = [0, 0], sizes = [8, 8], strides = [1, 1]} : vector<8x32xf32> to vector<8x8xf32>
    %353 = tpu.transpose %352, [1, 0] : vector<8x8xf32> -> vector<8x8xf32>
    %354 = arith.truncf %351 : vector<8x8xf32> to vector<8x8xbf16>
    %355 = arith.truncf %353 : vector<8x8xf32> to vector<8x8xbf16>
    %cst_111 = arith.constant dense<0.000000e+00> : vector<8x8xf32>
    %356 = tpu.matmul %354, %355, %cst_111 {dimension_numbers = #tpu.dot_dimension_numbers<[1], [0], [0], [1], [0, 0, 1, 1], [], []>} : vector<8x8xbf16>, vector<8x8xbf16>, vector<8x8xf32> -> vector<8x8xf32>
    %cst_112 = arith.constant 0.353553385 : f32
    %357 = vector.broadcast %cst_112 : f32 to vector<8x8xf32>
    %358 = arith.mulf %356, %357 : vector<8x8xf32>
    %359 = vector.broadcast %350 : vector<1x8xf32> to vector<8x8xf32>
    %360 = arith.addf %358, %359 : vector<8x8xf32>
    %cst_113 = arith.constant dense<0xFF800000> : vector<8xf32>
    %361 = vector.multi_reduction <maximumf>, %360, %cst_113 [1] : vector<8x8xf32> to vector<8xf32>
    %362 = vector.shape_cast %361 : vector<8xf32> to vector<8x1xf32>
    %363 = vector.broadcast %362 : vector<8x1xf32> to vector<8x8xf32>
    %364 = arith.subf %360, %363 : vector<8x8xf32>
    %365 = math.exp %364 : vector<8x8xf32>
    %cst_114 = arith.constant dense<0.000000e+00> : vector<8xf32>
    %366 = vector.multi_reduction <add>, %365, %cst_114 [1] : vector<8x8xf32> to vector<8xf32>
    %367 = vector.shape_cast %366 : vector<8xf32> to vector<8x1xf32>
    %368 = tpu.reciprocal %367 {approx = true} : vector<8x1xf32> -> vector<8x1xf32>
    %369 = vector.broadcast %368 : vector<8x1xf32> to vector<8x8xf32>
    %370 = arith.mulf %365, %369 : vector<8x8xf32>
    %371 = vector.extract_strided_slice %349 {offsets = [0, 0], sizes = [8, 8], strides = [1, 1]} : vector<8x32xf32> to vector<8x8xf32>
    %372 = arith.truncf %370 : vector<8x8xf32> to vector<8x8xbf16>
    %373 = arith.truncf %371 : vector<8x8xf32> to vector<8x8xbf16>
    %cst_115 = arith.constant dense<0.000000e+00> : vector<8x8xf32>
    %374 = tpu.matmul %372, %373, %cst_115 {dimension_numbers = #tpu.dot_dimension_numbers<[1], [0], [0], [1], [0, 0, 1, 1], [], []>} : vector<8x8xbf16>, vector<8x8xbf16>, vector<8x8xf32> -> vector<8x8xf32>
    %375 = vector.extract_strided_slice %347 {offsets = [0, 8], sizes = [8, 8], strides = [1, 1]} : vector<8x32xf32> to vector<8x8xf32>
    %376 = vector.extract_strided_slice %348 {offsets = [0, 8], sizes = [8, 8], strides = [1, 1]} : vector<8x32xf32> to vector<8x8xf32>
    %377 = tpu.transpose %376, [1, 0] : vector<8x8xf32> -> vector<8x8xf32>
    %378 = arith.truncf %375 : vector<8x8xf32> to vector<8x8xbf16>
    %379 = arith.truncf %377 : vector<8x8xf32> to vector<8x8xbf16>
    %cst_116 = arith.constant dense<0.000000e+00> : vector<8x8xf32>
    %380 = tpu.matmul %378, %379, %cst_116 {dimension_numbers = #tpu.dot_dimension_numbers<[1], [0], [0], [1], [0, 0, 1, 1], [], []>} : vector<8x8xbf16>, vector<8x8xbf16>, vector<8x8xf32> -> vector<8x8xf32>
    %cst_117 = arith.constant 0.353553385 : f32
    %381 = vector.broadcast %cst_117 : f32 to vector<8x8xf32>
    %382 = arith.mulf %380, %381 : vector<8x8xf32>
    %383 = vector.broadcast %350 : vector<1x8xf32> to vector<8x8xf32>
    %384 = arith.addf %382, %383 : vector<8x8xf32>
    %cst_118 = arith.constant dense<0xFF800000> : vector<8xf32>
    %385 = vector.multi_reduction <maximumf>, %384, %cst_118 [1] : vector<8x8xf32> to vector<8xf32>
    %386 = vector.shape_cast %385 : vector<8xf32> to vector<8x1xf32>
    %387 = vector.broadcast %386 : vector<8x1xf32> to vector<8x8xf32>
    %388 = arith.subf %384, %387 : vector<8x8xf32>
    %389 = math.exp %388 : vector<8x8xf32>
    %cst_119 = arith.constant dense<0.000000e+00> : vector<8xf32>
    %390 = vector.multi_reduction <add>, %389, %cst_119 [1] : vector<8x8xf32> to vector<8xf32>
    %391 = vector.shape_cast %390 : vector<8xf32> to vector<8x1xf32>
    %392 = tpu.reciprocal %391 {approx = true} : vector<8x1xf32> -> vector<8x1xf32>
    %393 = vector.broadcast %392 : vector<8x1xf32> to vector<8x8xf32>
    %394 = arith.mulf %389, %393 : vector<8x8xf32>
    %395 = vector.extract_strided_slice %349 {offsets = [0, 8], sizes = [8, 8], strides = [1, 1]} : vector<8x32xf32> to vector<8x8xf32>
    %396 = arith.truncf %394 : vector<8x8xf32> to vector<8x8xbf16>
    %397 = arith.truncf %395 : vector<8x8xf32> to vector<8x8xbf16>
    %cst_120 = arith.constant dense<0.000000e+00> : vector<8x8xf32>
    %398 = tpu.matmul %396, %397, %cst_120 {dimension_numbers = #tpu.dot_dimension_numbers<[1], [0], [0], [1], [0, 0, 1, 1], [], []>} : vector<8x8xbf16>, vector<8x8xbf16>, vector<8x8xf32> -> vector<8x8xf32>
    %399 = vector.extract_strided_slice %347 {offsets = [0, 16], sizes = [8, 8], strides = [1, 1]} : vector<8x32xf32> to vector<8x8xf32>
    %400 = vector.extract_strided_slice %348 {offsets = [0, 16], sizes = [8, 8], strides = [1, 1]} : vector<8x32xf32> to vector<8x8xf32>
    %401 = tpu.transpose %400, [1, 0] : vector<8x8xf32> -> vector<8x8xf32>
    %402 = arith.truncf %399 : vector<8x8xf32> to vector<8x8xbf16>
    %403 = arith.truncf %401 : vector<8x8xf32> to vector<8x8xbf16>
    %cst_121 = arith.constant dense<0.000000e+00> : vector<8x8xf32>
    %404 = tpu.matmul %402, %403, %cst_121 {dimension_numbers = #tpu.dot_dimension_numbers<[1], [0], [0], [1], [0, 0, 1, 1], [], []>} : vector<8x8xbf16>, vector<8x8xbf16>, vector<8x8xf32> -> vector<8x8xf32>
    %cst_122 = arith.constant 0.353553385 : f32
    %405 = vector.broadcast %cst_122 : f32 to vector<8x8xf32>
    %406 = arith.mulf %404, %405 : vector<8x8xf32>
    %407 = vector.broadcast %350 : vector<1x8xf32> to vector<8x8xf32>
    %408 = arith.addf %406, %407 : vector<8x8xf32>
    %cst_123 = arith.constant dense<0xFF800000> : vector<8xf32>
    %409 = vector.multi_reduction <maximumf>, %408, %cst_123 [1] : vector<8x8xf32> to vector<8xf32>
    %410 = vector.shape_cast %409 : vector<8xf32> to vector<8x1xf32>
    %411 = vector.broadcast %410 : vector<8x1xf32> to vector<8x8xf32>
    %412 = arith.subf %408, %411 : vector<8x8xf32>
    %413 = math.exp %412 : vector<8x8xf32>
    %cst_124 = arith.constant dense<0.000000e+00> : vector<8xf32>
    %414 = vector.multi_reduction <add>, %413, %cst_124 [1] : vector<8x8xf32> to vector<8xf32>
    %415 = vector.shape_cast %414 : vector<8xf32> to vector<8x1xf32>
    %416 = tpu.reciprocal %415 {approx = true} : vector<8x1xf32> -> vector<8x1xf32>
    %417 = vector.broadcast %416 : vector<8x1xf32> to vector<8x8xf32>
    %418 = arith.mulf %413, %417 : vector<8x8xf32>
    %419 = vector.extract_strided_slice %349 {offsets = [0, 16], sizes = [8, 8], strides = [1, 1]} : vector<8x32xf32> to vector<8x8xf32>
    %420 = arith.truncf %418 : vector<8x8xf32> to vector<8x8xbf16>
    %421 = arith.truncf %419 : vector<8x8xf32> to vector<8x8xbf16>
    %cst_125 = arith.constant dense<0.000000e+00> : vector<8x8xf32>
    %422 = tpu.matmul %420, %421, %cst_125 {dimension_numbers = #tpu.dot_dimension_numbers<[1], [0], [0], [1], [0, 0, 1, 1], [], []>} : vector<8x8xbf16>, vector<8x8xbf16>, vector<8x8xf32> -> vector<8x8xf32>
    %423 = vector.extract_strided_slice %347 {offsets = [0, 24], sizes = [8, 8], strides = [1, 1]} : vector<8x32xf32> to vector<8x8xf32>
    %424 = vector.extract_strided_slice %348 {offsets = [0, 24], sizes = [8, 8], strides = [1, 1]} : vector<8x32xf32> to vector<8x8xf32>
    %425 = tpu.transpose %424, [1, 0] : vector<8x8xf32> -> vector<8x8xf32>
    %426 = arith.truncf %423 : vector<8x8xf32> to vector<8x8xbf16>
    %427 = arith.truncf %425 : vector<8x8xf32> to vector<8x8xbf16>
    %cst_126 = arith.constant dense<0.000000e+00> : vector<8x8xf32>
    %428 = tpu.matmul %426, %427, %cst_126 {dimension_numbers = #tpu.dot_dimension_numbers<[1], [0], [0], [1], [0, 0, 1, 1], [], []>} : vector<8x8xbf16>, vector<8x8xbf16>, vector<8x8xf32> -> vector<8x8xf32>
    %cst_127 = arith.constant 0.353553385 : f32
    %429 = vector.broadcast %cst_127 : f32 to vector<8x8xf32>
    %430 = arith.mulf %428, %429 : vector<8x8xf32>
    %431 = vector.broadcast %350 : vector<1x8xf32> to vector<8x8xf32>
    %432 = arith.addf %430, %431 : vector<8x8xf32>
    %cst_128 = arith.constant dense<0xFF800000> : vector<8xf32>
    %433 = vector.multi_reduction <maximumf>, %432, %cst_128 [1] : vector<8x8xf32> to vector<8xf32>
    %434 = vector.shape_cast %433 : vector<8xf32> to vector<8x1xf32>
    %435 = vector.broadcast %434 : vector<8x1xf32> to vector<8x8xf32>
    %436 = arith.subf %432, %435 : vector<8x8xf32>
    %437 = math.exp %436 : vector<8x8xf32>
    %cst_129 = arith.constant dense<0.000000e+00> : vector<8xf32>
    %438 = vector.multi_reduction <add>, %437, %cst_129 [1] : vector<8x8xf32> to vector<8xf32>
    %439 = vector.shape_cast %438 : vector<8xf32> to vector<8x1xf32>
    %440 = tpu.reciprocal %439 {approx = true} : vector<8x1xf32> -> vector<8x1xf32>
    %441 = vector.broadcast %440 : vector<8x1xf32> to vector<8x8xf32>
    %442 = arith.mulf %437, %441 : vector<8x8xf32>
    %443 = vector.extract_strided_slice %349 {offsets = [0, 24], sizes = [8, 8], strides = [1, 1]} : vector<8x32xf32> to vector<8x8xf32>
    %444 = arith.truncf %442 : vector<8x8xf32> to vector<8x8xbf16>
    %445 = arith.truncf %443 : vector<8x8xf32> to vector<8x8xbf16>
    %cst_130 = arith.constant dense<0.000000e+00> : vector<8x8xf32>
    %446 = tpu.matmul %444, %445, %cst_130 {dimension_numbers = #tpu.dot_dimension_numbers<[1], [0], [0], [1], [0, 0, 1, 1], [], []>} : vector<8x8xbf16>, vector<8x8xbf16>, vector<8x8xf32> -> vector<8x8xf32>
    %447 = tpu.concatenate %374, %398, %422, %446 in 1 : vector<8x8xf32>, vector<8x8xf32>, vector<8x8xf32>, vector<8x8xf32> -> vector<8x32xf32>
    %448 = vector.extract_strided_slice %344 {offsets = [8, 0], sizes = [8, 32], strides = [1, 1]} : vector<16x32xf32> to vector<8x32xf32>
    %449 = vector.extract_strided_slice %345 {offsets = [8, 0], sizes = [8, 32], strides = [1, 1]} : vector<16x32xf32> to vector<8x32xf32>
    %450 = vector.extract_strided_slice %346 {offsets = [8, 0], sizes = [8, 32], strides = [1, 1]} : vector<16x32xf32> to vector<8x32xf32>
    %451 = vector.extract_strided_slice %25 {offsets = [1, 0], sizes = [1, 8], strides = [1, 1]} : vector<2x8xf32> to vector<1x8xf32>
    %452 = vector.extract_strided_slice %448 {offsets = [0, 0], sizes = [8, 8], strides = [1, 1]} : vector<8x32xf32> to vector<8x8xf32>
    %453 = vector.extract_strided_slice %449 {offsets = [0, 0], sizes = [8, 8], strides = [1, 1]} : vector<8x32xf32> to vector<8x8xf32>
    %454 = tpu.transpose %453, [1, 0] : vector<8x8xf32> -> vector<8x8xf32>
    %455 = arith.truncf %452 : vector<8x8xf32> to vector<8x8xbf16>
    %456 = arith.truncf %454 : vector<8x8xf32> to vector<8x8xbf16>
    %cst_131 = arith.constant dense<0.000000e+00> : vector<8x8xf32>
    %457 = tpu.matmul %455, %456, %cst_131 {dimension_numbers = #tpu.dot_dimension_numbers<[1], [0], [0], [1], [0, 0, 1, 1], [], []>} : vector<8x8xbf16>, vector<8x8xbf16>, vector<8x8xf32> -> vector<8x8xf32>
    %cst_132 = arith.constant 0.353553385 : f32
    %458 = vector.broadcast %cst_132 : f32 to vector<8x8xf32>
    %459 = arith.mulf %457, %458 : vector<8x8xf32>
    %460 = vector.broadcast %451 : vector<1x8xf32> to vector<8x8xf32>
    %461 = arith.addf %459, %460 : vector<8x8xf32>
    %cst_133 = arith.constant dense<0xFF800000> : vector<8xf32>
    %462 = vector.multi_reduction <maximumf>, %461, %cst_133 [1] : vector<8x8xf32> to vector<8xf32>
    %463 = vector.shape_cast %462 : vector<8xf32> to vector<8x1xf32>
    %464 = vector.broadcast %463 : vector<8x1xf32> to vector<8x8xf32>
    %465 = arith.subf %461, %464 : vector<8x8xf32>
    %466 = math.exp %465 : vector<8x8xf32>
    %cst_134 = arith.constant dense<0.000000e+00> : vector<8xf32>
    %467 = vector.multi_reduction <add>, %466, %cst_134 [1] : vector<8x8xf32> to vector<8xf32>
    %468 = vector.shape_cast %467 : vector<8xf32> to vector<8x1xf32>
    %469 = tpu.reciprocal %468 {approx = true} : vector<8x1xf32> -> vector<8x1xf32>
    %470 = vector.broadcast %469 : vector<8x1xf32> to vector<8x8xf32>
    %471 = arith.mulf %466, %470 : vector<8x8xf32>
    %472 = vector.extract_strided_slice %450 {offsets = [0, 0], sizes = [8, 8], strides = [1, 1]} : vector<8x32xf32> to vector<8x8xf32>
    %473 = arith.truncf %471 : vector<8x8xf32> to vector<8x8xbf16>
    %474 = arith.truncf %472 : vector<8x8xf32> to vector<8x8xbf16>
    %cst_135 = arith.constant dense<0.000000e+00> : vector<8x8xf32>
    %475 = tpu.matmul %473, %474, %cst_135 {dimension_numbers = #tpu.dot_dimension_numbers<[1], [0], [0], [1], [0, 0, 1, 1], [], []>} : vector<8x8xbf16>, vector<8x8xbf16>, vector<8x8xf32> -> vector<8x8xf32>
    %476 = vector.extract_strided_slice %448 {offsets = [0, 8], sizes = [8, 8], strides = [1, 1]} : vector<8x32xf32> to vector<8x8xf32>
    %477 = vector.extract_strided_slice %449 {offsets = [0, 8], sizes = [8, 8], strides = [1, 1]} : vector<8x32xf32> to vector<8x8xf32>
    %478 = tpu.transpose %477, [1, 0] : vector<8x8xf32> -> vector<8x8xf32>
    %479 = arith.truncf %476 : vector<8x8xf32> to vector<8x8xbf16>
    %480 = arith.truncf %478 : vector<8x8xf32> to vector<8x8xbf16>
    %cst_136 = arith.constant dense<0.000000e+00> : vector<8x8xf32>
    %481 = tpu.matmul %479, %480, %cst_136 {dimension_numbers = #tpu.dot_dimension_numbers<[1], [0], [0], [1], [0, 0, 1, 1], [], []>} : vector<8x8xbf16>, vector<8x8xbf16>, vector<8x8xf32> -> vector<8x8xf32>
    %cst_137 = arith.constant 0.353553385 : f32
    %482 = vector.broadcast %cst_137 : f32 to vector<8x8xf32>
    %483 = arith.mulf %481, %482 : vector<8x8xf32>
    %484 = vector.broadcast %451 : vector<1x8xf32> to vector<8x8xf32>
    %485 = arith.addf %483, %484 : vector<8x8xf32>
    %cst_138 = arith.constant dense<0xFF800000> : vector<8xf32>
    %486 = vector.multi_reduction <maximumf>, %485, %cst_138 [1] : vector<8x8xf32> to vector<8xf32>
    %487 = vector.shape_cast %486 : vector<8xf32> to vector<8x1xf32>
    %488 = vector.broadcast %487 : vector<8x1xf32> to vector<8x8xf32>
    %489 = arith.subf %485, %488 : vector<8x8xf32>
    %490 = math.exp %489 : vector<8x8xf32>
    %cst_139 = arith.constant dense<0.000000e+00> : vector<8xf32>
    %491 = vector.multi_reduction <add>, %490, %cst_139 [1] : vector<8x8xf32> to vector<8xf32>
    %492 = vector.shape_cast %491 : vector<8xf32> to vector<8x1xf32>
    %493 = tpu.reciprocal %492 {approx = true} : vector<8x1xf32> -> vector<8x1xf32>
    %494 = vector.broadcast %493 : vector<8x1xf32> to vector<8x8xf32>
    %495 = arith.mulf %490, %494 : vector<8x8xf32>
    %496 = vector.extract_strided_slice %450 {offsets = [0, 8], sizes = [8, 8], strides = [1, 1]} : vector<8x32xf32> to vector<8x8xf32>
    %497 = arith.truncf %495 : vector<8x8xf32> to vector<8x8xbf16>
    %498 = arith.truncf %496 : vector<8x8xf32> to vector<8x8xbf16>
    %cst_140 = arith.constant dense<0.000000e+00> : vector<8x8xf32>
    %499 = tpu.matmul %497, %498, %cst_140 {dimension_numbers = #tpu.dot_dimension_numbers<[1], [0], [0], [1], [0, 0, 1, 1], [], []>} : vector<8x8xbf16>, vector<8x8xbf16>, vector<8x8xf32> -> vector<8x8xf32>
    %500 = vector.extract_strided_slice %448 {offsets = [0, 16], sizes = [8, 8], strides = [1, 1]} : vector<8x32xf32> to vector<8x8xf32>
    %501 = vector.extract_strided_slice %449 {offsets = [0, 16], sizes = [8, 8], strides = [1, 1]} : vector<8x32xf32> to vector<8x8xf32>
    %502 = tpu.transpose %501, [1, 0] : vector<8x8xf32> -> vector<8x8xf32>
    %503 = arith.truncf %500 : vector<8x8xf32> to vector<8x8xbf16>
    %504 = arith.truncf %502 : vector<8x8xf32> to vector<8x8xbf16>
    %cst_141 = arith.constant dense<0.000000e+00> : vector<8x8xf32>
    %505 = tpu.matmul %503, %504, %cst_141 {dimension_numbers = #tpu.dot_dimension_numbers<[1], [0], [0], [1], [0, 0, 1, 1], [], []>} : vector<8x8xbf16>, vector<8x8xbf16>, vector<8x8xf32> -> vector<8x8xf32>
    %cst_142 = arith.constant 0.353553385 : f32
    %506 = vector.broadcast %cst_142 : f32 to vector<8x8xf32>
    %507 = arith.mulf %505, %506 : vector<8x8xf32>
    %508 = vector.broadcast %451 : vector<1x8xf32> to vector<8x8xf32>
    %509 = arith.addf %507, %508 : vector<8x8xf32>
    %cst_143 = arith.constant dense<0xFF800000> : vector<8xf32>
    %510 = vector.multi_reduction <maximumf>, %509, %cst_143 [1] : vector<8x8xf32> to vector<8xf32>
    %511 = vector.shape_cast %510 : vector<8xf32> to vector<8x1xf32>
    %512 = vector.broadcast %511 : vector<8x1xf32> to vector<8x8xf32>
    %513 = arith.subf %509, %512 : vector<8x8xf32>
    %514 = math.exp %513 : vector<8x8xf32>
    %cst_144 = arith.constant dense<0.000000e+00> : vector<8xf32>
    %515 = vector.multi_reduction <add>, %514, %cst_144 [1] : vector<8x8xf32> to vector<8xf32>
    %516 = vector.shape_cast %515 : vector<8xf32> to vector<8x1xf32>
    %517 = tpu.reciprocal %516 {approx = true} : vector<8x1xf32> -> vector<8x1xf32>
    %518 = vector.broadcast %517 : vector<8x1xf32> to vector<8x8xf32>
    %519 = arith.mulf %514, %518 : vector<8x8xf32>
    %520 = vector.extract_strided_slice %450 {offsets = [0, 16], sizes = [8, 8], strides = [1, 1]} : vector<8x32xf32> to vector<8x8xf32>
    %521 = arith.truncf %519 : vector<8x8xf32> to vector<8x8xbf16>
    %522 = arith.truncf %520 : vector<8x8xf32> to vector<8x8xbf16>
    %cst_145 = arith.constant dense<0.000000e+00> : vector<8x8xf32>
    %523 = tpu.matmul %521, %522, %cst_145 {dimension_numbers = #tpu.dot_dimension_numbers<[1], [0], [0], [1], [0, 0, 1, 1], [], []>} : vector<8x8xbf16>, vector<8x8xbf16>, vector<8x8xf32> -> vector<8x8xf32>
    %524 = vector.extract_strided_slice %448 {offsets = [0, 24], sizes = [8, 8], strides = [1, 1]} : vector<8x32xf32> to vector<8x8xf32>
    %525 = vector.extract_strided_slice %449 {offsets = [0, 24], sizes = [8, 8], strides = [1, 1]} : vector<8x32xf32> to vector<8x8xf32>
    %526 = tpu.transpose %525, [1, 0] : vector<8x8xf32> -> vector<8x8xf32>
    %527 = arith.truncf %524 : vector<8x8xf32> to vector<8x8xbf16>
    %528 = arith.truncf %526 : vector<8x8xf32> to vector<8x8xbf16>
    %cst_146 = arith.constant dense<0.000000e+00> : vector<8x8xf32>
    %529 = tpu.matmul %527, %528, %cst_146 {dimension_numbers = #tpu.dot_dimension_numbers<[1], [0], [0], [1], [0, 0, 1, 1], [], []>} : vector<8x8xbf16>, vector<8x8xbf16>, vector<8x8xf32> -> vector<8x8xf32>
    %cst_147 = arith.constant 0.353553385 : f32
    %530 = vector.broadcast %cst_147 : f32 to vector<8x8xf32>
    %531 = arith.mulf %529, %530 : vector<8x8xf32>
    %532 = vector.broadcast %451 : vector<1x8xf32> to vector<8x8xf32>
    %533 = arith.addf %531, %532 : vector<8x8xf32>
    %cst_148 = arith.constant dense<0xFF800000> : vector<8xf32>
    %534 = vector.multi_reduction <maximumf>, %533, %cst_148 [1] : vector<8x8xf32> to vector<8xf32>
    %535 = vector.shape_cast %534 : vector<8xf32> to vector<8x1xf32>
    %536 = vector.broadcast %535 : vector<8x1xf32> to vector<8x8xf32>
    %537 = arith.subf %533, %536 : vector<8x8xf32>
    %538 = math.exp %537 : vector<8x8xf32>
    %cst_149 = arith.constant dense<0.000000e+00> : vector<8xf32>
    %539 = vector.multi_reduction <add>, %538, %cst_149 [1] : vector<8x8xf32> to vector<8xf32>
    %540 = vector.shape_cast %539 : vector<8xf32> to vector<8x1xf32>
    %541 = tpu.reciprocal %540 {approx = true} : vector<8x1xf32> -> vector<8x1xf32>
    %542 = vector.broadcast %541 : vector<8x1xf32> to vector<8x8xf32>
    %543 = arith.mulf %538, %542 : vector<8x8xf32>
    %544 = vector.extract_strided_slice %450 {offsets = [0, 24], sizes = [8, 8], strides = [1, 1]} : vector<8x32xf32> to vector<8x8xf32>
    %545 = arith.truncf %543 : vector<8x8xf32> to vector<8x8xbf16>
    %546 = arith.truncf %544 : vector<8x8xf32> to vector<8x8xbf16>
    %cst_150 = arith.constant dense<0.000000e+00> : vector<8x8xf32>
    %547 = tpu.matmul %545, %546, %cst_150 {dimension_numbers = #tpu.dot_dimension_numbers<[1], [0], [0], [1], [0, 0, 1, 1], [], []>} : vector<8x8xbf16>, vector<8x8xbf16>, vector<8x8xf32> -> vector<8x8xf32>
    %548 = tpu.concatenate %475, %499, %523, %547 in 1 : vector<8x8xf32>, vector<8x8xf32>, vector<8x8xf32>, vector<8x8xf32> -> vector<8x32xf32>
    %549 = tpu.concatenate %447, %548 in 0 : vector<8x32xf32>, vector<8x32xf32> -> vector<16x32xf32>
    %c1_151 = arith.constant 1 : index
    %c0_152 = arith.constant 0 : index
    %c0_153 = arith.constant 0 : index
    %550 = vector.load %arg6[%c1_151, %c0_152, %c0_153] : memref<2x32x32xf32, #tpu.memory_space<vmem>>, vector<1x32x32xf32>
    %551 = vector.shape_cast %550 : vector<1x32x32xf32> to vector<32x32xf32>
    %552 = arith.truncf %549 : vector<16x32xf32> to vector<16x32xbf16>
    %553 = arith.truncf %551 : vector<32x32xf32> to vector<32x32xbf16>
    %cst_154 = arith.constant dense<0.000000e+00> : vector<16x32xf32>
    %554 = tpu.matmul %552, %553, %cst_154 {dimension_numbers = #tpu.dot_dimension_numbers<[1], [0], [0], [1], [0, 0, 1, 1], [], []>} : vector<16x32xbf16>, vector<32x32xbf16>, vector<16x32xf32> -> vector<16x32xf32>
    %c1_155 = arith.constant 1 : index
    %c0_156 = arith.constant 0 : index
    %c0_157 = arith.constant 0 : index
    %555 = vector.load %arg7[%c1_155, %c0_156, %c0_157] : memref<2x1x32xf32, #tpu.memory_space<vmem>>, vector<1x1x32xf32>
    %556 = vector.shape_cast %555 : vector<1x1x32xf32> to vector<1x32xf32>
    %557 = vector.broadcast %556 : vector<1x32xf32> to vector<16x32xf32>
    %558 = arith.addf %554, %557 : vector<16x32xf32>
    %559 = arith.addf %558, %334 : vector<16x32xf32>
    %c1_158 = arith.constant 1 : index
    %c0_159 = arith.constant 0 : index
    %c0_160 = arith.constant 0 : index
    %560 = vector.load %arg8[%c1_158, %c0_159, %c0_160] : memref<2x1x32xf32, #tpu.memory_space<vmem>>, vector<1x1x32xf32>
    %561 = vector.shape_cast %560 : vector<1x1x32xf32> to vector<1x32xf32>
    %c1_161 = arith.constant 1 : index
    %c0_162 = arith.constant 0 : index
    %c0_163 = arith.constant 0 : index
    %562 = vector.load %arg9[%c1_161, %c0_162, %c0_163] : memref<2x1x32xf32, #tpu.memory_space<vmem>>, vector<1x1x32xf32>
    %563 = vector.shape_cast %562 : vector<1x1x32xf32> to vector<1x32xf32>
    %cst_164 = arith.constant dense<0.000000e+00> : vector<16xf32>
    %564 = vector.multi_reduction <add>, %559, %cst_164 [1] : vector<16x32xf32> to vector<16xf32>
    %565 = vector.shape_cast %564 : vector<16xf32> to vector<16x1xf32>
    %cst_165 = arith.constant 3.200000e+01 : f32
    %566 = vector.broadcast %cst_165 : f32 to vector<16x1xf32>
    %567 = arith.divf %565, %566 : vector<16x1xf32>
    %568 = vector.broadcast %567 : vector<16x1xf32> to vector<16x32xf32>
    %569 = arith.subf %559, %568 : vector<16x32xf32>
    %570 = arith.mulf %569, %569 : vector<16x32xf32>
    %cst_166 = arith.constant dense<0.000000e+00> : vector<16xf32>
    %571 = vector.multi_reduction <add>, %570, %cst_166 [1] : vector<16x32xf32> to vector<16xf32>
    %572 = vector.shape_cast %571 : vector<16xf32> to vector<16x1xf32>
    %cst_167 = arith.constant 3.200000e+01 : f32
    %573 = vector.broadcast %cst_167 : f32 to vector<16x1xf32>
    %574 = arith.divf %572, %573 : vector<16x1xf32>
    %575 = vector.broadcast %567 : vector<16x1xf32> to vector<16x32xf32>
    %576 = arith.subf %559, %575 : vector<16x32xf32>
    %cst_168 = arith.constant 9.99999996E-13 : f32
    %577 = vector.broadcast %cst_168 : f32 to vector<16x1xf32>
    %578 = arith.addf %574, %577 : vector<16x1xf32>
    %579 = math.rsqrt %578 : vector<16x1xf32>
    %580 = vector.broadcast %579 : vector<16x1xf32> to vector<16x32xf32>
    %581 = arith.mulf %576, %580 : vector<16x32xf32>
    %582 = vector.broadcast %561 : vector<1x32xf32> to vector<16x32xf32>
    %583 = arith.mulf %581, %582 : vector<16x32xf32>
    %584 = vector.broadcast %563 : vector<1x32xf32> to vector<16x32xf32>
    %585 = arith.addf %583, %584 : vector<16x32xf32>
    %c1_169 = arith.constant 1 : index
    %c0_170 = arith.constant 0 : index
    %c0_171 = arith.constant 0 : index
    %586 = vector.load %arg10[%c1_169, %c0_170, %c0_171] : memref<2x32x64xf32, #tpu.memory_space<vmem>>, vector<1x32x64xf32>
    %587 = vector.shape_cast %586 : vector<1x32x64xf32> to vector<32x64xf32>
    %588 = arith.truncf %585 : vector<16x32xf32> to vector<16x32xbf16>
    %589 = arith.truncf %587 : vector<32x64xf32> to vector<32x64xbf16>
    %cst_172 = arith.constant dense<0.000000e+00> : vector<16x64xf32>
    %590 = tpu.matmul %588, %589, %cst_172 {dimension_numbers = #tpu.dot_dimension_numbers<[1], [0], [0], [1], [0, 0, 1, 1], [], []>} : vector<16x32xbf16>, vector<32x64xbf16>, vector<16x64xf32> -> vector<16x64xf32>
    %c1_173 = arith.constant 1 : index
    %c0_174 = arith.constant 0 : index
    %c0_175 = arith.constant 0 : index
    %591 = vector.load %arg11[%c1_173, %c0_174, %c0_175] : memref<2x1x64xf32, #tpu.memory_space<vmem>>, vector<1x1x64xf32>
    %592 = vector.shape_cast %591 : vector<1x1x64xf32> to vector<1x64xf32>
    %593 = vector.broadcast %592 : vector<1x64xf32> to vector<16x64xf32>
    %594 = arith.addf %590, %593 : vector<16x64xf32>
    %cst_176 = arith.constant 5.000000e-01 : f32
    %595 = vector.broadcast %cst_176 : f32 to vector<16x64xf32>
    %596 = arith.mulf %595, %594 : vector<16x64xf32>
    %cst_177 = arith.constant 4.471500e-02 : f32
    %597 = vector.broadcast %cst_177 : f32 to vector<16x64xf32>
    %598 = arith.mulf %597, %594 : vector<16x64xf32>
    %599 = arith.mulf %598, %594 : vector<16x64xf32>
    %600 = arith.mulf %599, %594 : vector<16x64xf32>
    %601 = arith.addf %594, %600 : vector<16x64xf32>
    %cst_178 = arith.constant 0.797884583 : f32
    %602 = vector.broadcast %cst_178 : f32 to vector<16x64xf32>
    %603 = arith.mulf %602, %601 : vector<16x64xf32>
    %604 = math.tanh %603 : vector<16x64xf32>
    %cst_179 = arith.constant 1.000000e+00 : f32
    %605 = vector.broadcast %cst_179 : f32 to vector<16x64xf32>
    %606 = arith.addf %605, %604 : vector<16x64xf32>
    %607 = arith.mulf %596, %606 : vector<16x64xf32>
    %c1_180 = arith.constant 1 : index
    %c0_181 = arith.constant 0 : index
    %c0_182 = arith.constant 0 : index
    %608 = vector.load %arg12[%c1_180, %c0_181, %c0_182] : memref<2x64x32xf32, #tpu.memory_space<vmem>>, vector<1x64x32xf32>
    %609 = vector.shape_cast %608 : vector<1x64x32xf32> to vector<64x32xf32>
    %610 = arith.truncf %607 : vector<16x64xf32> to vector<16x64xbf16>
    %611 = arith.truncf %609 : vector<64x32xf32> to vector<64x32xbf16>
    %cst_183 = arith.constant dense<0.000000e+00> : vector<16x32xf32>
    %612 = tpu.matmul %610, %611, %cst_183 {dimension_numbers = #tpu.dot_dimension_numbers<[1], [0], [0], [1], [0, 0, 1, 1], [], []>} : vector<16x64xbf16>, vector<64x32xbf16>, vector<16x32xf32> -> vector<16x32xf32>
    %c1_184 = arith.constant 1 : index
    %c0_185 = arith.constant 0 : index
    %c0_186 = arith.constant 0 : index
    %613 = vector.load %arg13[%c1_184, %c0_185, %c0_186] : memref<2x1x32xf32, #tpu.memory_space<vmem>>, vector<1x1x32xf32>
    %614 = vector.shape_cast %613 : vector<1x1x32xf32> to vector<1x32xf32>
    %615 = vector.broadcast %614 : vector<1x32xf32> to vector<16x32xf32>
    %616 = arith.addf %612, %615 : vector<16x32xf32>
    %617 = arith.addf %616, %585 : vector<16x32xf32>
    %c1_187 = arith.constant 1 : index
    %c0_188 = arith.constant 0 : index
    %c0_189 = arith.constant 0 : index
    %618 = vector.load %arg14[%c1_187, %c0_188, %c0_189] : memref<2x1x32xf32, #tpu.memory_space<vmem>>, vector<1x1x32xf32>
    %619 = vector.shape_cast %618 : vector<1x1x32xf32> to vector<1x32xf32>
    %c1_190 = arith.constant 1 : index
    %c0_191 = arith.constant 0 : index
    %c0_192 = arith.constant 0 : index
    %620 = vector.load %arg15[%c1_190, %c0_191, %c0_192] : memref<2x1x32xf32, #tpu.memory_space<vmem>>, vector<1x1x32xf32>
    %621 = vector.shape_cast %620 : vector<1x1x32xf32> to vector<1x32xf32>
    %cst_193 = arith.constant dense<0.000000e+00> : vector<16xf32>
    %622 = vector.multi_reduction <add>, %617, %cst_193 [1] : vector<16x32xf32> to vector<16xf32>
    %623 = vector.shape_cast %622 : vector<16xf32> to vector<16x1xf32>
    %cst_194 = arith.constant 3.200000e+01 : f32
    %624 = vector.broadcast %cst_194 : f32 to vector<16x1xf32>
    %625 = arith.divf %623, %624 : vector<16x1xf32>
    %626 = vector.broadcast %625 : vector<16x1xf32> to vector<16x32xf32>
    %627 = arith.subf %617, %626 : vector<16x32xf32>
    %628 = arith.mulf %627, %627 : vector<16x32xf32>
    %cst_195 = arith.constant dense<0.000000e+00> : vector<16xf32>
    %629 = vector.multi_reduction <add>, %628, %cst_195 [1] : vector<16x32xf32> to vector<16xf32>
    %630 = vector.shape_cast %629 : vector<16xf32> to vector<16x1xf32>
    %cst_196 = arith.constant 3.200000e+01 : f32
    %631 = vector.broadcast %cst_196 : f32 to vector<16x1xf32>
    %632 = arith.divf %630, %631 : vector<16x1xf32>
    %633 = vector.broadcast %625 : vector<16x1xf32> to vector<16x32xf32>
    %634 = arith.subf %617, %633 : vector<16x32xf32>
    %cst_197 = arith.constant 9.99999996E-13 : f32
    %635 = vector.broadcast %cst_197 : f32 to vector<16x1xf32>
    %636 = arith.addf %632, %635 : vector<16x1xf32>
    %637 = math.rsqrt %636 : vector<16x1xf32>
    %638 = vector.broadcast %637 : vector<16x1xf32> to vector<16x32xf32>
    %639 = arith.mulf %634, %638 : vector<16x32xf32>
    %640 = vector.broadcast %619 : vector<1x32xf32> to vector<16x32xf32>
    %641 = arith.mulf %639, %640 : vector<16x32xf32>
    %642 = vector.broadcast %621 : vector<1x32xf32> to vector<16x32xf32>
    %643 = arith.addf %641, %642 : vector<16x32xf32>
    %644 = vector.extract_strided_slice %643 {offsets = [0, 0], sizes = [1, 32], strides = [1, 1]} : vector<16x32xf32> to vector<1x32xf32>
    %645 = vector.extract_strided_slice %643 {offsets = [8, 0], sizes = [1, 32], strides = [1, 1]} : vector<16x32xf32> to vector<1x32xf32>
    %646 = tpu.concatenate %644, %645 in 0 : vector<1x32xf32>, vector<1x32xf32> -> vector<2x32xf32>
    %c0_198 = arith.constant 0 : index
    %c0_199 = arith.constant 0 : index
    %647 = vector.load %arg16[%c0_198, %c0_199] : memref<32x32xf32, #tpu.memory_space<vmem>>, vector<32x32xf32>
    %648 = arith.truncf %646 : vector<2x32xf32> to vector<2x32xbf16>
    %649 = arith.truncf %647 : vector<32x32xf32> to vector<32x32xbf16>
    %cst_200 = arith.constant dense<0.000000e+00> : vector<2x32xf32>
    %650 = tpu.matmul %648, %649, %cst_200 {dimension_numbers = #tpu.dot_dimension_numbers<[1], [0], [0], [1], [0, 0, 1, 1], [], []>} : vector<2x32xbf16>, vector<32x32xbf16>, vector<2x32xf32> -> vector<2x32xf32>
    %c0_201 = arith.constant 0 : index
    %c0_202 = arith.constant 0 : index
    %651 = vector.load %arg17[%c0_201, %c0_202] : memref<1x32xf32, #tpu.memory_space<vmem>>, vector<1x32xf32>
    %652 = vector.broadcast %651 : vector<1x32xf32> to vector<2x32xf32>
    %653 = arith.addf %650, %652 : vector<2x32xf32>
    %654 = math.tanh %653 : vector<2x32xf32>
    %c0_203 = arith.constant 0 : index
    %c0_204 = arith.constant 0 : index
    %655 = vector.load %arg18[%c0_203, %c0_204] : memref<32x128xf32, #tpu.memory_space<vmem>>, vector<32x128xf32>
    %656 = arith.truncf %654 : vector<2x32xf32> to vector<2x32xbf16>
    %657 = arith.truncf %655 : vector<32x128xf32> to vector<32x128xbf16>
    %cst_205 = arith.constant dense<0.000000e+00> : vector<2x128xf32>
    %658 = tpu.matmul %656, %657, %cst_205 {dimension_numbers = #tpu.dot_dimension_numbers<[1], [0], [0], [1], [0, 0, 1, 1], [], []>} : vector<2x32xbf16>, vector<32x128xbf16>, vector<2x128xf32> -> vector<2x128xf32>
    %c0_206 = arith.constant 0 : index
    %c0_207 = arith.constant 0 : index
    %659 = vector.load %arg19[%c0_206, %c0_207] : memref<1x128xf32, #tpu.memory_space<vmem>>, vector<1x128xf32>
    %660 = vector.broadcast %659 : vector<1x128xf32> to vector<2x128xf32>
    %661 = arith.addf %658, %660 : vector<2x128xf32>
    %c0_208 = arith.constant 0 : index
    %c0_209 = arith.constant 0 : index
    %662 = vector.load %arg20[%c0_208, %c0_209] : memref<2x128xf32, #tpu.memory_space<vmem>>, vector<2x128xf32>
    tpu.vector_store %arg20[%c0_208, %c0_209], %661 {strides = array<i32>} : memref<2x128xf32, #tpu.memory_space<vmem>>, vector<2x128xf32>,
    return
  }
}

</mosaic_0001>

<llo_original>
// kernel: tpu_custom_call.1
$region0: #{tpu_custom_call.1}
  #allocation0 [shape = 'u32[]', space=smem, size = 0x4, offset = 0x4, fixed_abs, tag = 'smem constant byte address 0x4 - core index']
  #allocation1 [shape = 'u32[144,128]{1,0:T(1,128)}', space=vmem, size = 0x12000, scoped, tag = 'internal scratch']
  %s0 = inlined_call_operand.hbm [shape: f32[16,32], index: 0, kind: input, shape index: {}]
  %s1 = inlined_call_operand.hbm [shape: f32[2,8], index: 1, kind: input, shape index: {}]
  %s2 = inlined_call_operand.hbm [shape: f32[1,32], index: 2, kind: input, shape index: {}]
  %s3 = inlined_call_operand.hbm [shape: f32[1,32], index: 3, kind: input, shape index: {}]
  %s4 = inlined_call_operand.vmem [shape: f32[2,32,96], index: 4, kind: input, shape index: {}]
  %s5 = inlined_call_operand.hbm [shape: f32[2,1,96], index: 5, kind: input, shape index: {}]
  %s6 = inlined_call_operand.vmem [shape: f32[2,32,32], index: 6, kind: input, shape index: {}]
  %s7 = inlined_call_operand.hbm [shape: f32[2,1,32], index: 7, kind: input, shape index: {}]
  %s8 = inlined_call_operand.hbm [shape: f32[2,1,32], index: 8, kind: input, shape index: {}]
  %s9 = inlined_call_operand.hbm [shape: f32[2,1,32], index: 9, kind: input, shape index: {}]
  %s10 = inlined_call_operand.vmem [shape: f32[2,32,64], index: 10, kind: input, shape index: {}]
  %s11 = inlined_call_operand.hbm [shape: f32[2,1,64], index: 11, kind: input, shape index: {}]
  %s12 = inlined_call_operand.vmem [shape: f32[2,64,32], index: 12, kind: input, shape index: {}]
  %s13 = inlined_call_operand.hbm [shape: f32[2,1,32], index: 13, kind: input, shape index: {}]
  %s14 = inlined_call_operand.hbm [shape: f32[2,1,32], index: 14, kind: input, shape index: {}]
  %s15 = inlined_call_operand.hbm [shape: f32[2,1,32], index: 15, kind: input, shape index: {}]
  %s16 = inlined_call_operand.vmem [shape: f32[32,32], index: 16, kind: input, shape index: {}]
  %s17 = inlined_call_operand.hbm [shape: f32[1,32], index: 17, kind: input, shape index: {}]
  %s18 = inlined_call_operand.vmem [shape: f32[32,128], index: 18, kind: input, shape index: {}]
  %s19 = inlined_call_operand.vmem [shape: f32[1,128], index: 19, kind: input, shape index: {}]
  %s20 = inlined_call_operand.hbm [shape: f32[2,128], index: 20, kind: output, shape index: {}]
  %s21 = sld [smem:[#allocation0]]
  $region142: #{tpu_custom_call.1} parent=0
    _
  %s23 = ssub.s32 1, %s21
  %s24 = scalar_select 0, %s23, %s21
  $region1: #{tpu_custom_call.1} parent=0
    #allocation2 [shape = 'u8[8192]{0}', space=vmem, size = 0x2000, scoped, tag = 'input window, operand 0, single buffered']
    #allocation3 [shape = 's32[1]{0}', space=sflag, size = 0x4, scoped, tag = 'scoped memory for tpu_custom_call.1']
    #allocation4 [shape = 's32[1]{0}', space=sflag, size = 0x4, scoped, tag = 'scoped memory for tpu_custom_call.1']
    #allocation5 [shape = 'u8[1024]{0}', space=vmem, size = 0x400, scoped, tag = 'input window, operand 1, single buffered']
    #allocation6 [shape = 's32[1]{0}', space=sflag, size = 0x4, scoped, tag = 'scoped memory for tpu_custom_call.1']
    #allocation7 [shape = 'u8[512]{0}', space=vmem, size = 0x400, scoped, tag = 'input window, operand 2, single buffered']
    #allocation8 [shape = 'u8[512]{0}', space=vmem, size = 0x400, scoped, tag = 'input window, operand 3, single buffered']
    #allocation9 [shape = 's32[1]{0}', space=sflag, size = 0x4, scoped, tag = 'scoped memory for tpu_custom_call.1']
    #allocation10 [shape = 'u8[1024]{0}', space=vmem, size = 0x400, scoped, tag = 'input window, operand 5, single buffered']
    #allocation11 [shape = 'u8[1024]{0}', space=vmem, size = 0x400, scoped, tag = 'input window, operand 7, single buffered']
    #allocation12 [shape = 's32[1]{0}', space=sflag, size = 0x4, scoped, tag = 'scoped memory for tpu_custom_call.1']
    #allocation13 [shape = 'u8[1024]{0}', space=vmem, size = 0x400, scoped, tag = 'input window, operand 8, single buffered']
    #allocation14 [shape = 'u8[1024]{0}', space=vmem, size = 0x400, scoped, tag = 'input window, operand 9, single buffered']
    #allocation15 [shape = 's32[1]{0}', space=sflag, size = 0x4, scoped, tag = 'scoped memory for tpu_custom_call.1']
    #allocation16 [shape = 'u8[1024]{0}', space=vmem, size = 0x400, scoped, tag = 'input window, operand 11, single buffered']
    #allocation17 [shape = 'u8[1024]{0}', space=vmem, size = 0x400, scoped, tag = 'input window, operand 13, single buffered']
    #allocation18 [shape = 's32[1]{0}', space=sflag, size = 0x4, scoped, tag = 'scoped memory for tpu_custom_call.1']
    #allocation19 [shape = 'u8[1024]{0}', space=vmem, size = 0x400, scoped, tag = 'input window, operand 14, single buffered']
    #allocation20 [shape = 'u8[1024]{0}', space=vmem, size = 0x400, scoped, tag = 'input window, operand 15, single buffered']
    #allocation21 [shape = 's32[1]{0}', space=sflag, size = 0x4, scoped, tag = 'scoped memory for tpu_custom_call.1']
    #allocation22 [shape = 'u8[512]{0}', space=vmem, size = 0x400, scoped, tag = 'input window, operand 17, single buffered']
    #allocation23 [shape = 'u8[1024]{0}', space=vmem, size = 0x400, scoped, tag = 'output window, operand 0, single buffered']
    %25 = vsyncpa [#allocation3], 0
    %26 = vsyncpa [#allocation6], 0
    %27 = vsyncpa [#allocation9], 0
    %28 = vsyncpa [#allocation12], 0
    %29 = vsyncpa [#allocation15], 0
    %30 = vsyncpa [#allocation18], 0
    %31 = vsyncpa [#allocation21], 0
    %32 = vsyncpa [#allocation4], 0
    // Predicated region
    $region2: #{tpu_custom_call.1} parent=1 // pred_check
      _
    $region3: #{tpu_custom_call.1} parent=1 // pred_check_branch
      %34 = sbr.rel (0) target = $region5
    $region4: #{tpu_custom_call.1} parent=1 // pred_region
      %s36 = ssub.s32 256, 256
      %37 = vsyncadd [#allocation3], %s36
      %s38 = sshll.u32 [#allocation2], 4
      %s39 = int_to_ptr.vmem [resolvable:$true] %s38
      %44 = dma.hbm_to_vmem [thread:$0]  %s0, 256, %s39, [#allocation3], 128, 128, 8
    $region5: #{tpu_custom_call.1} parent=1 // pred_fallthru
      _
    // Predicated region
    $region6: #{tpu_custom_call.1} parent=1 // pred_check
      _
    $region7: #{tpu_custom_call.1} parent=1 // pred_check_branch
      %46 = sbr.rel (0) target = $region9
    $region8: #{tpu_custom_call.1} parent=1 // pred_region
      %s48 = ssub.s32 32, 32
      %49 = vsyncadd [#allocation6], %s48
      %s51 = sshll.u32 [#allocation5], 4
      %s52 = int_to_ptr.vmem [resolvable:$true] %s51
      %54 = dma.hbm_to_vmem [thread:$0]  %s1, 32, %s52, [#allocation6]
    $region9: #{tpu_custom_call.1} parent=1 // pred_fallthru
      _
    // Predicated region
    $region10: #{tpu_custom_call.1} parent=1 // pred_check
      _
    $region11: #{tpu_custom_call.1} parent=1 // pred_check_branch
      %56 = sbr.rel (0) target = $region13
    $region12: #{tpu_custom_call.1} parent=1 // pred_region
      %s58 = ssub.s32 16, 16
      %59 = vsyncadd [#allocation6], %s58
      %s61 = sshll.u32 [#allocation7], 4
      %s62 = int_to_ptr.vmem [resolvable:$true] %s61
      %64 = dma.hbm_to_vmem [thread:$0]  %s2, 16, %s62, [#allocation6]
    $region13: #{tpu_custom_call.1} parent=1 // pred_fallthru
      _
    // Predicated region
    $region14: #{tpu_custom_call.1} parent=1 // pred_check
      _
    $region15: #{tpu_custom_call.1} parent=1 // pred_check_branch
      %66 = sbr.rel (0) target = $region17
    $region16: #{tpu_custom_call.1} parent=1 // pred_region
      %s68 = ssub.s32 16, 16
      %69 = vsyncadd [#allocation9], %s68
      %s71 = sshll.u32 [#allocation8], 4
      %s72 = int_to_ptr.vmem [resolvable:$true] %s71
      %74 = dma.hbm_to_vmem [thread:$0]  %s3, 16, %s72, [#allocation9]
    $region17: #{tpu_custom_call.1} parent=1 // pred_fallthru
      _
    // Predicated region
    $region18: #{tpu_custom_call.1} parent=1 // pred_check
      _
    $region19: #{tpu_custom_call.1} parent=1 // pred_check_branch
      %76 = sbr.rel (0) target = $region21
    $region20: #{tpu_custom_call.1} parent=1 // pred_region
      _
    $region21: #{tpu_custom_call.1} parent=1 // pred_fallthru
      _
    // Predicated region
    $region22: #{tpu_custom_call.1} parent=1 // pred_check
      _
    $region23: #{tpu_custom_call.1} parent=1 // pred_check_branch
      %78 = sbr.rel (0) target = $region25
    $region24: #{tpu_custom_call.1} parent=1 // pred_region
      %s80 = ssub.s32 32, 32
      %81 = vsyncadd [#allocation9], %s80
      %s82 = sshll.u32 [#allocation10], 4
      %s83 = int_to_ptr.vmem [resolvable:$true] %s82
      %88 = dma.hbm_to_vmem [thread:$0]  %s5, 32, %s83, [#allocation9], 16, 16, 1
    $region25: #{tpu_custom_call.1} parent=1 // pred_fallthru
      _
    // Predicated region
    $region26: #{tpu_custom_call.1} parent=1 // pred_check
      _
    $region27: #{tpu_custom_call.1} parent=1 // pred_check_branch
      %90 = sbr.rel (0) target = $region29
    $region28: #{tpu_custom_call.1} parent=1 // pred_region
      _
    $region29: #{tpu_custom_call.1} parent=1 // pred_fallthru
      _
    // Predicated region
    $region30: #{tpu_custom_call.1} parent=1 // pred_check
      _
    $region31: #{tpu_custom_call.1} parent=1 // pred_check_branch
      %92 = sbr.rel (0) target = $region33
    $region32: #{tpu_custom_call.1} parent=1 // pred_region
      %s94 = ssub.s32 32, 32
      %95 = vsyncadd [#allocation12], %s94
      %s96 = sshll.u32 [#allocation11], 4
      %s97 = int_to_ptr.vmem [resolvable:$true] %s96
      %102 = dma.hbm_to_vmem [thread:$0]  %s7, 32, %s97, [#allocation12], 16, 16, 1
    $region33: #{tpu_custom_call.1} parent=1 // pred_fallthru
      _
    // Predicated region
    $region34: #{tpu_custom_call.1} parent=1 // pred_check
      _
    $region35: #{tpu_custom_call.1} parent=1 // pred_check_branch
      %104 = sbr.rel (0) target = $region37
    $region36: #{tpu_custom_call.1} parent=1 // pred_region
      %s106 = ssub.s32 32, 32
      %107 = vsyncadd [#allocation12], %s106
      %s108 = sshll.u32 [#allocation13], 4
      %s109 = int_to_ptr.vmem [resolvable:$true] %s108
      %114 = dma.hbm_to_vmem [thread:$0]  %s8, 32, %s109, [#allocation12], 16, 16, 1
    $region37: #{tpu_custom_call.1} parent=1 // pred_fallthru
      _
    // Predicated region
    $region38: #{tpu_custom_call.1} parent=1 // pred_check
      _
    $region39: #{tpu_custom_call.1} parent=1 // pred_check_branch
      %116 = sbr.rel (0) target = $region41
    $region40: #{tpu_custom_call.1} parent=1 // pred_region
      %s118 = ssub.s32 32, 32
      %119 = vsyncadd [#allocation15], %s118
      %s120 = sshll.u32 [#allocation14], 4
      %s121 = int_to_ptr.vmem [resolvable:$true] %s120
      %126 = dma.hbm_to_vmem [thread:$0]  %s9, 32, %s121, [#allocation15], 16, 16, 1
    $region41: #{tpu_custom_call.1} parent=1 // pred_fallthru
      _
    // Predicated region
    $region42: #{tpu_custom_call.1} parent=1 // pred_check
      _
    $region43: #{tpu_custom_call.1} parent=1 // pred_check_branch
      %128 = sbr.rel (0) target = $region45
    $region44: #{tpu_custom_call.1} parent=1 // pred_region
      _
    $region45: #{tpu_custom_call.1} parent=1 // pred_fallthru
      _
    // Predicated region
    $region46: #{tpu_custom_call.1} parent=1 // pred_check
      _
    $region47: #{tpu_custom_call.1} parent=1 // pred_check_branch
      %130 = sbr.rel (0) target = $region49
    $region48: #{tpu_custom_call.1} parent=1 // pred_region
      %s132 = ssub.s32 32, 32
      %133 = vsyncadd [#allocation15], %s132
      %s134 = sshll.u32 [#allocation16], 4
      %s135 = int_to_ptr.vmem [resolvable:$true] %s134
      %140 = dma.hbm_to_vmem [thread:$0]  %s11, 32, %s135, [#allocation15], 16, 16, 1
    $region49: #{tpu_custom_call.1} parent=1 // pred_fallthru
      _
    // Predicated region
    $region50: #{tpu_custom_call.1} parent=1 // pred_check
      _
    $region51: #{tpu_custom_call.1} parent=1 // pred_check_branch
      %142 = sbr.rel (0) target = $region53
    $region52: #{tpu_custom_call.1} parent=1 // pred_region
      _
    $region53: #{tpu_custom_call.1} parent=1 // pred_fallthru
      _
    // Predicated region
    $region54: #{tpu_custom_call.1} parent=1 // pred_check
      _
    $region55: #{tpu_custom_call.1} parent=1 // pred_check_branch
      %144 = sbr.rel (0) target = $region57
    $region56: #{tpu_custom_call.1} parent=1 // pred_region
      %s146 = ssub.s32 32, 32
      %147 = vsyncadd [#allocation18], %s146
      %s148 = sshll.u32 [#allocation17], 4
      %s149 = int_to_ptr.vmem [resolvable:$true] %s148
      %154 = dma.hbm_to_vmem [thread:$0]  %s13, 32, %s149, [#allocation18], 16, 16, 1
    $region57: #{tpu_custom_call.1} parent=1 // pred_fallthru
      _
    // Predicated region
    $region58: #{tpu_custom_call.1} parent=1 // pred_check
      _
    $region59: #{tpu_custom_call.1} parent=1 // pred_check_branch
      %156 = sbr.rel (0) target = $region61
    $region60: #{tpu_custom_call.1} parent=1 // pred_region
      %s158 = ssub.s32 32, 32
      %159 = vsyncadd [#allocation18], %s158
      %s160 = sshll.u32 [#allocation19], 4
      %s161 = int_to_ptr.vmem [resolvable:$true] %s160
      %166 = dma.hbm_to_vmem [thread:$0]  %s14, 32, %s161, [#allocation18], 16, 16, 1
    $region61: #{tpu_custom_call.1} parent=1 // pred_fallthru
      _
    // Predicated region
    $region62: #{tpu_custom_call.1} parent=1 // pred_check
      _
    $region63: #{tpu_custom_call.1} parent=1 // pred_check_branch
      %168 = sbr.rel (0) target = $region65
    $region64: #{tpu_custom_call.1} parent=1 // pred_region
      %s170 = ssub.s32 32, 32
      %171 = vsyncadd [#allocation21], %s170
      %s172 = sshll.u32 [#allocation20], 4
      %s173 = int_to_ptr.vmem [resolvable:$true] %s172
      %178 = dma.hbm_to_vmem [thread:$0]  %s15, 32, %s173, [#allocation21], 16, 16, 1
    $region65: #{tpu_custom_call.1} parent=1 // pred_fallthru
      _
    // Predicated region
    $region66: #{tpu_custom_call.1} parent=1 // pred_check
      _
    $region67: #{tpu_custom_call.1} parent=1 // pred_check_branch
      %180 = sbr.rel (0) target = $region69
    $region68: #{tpu_custom_call.1} parent=1 // pred_region
      _
    $region69: #{tpu_custom_call.1} parent=1 // pred_fallthru
      _
    // Predicated region
    $region70: #{tpu_custom_call.1} parent=1 // pred_check
      _
    $region71: #{tpu_custom_call.1} parent=1 // pred_check_branch
      %182 = sbr.rel (0) target = $region73
    $region72: #{tpu_custom_call.1} parent=1 // pred_region
      %s184 = ssub.s32 16, 16
      %185 = vsyncadd [#allocation21], %s184
      %s187 = sshll.u32 [#allocation22], 4
      %s188 = int_to_ptr.vmem [resolvable:$true] %s187
      %190 = dma.hbm_to_vmem [thread:$0]  %s17, 16, %s188, [#allocation21]
    $region73: #{tpu_custom_call.1} parent=1 // pred_fallthru
      _
    // Predicated region
    $region74: #{tpu_custom_call.1} parent=1 // pred_check
      _
    $region75: #{tpu_custom_call.1} parent=1 // pred_check_branch
      %192 = sbr.rel (0) target = $region77
    $region76: #{tpu_custom_call.1} parent=1 // pred_region
      _
    $region77: #{tpu_custom_call.1} parent=1 // pred_fallthru
      _
    // Predicated region
    $region78: #{tpu_custom_call.1} parent=1 // pred_check
      _
    $region79: #{tpu_custom_call.1} parent=1 // pred_check_branch
      %194 = sbr.rel (0) target = $region81
    $region80: #{tpu_custom_call.1} parent=1 // pred_region
      _
    $region81: #{tpu_custom_call.1} parent=1 // pred_fallthru
      _
    // Predicated region
    $region82: #{tpu_custom_call.1} parent=1 // pred_check
      _
    $region83: #{tpu_custom_call.1} parent=1 // pred_check_branch
      %196 = sbr.rel (0) target = $region85
    $region84: #{tpu_custom_call.1} parent=1 // pred_region
      %197 = dma.done [#allocation3], 256
    $region85: #{tpu_custom_call.1} parent=1 // pred_fallthru
      _
    // Predicated region
    $region86: #{tpu_custom_call.1} parent=1 // pred_check
      _
    $region87: #{tpu_custom_call.1} parent=1 // pred_check_branch
      %199 = sbr.rel (0) target = $region89
    $region88: #{tpu_custom_call.1} parent=1 // pred_region
      %200 = dma.done [#allocation6], 32
    $region89: #{tpu_custom_call.1} parent=1 // pred_fallthru
      _
    // Predicated region
    $region90: #{tpu_custom_call.1} parent=1 // pred_check
      _
    $region91: #{tpu_custom_call.1} parent=1 // pred_check_branch
      %202 = sbr.rel (0) target = $region93
    $region92: #{tpu_custom_call.1} parent=1 // pred_region
      %203 = dma.done [#allocation6], 16
    $region93: #{tpu_custom_call.1} parent=1 // pred_fallthru
      _
    // Predicated region
    $region94: #{tpu_custom_call.1} parent=1 // pred_check
      _
    $region95: #{tpu_custom_call.1} parent=1 // pred_check_branch
      %205 = sbr.rel (0) target = $region97
    $region96: #{tpu_custom_call.1} parent=1 // pred_region
      %206 = dma.done [#allocation9], 16
    $region97: #{tpu_custom_call.1} parent=1 // pred_fallthru
      _
    // Predicated region
    $region98: #{tpu_custom_call.1} parent=1 // pred_check
      _
    $region99: #{tpu_custom_call.1} parent=1 // pred_check_branch
      %208 = sbr.rel (0) target = $region101
    $region100: #{tpu_custom_call.1} parent=1 // pred_region
      %209 = dma.done [#allocation9], 32
    $region101: #{tpu_custom_call.1} parent=1 // pred_fallthru
      _
    // Predicated region
    $region102: #{tpu_custom_call.1} parent=1 // pred_check
      _
    $region103: #{tpu_custom_call.1} parent=1 // pred_check_branch
      %211 = sbr.rel (0) target = $region105
    $region104: #{tpu_custom_call.1} parent=1 // pred_region
      %212 = dma.done [#allocation12], 32
    $region105: #{tpu_custom_call.1} parent=1 // pred_fallthru
      _
    // Predicated region
    $region106: #{tpu_custom_call.1} parent=1 // pred_check
      _
    $region107: #{tpu_custom_call.1} parent=1 // pred_check_branch
      %214 = sbr.rel (0) target = $region109
    $region108: #{tpu_custom_call.1} parent=1 // pred_region
      %215 = dma.done [#allocation12], 32
    $region109: #{tpu_custom_call.1} parent=1 // pred_fallthru
      _
    // Predicated region
    $region110: #{tpu_custom_call.1} parent=1 // pred_check
      _
    $region111: #{tpu_custom_call.1} parent=1 // pred_check_branch
      %217 = sbr.rel (0) target = $region113
    $region112: #{tpu_custom_call.1} parent=1 // pred_region
      %218 = dma.done [#allocation15], 32
    $region113: #{tpu_custom_call.1} parent=1 // pred_fallthru
      _
    // Predicated region
    $region114: #{tpu_custom_call.1} parent=1 // pred_check
      _
    $region115: #{tpu_custom_call.1} parent=1 // pred_check_branch
      %220 = sbr.rel (0) target = $region117
    $region116: #{tpu_custom_call.1} parent=1 // pred_region
      %221 = dma.done [#allocation15], 32
    $region117: #{tpu_custom_call.1} parent=1 // pred_fallthru
      _
    // Predicated region
    $region118: #{tpu_custom_call.1} parent=1 // pred_check
      _
    $region119: #{tpu_custom_call.1} parent=1 // pred_check_branch
      %223 = sbr.rel (0) target = $region121
    $region120: #{tpu_custom_call.1} parent=1 // pred_region
      %224 = dma.done [#allocation18], 32
    $region121: #{tpu_custom_call.1} parent=1 // pred_fallthru
      _
    // Predicated region
    $region122: #{tpu_custom_call.1} parent=1 // pred_check
      _
    $region123: #{tpu_custom_call.1} parent=1 // pred_check_branch
      %226 = sbr.rel (0) target = $region125
    $region124: #{tpu_custom_call.1} parent=1 // pred_region
      %227 = dma.done [#allocation18], 32
    $region125: #{tpu_custom_call.1} parent=1 // pred_fallthru
      _
    // Predicated region
    $region126: #{tpu_custom_call.1} parent=1 // pred_check
      _
    $region127: #{tpu_custom_call.1} parent=1 // pred_check_branch
      %229 = sbr.rel (0) target = $region129
    $region128: #{tpu_custom_call.1} parent=1 // pred_region
      %230 = dma.done [#allocation21], 32
    $region129: #{tpu_custom_call.1} parent=1 // pred_fallthru
      _
    // Predicated region
    $region130: #{tpu_custom_call.1} parent=1 // pred_check
      _
    $region131: #{tpu_custom_call.1} parent=1 // pred_check_branch
      %232 = sbr.rel (0) target = $region133
    $region132: #{tpu_custom_call.1} parent=1 // pred_region
      %233 = dma.done [#allocation21], 16
    $region133: #{tpu_custom_call.1} parent=1 // pred_fallthru
      _
    %v235 = vld [vmem:[#allocation2] sm:$0xff]
    %v236 = vld [vmem:[#allocation2 + $0x8] sm:$0xff]
    %v237 = vld [vmem:[#allocation7] sm:$0x1]
    %v238 = vld [vmem:[#allocation8] sm:$0x1]
    %vm239 = vcmask 261120
    %v240 = vsel %vm239, %v235, 0.0
    %241 = vadd.xlane.f32.xlu0 %v240
    %v242 = vpop.xlane.xlu0 %241
    %v243 = vsel %vm239, %v236, 0.0
    %244 = vadd.xlane.f32.xlu0 %v243
    %v245 = vpop.xlane.xlu0 %244
    %v246 = vrcp.pop 32.0
    %v247 = vmul.f32 %v242, %v246
    %v248 = vmul.f32 %v245, %v246
    %v249 = vsub.f32 %v235, %v247
    %v250 = vsub.f32 %v236, %v248
    %v251 = vmul.f32 %v249, %v249
    %v252 = vmul.f32 %v250, %v250
    %v253 = vsel %vm239, %v251, 0.0
    %254 = vadd.xlane.f32.xlu0 %v253
    %v255 = vpop.xlane.xlu0 %254
    %v256 = vsel %vm239, %v252, 0.0
    %257 = vadd.xlane.f32.xlu0 %v256
    %v258 = vpop.xlane.xlu0 %257
    %v259 = vmul.f32 %v255, %v246
    %v260 = vmul.f32 %v258, %v246
    %v261 = vadd.f32 %v259, 1e-12
    %v262 = vadd.f32 %v260, 1e-12
    %v263 = vrsqrt.pop %v261
    %v264 = vrsqrt.pop %v262
    %v265 = vmul.f32 %v249, %v263
    %v266 = vmul.f32 %v250, %v264
    %v268 = vlaneseq
    %v269 = vshrl.u32 %v268, 7
    %v270 = vsub.s32 0, %v269
    %v271 = vrot.slane %v237, %v270
    %v273 = vmul.f32 %v265, %v271
    %v274 = vmul.f32 %v266, %v271
    %v276 = vlaneseq
    %v277 = vshrl.u32 %v276, 7
    %v278 = vsub.s32 0, %v277
    %v279 = vrot.slane %v238, %v278
    %v281 = vadd.f32 %v273, %v279
    %v282 = vadd.f32 %v274, %v279
    %v283 = vld [vmem:[#allocation5] sm:$0x3]
    %v284 = vld [vmem:[%s4] sm:$0xff]
    %v285 = vld [vmem:[%s4 + $0x8] sm:$0xff]
    %v286 = vld [vmem:[%s4 + $0x10] sm:$0xff]
    %v287 = vld [vmem:[%s4 + $0x18] sm:$0xff]
    %v288 = vpack.c.bf16 %v282, %v281
    %v289 = vpack.c.bf16 %v285, %v284
    %v290 = vpack.c.bf16 %v287, %v286
    %v291 = vld [vmem:[#allocation10] sm:$0x1]
    %v293 = vlaneseq
    %v294 = vshrl.u32 %v293, 7
    %v295 = vsub.s32 0, %v294
    %v296 = vrot.slane %v291, %v295
    %v299 = vsel %vm239, %v288, 0
    %301 = vmatprep.subr.bf16.mxu0 0
    %302 = vmatpush1.bf16.msra.mxu0 %v289
    %303 = vmatprep.subr.bf16.mxu0 0
    %304 = vmatpush1.bf16.msra.mxu0 %v290
    %305 = vmatprep.subr.bf16.mxu0 0
    %306 = vmatpush1.bf16.msra.mxu0 0
    %307 = vmatprep.subr.bf16.mxu0 0
    %308 = vmatpush1.bf16.msra.mxu0 0
    %309 = vmatprep.subr.bf16.mxu0 0
    %310 = vmatpush1.bf16.msra.mxu0 0
    %311 = vmatprep.subr.bf16.mxu0 0
    %312 = vmatpush1.bf16.msra.mxu0 0
    %313 = vmatprep.subr.bf16.mxu0 0
    %314 = vmatpush1.bf16.msra.mxu0 0
    %315 = vmatprep.subr.bf16.mxu0 0
    %316 = vmatpush1.bf16.msra.mxu0 0
    %317 = vmatprep.subr.bf16.mxu0 0
    %318 = vmatpush1.bf16.msra.mxu0 0
    %319 = vmatprep.subr.bf16.mxu0 0
    %320 = vmatpush1.bf16.msra.mxu0 0
    %321 = vmatprep.subr.bf16.mxu0 0
    %322 = vmatpush1.bf16.msra.mxu0 0
    %323 = vmatprep.subr.bf16.mxu0 0
    %324 = vmatpush1.bf16.msra.mxu0 0
    %325 = vmatprep.subr.bf16.mxu0 0
    %326 = vmatpush1.bf16.msra.mxu0 0
    %327 = vmatprep.subr.bf16.mxu0 0
    %328 = vmatpush1.bf16.msra.mxu0 0
    %329 = vmatprep.subr.bf16.mxu0 0
    %330 = vmatpush1.bf16.msra.mxu0 0
    %331 = vmatprep.subr.bf16.mxu0 0
    %332 = vmatpush1.bf16.msra.mxu0 0
    %333 = vmatprep.mubr.bf16.mxu0 0
    %334 = vmatmul.mubr.bf16.gmra.mrb[0].mxu0 %v299
    %v335 = vpop.f32.mrb[0].mxu0
    %v336 = vadd.f32 %v296, %v335
    %v337 = vpop.f32.mrb[0].mxu0
    %v338 = vpop.f32.mrb[0].mxu0
    %v339 = vadd.f32 %v296, %v338
    %v340 = vpop.f32.mrb[0].mxu0
    %341 = vdwg.mxu0
    %343 = vrot.lane.b32.xlu0 %v336, 96
    %v344 = vpop.permute.xlu0 %343
    %346 = vxpose.xlu0.b32.start [1/16] %v344, 128
    %347 = vxpose.xlu0.b32.cont [2/16] 0.0, 128
    %348 = vxpose.xlu0.b32.cont [3/16] 0.0, 128
    %349 = vxpose.xlu0.b32.cont [4/16] 0.0, 128
    %350 = vxpose.xlu0.b32.cont [5/16] 0.0, 128
    %351 = vxpose.xlu0.b32.cont [6/16] 0.0, 128
    %352 = vxpose.xlu0.b32.cont [7/16] 0.0, 128
    %353 = vxpose.xlu0.b32.cont [8/16] 0.0, 128
    %354 = vxpose.xlu0.b32.cont [9/16] 0.0, 128
    %355 = vxpose.xlu0.b32.cont [10/16] 0.0, 128
    %356 = vxpose.xlu0.b32.cont [11/16] 0.0, 128
    %357 = vxpose.xlu0.b32.cont [12/16] 0.0, 128
    %358 = vxpose.xlu0.b32.cont [13/16] 0.0, 128
    %359 = vxpose.xlu0.b32.cont [14/16] 0.0, 128
    %360 = vxpose.xlu0.b32.cont [15/16] 0.0, 128
    %361 = vxpose.xlu0.b32.end [16/16] 0.0, 128
    %v362 = vpop.trf.xlu0
    %v363 = vpop.trf.xlu0
    %v364 = vpop.trf.xlu0
    %v365 = vpop.trf.xlu0
    %v366 = vpop.trf.xlu0
    %v367 = vpop.trf.xlu0
    %v368 = vpop.trf.xlu0
    %v369 = vpop.trf.xlu0
    %v370 = vpop.trf.xlu0
    %v371 = vpop.trf.xlu0
    %v372 = vpop.trf.xlu0
    %v373 = vpop.trf.xlu0
    %v374 = vpop.trf.xlu0
    %v375 = vpop.trf.xlu0
    %v376 = vpop.trf.xlu0
    %v377 = vpop.trf.xlu0
    %v378 = vpack.c.bf16 %v336, %v336
    %v379 = vpack.c.bf16 %v362, %v362
    %vm380 = vcmask 64512
    %v382 = vsel %vm380, %v378, 0
    %vm384 = vcmask 1043456
    %v386 = vsel %vm384, %v379, 0
    %388 = vmatprep.subr.bf16.mxu0 0
    %389 = vmatpush1.bf16.msra.mxu0 %v386
    %390 = vmatprep.subr.bf16.mxu0 0
    %391 = vmatpush1.bf16.msra.mxu0 0
    %392 = vmatprep.subr.bf16.mxu0 0
    %393 = vmatpush1.bf16.msra.mxu0 0
    %394 = vmatprep.subr.bf16.mxu0 0
    %395 = vmatpush1.bf16.msra.mxu0 0
    %396 = vmatprep.subr.bf16.mxu0 0
    %397 = vmatpush1.bf16.msra.mxu0 0
    %398 = vmatprep.subr.bf16.mxu0 0
    %399 = vmatpush1.bf16.msra.mxu0 0
    %400 = vmatprep.subr.bf16.mxu0 0
    %401 = vmatpush1.bf16.msra.mxu0 0
    %402 = vmatprep.subr.bf16.mxu0 0
    %403 = vmatpush1.bf16.msra.mxu0 0
    %404 = vmatprep.subr.bf16.mxu0 0
    %405 = vmatpush1.bf16.msra.mxu0 0
    %406 = vmatprep.subr.bf16.mxu0 0
    %407 = vmatpush1.bf16.msra.mxu0 0
    %408 = vmatprep.subr.bf16.mxu0 0
    %409 = vmatpush1.bf16.msra.mxu0 0
    %410 = vmatprep.subr.bf16.mxu0 0
    %411 = vmatpush1.bf16.msra.mxu0 0
    %412 = vmatprep.subr.bf16.mxu0 0
    %413 = vmatpush1.bf16.msra.mxu0 0
    %414 = vmatprep.subr.bf16.mxu0 0
    %415 = vmatpush1.bf16.msra.mxu0 0
    %416 = vmatprep.subr.bf16.mxu0 0
    %417 = vmatpush1.bf16.msra.mxu0 0
    %418 = vmatprep.subr.bf16.mxu0 0
    %419 = vmatpush1.bf16.msra.mxu0 0
    %420 = vmatprep.mubr.bf16.mxu0 0
    %421 = vmatmul.mubr.bf16.gmra.mrb[0].mxu0 %v382
    %v422 = vpop.f32.mrb[0].mxu0
    %v423 = vadd.f32 0.0, %v422
    %v424 = vpop.f32.mrb[0].mxu0
    %v425 = vpop.f32.mrb[0].mxu0
    %v426 = vpop.f32.mrb[0].mxu0
    %427 = vdwg.mxu0
    %v428 = vmul.f32 %v423, 0.35355338
    %v429 = vlaneseq
    %v430 = vshrl.u32 %v429, 7
    %v431 = vsub.s32 0, %v430
    %v432 = vrot.slane %v283, %v431
    %v433 = vadd.f32 %v428, %v432
    %v434 = vsel %vm380, %v433, -inf
    %435 = vmax.xlane.f32.xlu0 %v434
    %v436 = vpop.xlane.xlu0 %435
    %v437 = vsub.f32 %v433, %v436
    %v438 = vmul.f32 %v437, 1.442695
    %v439 = vpow.pop %v438
    %v440 = vsel %vm380, %v439, 0.0
    %441 = vadd.xlane.f32.xlu0 %v440
    %v442 = vpop.xlane.xlu0 %441
    %v443 = vrcp.pop %v442
    %v444 = vmul.f32 %v439, %v443
    %v445 = vpack.c.bf16 %v444, %v444
    %447 = vrot.lane.b32.xlu0 %v378, 64
    %v448 = vpop.permute.xlu0 %447
    %v450 = vsel %vm380, %v445, 0
    %v453 = vsel %vm384, %v448, 0
    %455 = vmatprep.subr.bf16.mxu0 0
    %456 = vmatpush1.bf16.msra.mxu0 %v453
    %457 = vmatprep.subr.bf16.mxu0 0
    %458 = vmatpush1.bf16.msra.mxu0 0
    %459 = vmatprep.subr.bf16.mxu0 0
    %460 = vmatpush1.bf16.msra.mxu0 0
    %461 = vmatprep.subr.bf16.mxu0 0
    %462 = vmatpush1.bf16.msra.mxu0 0
    %463 = vmatprep.subr.bf16.mxu0 0
    %464 = vmatpush1.bf16.msra.mxu0 0
    %465 = vmatprep.subr.bf16.mxu0 0
    %466 = vmatpush1.bf16.msra.mxu0 0
    %467 = vmatprep.subr.bf16.mxu0 0
    %468 = vmatpush1.bf16.msra.mxu0 0
    %469 = vmatprep.subr.bf16.mxu0 0
    %470 = vmatpush1.bf16.msra.mxu0 0
    %471 = vmatprep.subr.bf16.mxu0 0
    %472 = vmatpush1.bf16.msra.mxu0 0
    %473 = vmatprep.subr.bf16.mxu0 0
    %474 = vmatpush1.bf16.msra.mxu0 0
    %475 = vmatprep.subr.bf16.mxu0 0
    %476 = vmatpush1.bf16.msra.mxu0 0
    %477 = vmatprep.subr.bf16.mxu0 0
    %478 = vmatpush1.bf16.msra.mxu0 0
    %479 = vmatprep.subr.bf16.mxu0 0
    %480 = vmatpush1.bf16.msra.mxu0 0
    %481 = vmatprep.subr.bf16.mxu0 0
    %482 = vmatpush1.bf16.msra.mxu0 0
    %483 = vmatprep.subr.bf16.mxu0 0
    %484 = vmatpush1.bf16.msra.mxu0 0
    %485 = vmatprep.subr.bf16.mxu0 0
    %486 = vmatpush1.bf16.msra.mxu0 0
    %487 = vmatprep.mubr.bf16.mxu0 0
    %488 = vmatmul.mubr.bf16.gmra.mrb[0].mxu0 %v450
    %v489 = vpop.f32.mrb[0].mxu0
    %v490 = vadd.f32 0.0, %v489
    %v491 = vpop.f32.mrb[0].mxu0
    %v492 = vpop.f32.mrb[0].mxu0
    %v493 = vpop.f32.mrb[0].mxu0
    %494 = vdwg.mxu0
    %495 = vrot.lane.b32.xlu0 %v336, 88
    %v496 = vpop.permute.xlu0 %495
    %498 = vxpose.xlu0.b32.start [1/16] %v496, 128
    %499 = vxpose.xlu0.b32.cont [2/16] 0.0, 128
    %500 = vxpose.xlu0.b32.cont [3/16] 0.0, 128
    %501 = vxpose.xlu0.b32.cont [4/16] 0.0, 128
    %502 = vxpose.xlu0.b32.cont [5/16] 0.0, 128
    %503 = vxpose.xlu0.b32.cont [6/16] 0.0, 128
    %504 = vxpose.xlu0.b32.cont [7/16] 0.0, 128
    %505 = vxpose.xlu0.b32.cont [8/16] 0.0, 128
    %506 = vxpose.xlu0.b32.cont [9/16] 0.0, 128
    %507 = vxpose.xlu0.b32.cont [10/16] 0.0, 128
    %508 = vxpose.xlu0.b32.cont [11/16] 0.0, 128
    %509 = vxpose.xlu0.b32.cont [12/16] 0.0, 128
    %510 = vxpose.xlu0.b32.cont [13/16] 0.0, 128
    %511 = vxpose.xlu0.b32.cont [14/16] 0.0, 128
    %512 = vxpose.xlu0.b32.cont [15/16] 0.0, 128
    %513 = vxpose.xlu0.b32.end [16/16] 0.0, 128
    %v514 = vpop.trf.xlu0
    %v515 = vpop.trf.xlu0
    %v516 = vpop.trf.xlu0
    %v517 = vpop.trf.xlu0
    %v518 = vpop.trf.xlu0
    %v519 = vpop.trf.xlu0
    %v520 = vpop.trf.xlu0
    %v521 = vpop.trf.xlu0
    %v522 = vpop.trf.xlu0
    %v523 = vpop.trf.xlu0
    %v524 = vpop.trf.xlu0
    %v525 = vpop.trf.xlu0
    %v526 = vpop.trf.xlu0
    %v527 = vpop.trf.xlu0
    %v528 = vpop.trf.xlu0
    %v529 = vpop.trf.xlu0
    %v530 = vpack.c.bf16 %v514, %v514
    %531 = vrot.lane.b32.xlu0 %v378, 120
    %v532 = vpop.permute.xlu0 %531
    %v534 = vsel %vm380, %v532, 0
    %v537 = vsel %vm384, %v530, 0
    %539 = vmatprep.subr.bf16.mxu0 0
    %540 = vmatpush1.bf16.msra.mxu0 %v537
    %541 = vmatprep.subr.bf16.mxu0 0
    %542 = vmatpush1.bf16.msra.mxu0 0
    %543 = vmatprep.subr.bf16.mxu0 0
    %544 = vmatpush1.bf16.msra.mxu0 0
    %545 = vmatprep.subr.bf16.mxu0 0
    %546 = vmatpush1.bf16.msra.mxu0 0
    %547 = vmatprep.subr.bf16.mxu0 0
    %548 = vmatpush1.bf16.msra.mxu0 0
    %549 = vmatprep.subr.bf16.mxu0 0
    %550 = vmatpush1.bf16.msra.mxu0 0
    %551 = vmatprep.subr.bf16.mxu0 0
    %552 = vmatpush1.bf16.msra.mxu0 0
    %553 = vmatprep.subr.bf16.mxu0 0
    %554 = vmatpush1.bf16.msra.mxu0 0
    %555 = vmatprep.subr.bf16.mxu0 0
    %556 = vmatpush1.bf16.msra.mxu0 0
    %557 = vmatprep.subr.bf16.mxu0 0
    %558 = vmatpush1.bf16.msra.mxu0 0
    %559 = vmatprep.subr.bf16.mxu0 0
    %560 = vmatpush1.bf16.msra.mxu0 0
    %561 = vmatprep.subr.bf16.mxu0 0
    %562 = vmatpush1.bf16.msra.mxu0 0
    %563 = vmatprep.subr.bf16.mxu0 0
    %564 = vmatpush1.bf16.msra.mxu0 0
    %565 = vmatprep.subr.bf16.mxu0 0
    %566 = vmatpush1.bf16.msra.mxu0 0
    %567 = vmatprep.subr.bf16.mxu0 0
    %568 = vmatpush1.bf16.msra.mxu0 0
    %569 = vmatprep.subr.bf16.mxu0 0
    %570 = vmatpush1.bf16.msra.mxu0 0
    %571 = vmatprep.mubr.bf16.mxu0 0
    %572 = vmatmul.mubr.bf16.gmra.mrb[0].mxu0 %v534
    %v573 = vpop.f32.mrb[0].mxu0
    %v574 = vadd.f32 0.0, %v573
    %v575 = vpop.f32.mrb[0].mxu0
    %v576 = vpop.f32.mrb[0].mxu0
    %v577 = vpop.f32.mrb[0].mxu0
    %578 = vdwg.mxu0
    %v579 = vmul.f32 %v574, 0.35355338
    %v580 = vadd.f32 %v579, %v432
    %v581 = vsel %vm380, %v580, -inf
    %582 = vmax.xlane.f32.xlu0 %v581
    %v583 = vpop.xlane.xlu0 %582
    %v584 = vsub.f32 %v580, %v583
    %v585 = vmul.f32 %v584, 1.442695
    %v586 = vpow.pop %v585
    %v587 = vsel %vm380, %v586, 0.0
    %588 = vadd.xlane.f32.xlu0 %v587
    %v589 = vpop.xlane.xlu0 %588
    %v590 = vrcp.pop %v589
    %v591 = vmul.f32 %v586, %v590
    %v592 = vpack.c.bf16 %v591, %v591
    %593 = vrot.lane.b32.xlu0 %v378, 56
    %v594 = vpop.permute.xlu0 %593
    %v596 = vsel %vm380, %v592, 0
    %v599 = vsel %vm384, %v594, 0
    %601 = vmatprep.subr.bf16.mxu0 0
    %602 = vmatpush1.bf16.msra.mxu0 %v599
    %603 = vmatprep.subr.bf16.mxu0 0
    %604 = vmatpush1.bf16.msra.mxu0 0
    %605 = vmatprep.subr.bf16.mxu0 0
    %606 = vmatpush1.bf16.msra.mxu0 0
    %607 = vmatprep.subr.bf16.mxu0 0
    %608 = vmatpush1.bf16.msra.mxu0 0
    %609 = vmatprep.subr.bf16.mxu0 0
    %610 = vmatpush1.bf16.msra.mxu0 0
    %611 = vmatprep.subr.bf16.mxu0 0
    %612 = vmatpush1.bf16.msra.mxu0 0
    %613 = vmatprep.subr.bf16.mxu0 0
    %614 = vmatpush1.bf16.msra.mxu0 0
    %615 = vmatprep.subr.bf16.mxu0 0
    %616 = vmatpush1.bf16.msra.mxu0 0
    %617 = vmatprep.subr.bf16.mxu0 0
    %618 = vmatpush1.bf16.msra.mxu0 0
    %619 = vmatprep.subr.bf16.mxu0 0
    %620 = vmatpush1.bf16.msra.mxu0 0
    %621 = vmatprep.subr.bf16.mxu0 0
    %622 = vmatpush1.bf16.msra.mxu0 0
    %623 = vmatprep.subr.bf16.mxu0 0
    %624 = vmatpush1.bf16.msra.mxu0 0
    %625 = vmatprep.subr.bf16.mxu0 0
    %626 = vmatpush1.bf16.msra.mxu0 0
    %627 = vmatprep.subr.bf16.mxu0 0
    %628 = vmatpush1.bf16.msra.mxu0 0
    %629 = vmatprep.subr.bf16.mxu0 0
    %630 = vmatpush1.bf16.msra.mxu0 0
    %631 = vmatprep.subr.bf16.mxu0 0
    %632 = vmatpush1.bf16.msra.mxu0 0
    %633 = vmatprep.mubr.bf16.mxu0 0
    %634 = vmatmul.mubr.bf16.gmra.mrb[0].mxu0 %v596
    %v635 = vpop.f32.mrb[0].mxu0
    %v636 = vadd.f32 0.0, %v635
    %v637 = vpop.f32.mrb[0].mxu0
    %v638 = vpop.f32.mrb[0].mxu0
    %v639 = vpop.f32.mrb[0].mxu0
    %640 = vdwg.mxu0
    %641 = vrot.lane.b32.xlu0 %v336, 80
    %v642 = vpop.permute.xlu0 %641
    %644 = vxpose.xlu0.b32.start [1/16] %v642, 128
    %645 = vxpose.xlu0.b32.cont [2/16] 0.0, 128
    %646 = vxpose.xlu0.b32.cont [3/16] 0.0, 128
    %647 = vxpose.xlu0.b32.cont [4/16] 0.0, 128
    %648 = vxpose.xlu0.b32.cont [5/16] 0.0, 128
    %649 = vxpose.xlu0.b32.cont [6/16] 0.0, 128
    %650 = vxpose.xlu0.b32.cont [7/16] 0.0, 128
    %651 = vxpose.xlu0.b32.cont [8/16] 0.0, 128
    %652 = vxpose.xlu0.b32.cont [9/16] 0.0, 128
    %653 = vxpose.xlu0.b32.cont [10/16] 0.0, 128
    %654 = vxpose.xlu0.b32.cont [11/16] 0.0, 128
    %655 = vxpose.xlu0.b32.cont [12/16] 0.0, 128
    %656 = vxpose.xlu0.b32.cont [13/16] 0.0, 128
    %657 = vxpose.xlu0.b32.cont [14/16] 0.0, 128
    %658 = vxpose.xlu0.b32.cont [15/16] 0.0, 128
    %659 = vxpose.xlu0.b32.end [16/16] 0.0, 128
    %v660 = vpop.trf.xlu0
    %v661 = vpop.trf.xlu0
    %v662 = vpop.trf.xlu0
    %v663 = vpop.trf.xlu0
    %v664 = vpop.trf.xlu0
    %v665 = vpop.trf.xlu0
    %v666 = vpop.trf.xlu0
    %v667 = vpop.trf.xlu0
    %v668 = vpop.trf.xlu0
    %v669 = vpop.trf.xlu0
    %v670 = vpop.trf.xlu0
    %v671 = vpop.trf.xlu0
    %v672 = vpop.trf.xlu0
    %v673 = vpop.trf.xlu0
    %v674 = vpop.trf.xlu0
    %v675 = vpop.trf.xlu0
    %v676 = vpack.c.bf16 %v660, %v660
    %677 = vrot.lane.b32.xlu0 %v378, 112
    %v678 = vpop.permute.xlu0 %677
    %v680 = vsel %vm380, %v678, 0
    %v683 = vsel %vm384, %v676, 0
    %685 = vmatprep.subr.bf16.mxu0 0
    %686 = vmatpush1.bf16.msra.mxu0 %v683
    %687 = vmatprep.subr.bf16.mxu0 0
    %688 = vmatpush1.bf16.msra.mxu0 0
    %689 = vmatprep.subr.bf16.mxu0 0
    %690 = vmatpush1.bf16.msra.mxu0 0
    %691 = vmatprep.subr.bf16.mxu0 0
    %692 = vmatpush1.bf16.msra.mxu0 0
    %693 = vmatprep.subr.bf16.mxu0 0
    %694 = vmatpush1.bf16.msra.mxu0 0
    %695 = vmatprep.subr.bf16.mxu0 0
    %696 = vmatpush1.bf16.msra.mxu0 0
    %697 = vmatprep.subr.bf16.mxu0 0
    %698 = vmatpush1.bf16.msra.mxu0 0
    %699 = vmatprep.subr.bf16.mxu0 0
    %700 = vmatpush1.bf16.msra.mxu0 0
    %701 = vmatprep.subr.bf16.mxu0 0
    %702 = vmatpush1.bf16.msra.mxu0 0
    %703 = vmatprep.subr.bf16.mxu0 0
    %704 = vmatpush1.bf16.msra.mxu0 0
    %705 = vmatprep.subr.bf16.mxu0 0
    %706 = vmatpush1.bf16.msra.mxu0 0
    %707 = vmatprep.subr.bf16.mxu0 0
    %708 = vmatpush1.bf16.msra.mxu0 0
    %709 = vmatprep.subr.bf16.mxu0 0
    %710 = vmatpush1.bf16.msra.mxu0 0
    %711 = vmatprep.subr.bf16.mxu0 0
    %712 = vmatpush1.bf16.msra.mxu0 0
    %713 = vmatprep.subr.bf16.mxu0 0
    %714 = vmatpush1.bf16.msra.mxu0 0
    %715 = vmatprep.subr.bf16.mxu0 0
    %716 = vmatpush1.bf16.msra.mxu0 0
    %717 = vmatprep.mubr.bf16.mxu0 0
    %718 = vmatmul.mubr.bf16.gmra.mrb[0].mxu0 %v680
    %v719 = vpop.f32.mrb[0].mxu0
    %v720 = vadd.f32 0.0, %v719
    %v721 = vpop.f32.mrb[0].mxu0
    %v722 = vpop.f32.mrb[0].mxu0
    %v723 = vpop.f32.mrb[0].mxu0
    %724 = vdwg.mxu0
    %v725 = vmul.f32 %v720, 0.35355338
    %v726 = vadd.f32 %v725, %v432
    %v727 = vsel %vm380, %v726, -inf
    %728 = vmax.xlane.f32.xlu0 %v727
    %v729 = vpop.xlane.xlu0 %728
    %v730 = vsub.f32 %v726, %v729
    %v731 = vmul.f32 %v730, 1.442695
    %v732 = vpow.pop %v731
    %v733 = vsel %vm380, %v732, 0.0
    %734 = vadd.xlane.f32.xlu0 %v733
    %v735 = vpop.xlane.xlu0 %734
    %v736 = vrcp.pop %v735
    %v737 = vmul.f32 %v732, %v736
    %v738 = vpack.c.bf16 %v737, %v737
    %739 = vrot.lane.b32.xlu0 %v378, 48
    %v740 = vpop.permute.xlu0 %739
    %v742 = vsel %vm380, %v738, 0
    %v745 = vsel %vm384, %v740, 0
    %747 = vmatprep.subr.bf16.mxu0 0
    %748 = vmatpush1.bf16.msra.mxu0 %v745
    %749 = vmatprep.subr.bf16.mxu0 0
    %750 = vmatpush1.bf16.msra.mxu0 0
    %751 = vmatprep.subr.bf16.mxu0 0
    %752 = vmatpush1.bf16.msra.mxu0 0
    %753 = vmatprep.subr.bf16.mxu0 0
    %754 = vmatpush1.bf16.msra.mxu0 0
    %755 = vmatprep.subr.bf16.mxu0 0
    %756 = vmatpush1.bf16.msra.mxu0 0
    %757 = vmatprep.subr.bf16.mxu0 0
    %758 = vmatpush1.bf16.msra.mxu0 0
    %759 = vmatprep.subr.bf16.mxu0 0
    %760 = vmatpush1.bf16.msra.mxu0 0
    %761 = vmatprep.subr.bf16.mxu0 0
    %762 = vmatpush1.bf16.msra.mxu0 0
    %763 = vmatprep.subr.bf16.mxu0 0
    %764 = vmatpush1.bf16.msra.mxu0 0
    %765 = vmatprep.subr.bf16.mxu0 0
    %766 = vmatpush1.bf16.msra.mxu0 0
    %767 = vmatprep.subr.bf16.mxu0 0
    %768 = vmatpush1.bf16.msra.mxu0 0
    %769 = vmatprep.subr.bf16.mxu0 0
    %770 = vmatpush1.bf16.msra.mxu0 0
    %771 = vmatprep.subr.bf16.mxu0 0
    %772 = vmatpush1.bf16.msra.mxu0 0
    %773 = vmatprep.subr.bf16.mxu0 0
    %774 = vmatpush1.bf16.msra.mxu0 0
    %775 = vmatprep.subr.bf16.mxu0 0
    %776 = vmatpush1.bf16.msra.mxu0 0
    %777 = vmatprep.subr.bf16.mxu0 0
    %778 = vmatpush1.bf16.msra.mxu0 0
    %779 = vmatprep.mubr.bf16.mxu0 0
    %780 = vmatmul.mubr.bf16.gmra.mrb[0].mxu0 %v742
    %v781 = vpop.f32.mrb[0].mxu0
    %v782 = vadd.f32 0.0, %v781
    %v783 = vpop.f32.mrb[0].mxu0
    %v784 = vpop.f32.mrb[0].mxu0
    %v785 = vpop.f32.mrb[0].mxu0
    %786 = vdwg.mxu0
    %787 = vrot.lane.b32.xlu0 %v336, 72
    %v788 = vpop.permute.xlu0 %787
    %790 = vxpose.xlu0.b32.start [1/16] %v788, 128
    %791 = vxpose.xlu0.b32.cont [2/16] 0.0, 128
    %792 = vxpose.xlu0.b32.cont [3/16] 0.0, 128
    %793 = vxpose.xlu0.b32.cont [4/16] 0.0, 128
    %794 = vxpose.xlu0.b32.cont [5/16] 0.0, 128
    %795 = vxpose.xlu0.b32.cont [6/16] 0.0, 128
    %796 = vxpose.xlu0.b32.cont [7/16] 0.0, 128
    %797 = vxpose.xlu0.b32.cont [8/16] 0.0, 128
    %798 = vxpose.xlu0.b32.cont [9/16] 0.0, 128
    %799 = vxpose.xlu0.b32.cont [10/16] 0.0, 128
    %800 = vxpose.xlu0.b32.cont [11/16] 0.0, 128
    %801 = vxpose.xlu0.b32.cont [12/16] 0.0, 128
    %802 = vxpose.xlu0.b32.cont [13/16] 0.0, 128
    %803 = vxpose.xlu0.b32.cont [14/16] 0.0, 128
    %804 = vxpose.xlu0.b32.cont [15/16] 0.0, 128
    %805 = vxpose.xlu0.b32.end [16/16] 0.0, 128
    %v806 = vpop.trf.xlu0
    %v807 = vpop.trf.xlu0
    %v808 = vpop.trf.xlu0
    %v809 = vpop.trf.xlu0
    %v810 = vpop.trf.xlu0
    %v811 = vpop.trf.xlu0
    %v812 = vpop.trf.xlu0
    %v813 = vpop.trf.xlu0
    %v814 = vpop.trf.xlu0
    %v815 = vpop.trf.xlu0
    %v816 = vpop.trf.xlu0
    %v817 = vpop.trf.xlu0
    %v818 = vpop.trf.xlu0
    %v819 = vpop.trf.xlu0
    %v820 = vpop.trf.xlu0
    %v821 = vpop.trf.xlu0
    %v822 = vpack.c.bf16 %v806, %v806
    %823 = vrot.lane.b32.xlu0 %v378, 104
    %v824 = vpop.permute.xlu0 %823
    %v826 = vsel %vm380, %v824, 0
    %v829 = vsel %vm384, %v822, 0
    %831 = vmatprep.subr.bf16.mxu0 0
    %832 = vmatpush1.bf16.msra.mxu0 %v829
    %833 = vmatprep.subr.bf16.mxu0 0
    %834 = vmatpush1.bf16.msra.mxu0 0
    %835 = vmatprep.subr.bf16.mxu0 0
    %836 = vmatpush1.bf16.msra.mxu0 0
    %837 = vmatprep.subr.bf16.mxu0 0
    %838 = vmatpush1.bf16.msra.mxu0 0
    %839 = vmatprep.subr.bf16.mxu0 0
    %840 = vmatpush1.bf16.msra.mxu0 0
    %841 = vmatprep.subr.bf16.mxu0 0
    %842 = vmatpush1.bf16.msra.mxu0 0
    %843 = vmatprep.subr.bf16.mxu0 0
    %844 = vmatpush1.bf16.msra.mxu0 0
    %845 = vmatprep.subr.bf16.mxu0 0
    %846 = vmatpush1.bf16.msra.mxu0 0
    %847 = vmatprep.subr.bf16.mxu0 0
    %848 = vmatpush1.bf16.msra.mxu0 0
    %849 = vmatprep.subr.bf16.mxu0 0
    %850 = vmatpush1.bf16.msra.mxu0 0
    %851 = vmatprep.subr.bf16.mxu0 0
    %852 = vmatpush1.bf16.msra.mxu0 0
    %853 = vmatprep.subr.bf16.mxu0 0
    %854 = vmatpush1.bf16.msra.mxu0 0
    %855 = vmatprep.subr.bf16.mxu0 0
    %856 = vmatpush1.bf16.msra.mxu0 0
    %857 = vmatprep.subr.bf16.mxu0 0
    %858 = vmatpush1.bf16.msra.mxu0 0
    %859 = vmatprep.subr.bf16.mxu0 0
    %860 = vmatpush1.bf16.msra.mxu0 0
    %861 = vmatprep.subr.bf16.mxu0 0
    %862 = vmatpush1.bf16.msra.mxu0 0
    %863 = vmatprep.mubr.bf16.mxu0 0
    %864 = vmatmul.mubr.bf16.gmra.mrb[0].mxu0 %v826
    %v865 = vpop.f32.mrb[0].mxu0
    %v866 = vadd.f32 0.0, %v865
    %v867 = vpop.f32.mrb[0].mxu0
    %v868 = vpop.f32.mrb[0].mxu0
    %v869 = vpop.f32.mrb[0].mxu0
    %870 = vdwg.mxu0
    %v871 = vmul.f32 %v866, 0.35355338
    %v872 = vadd.f32 %v871, %v432
    %v873 = vsel %vm380, %v872, -inf
    %874 = vmax.xlane.f32.xlu0 %v873
    %v875 = vpop.xlane.xlu0 %874
    %v876 = vsub.f32 %v872, %v875
    %v877 = vmul.f32 %v876, 1.442695
    %v878 = vpow.pop %v877
    %v879 = vsel %vm380, %v878, 0.0
    %880 = vadd.xlane.f32.xlu0 %v879
    %v881 = vpop.xlane.xlu0 %880
    %v882 = vrcp.pop %v881
    %v883 = vmul.f32 %v878, %v882
    %v884 = vpack.c.bf16 %v883, %v883
    %885 = vrot.lane.b32.xlu0 %v378, 40
    %v886 = vpop.permute.xlu0 %885
    %v888 = vsel %vm380, %v884, 0
    %v891 = vsel %vm384, %v886, 0
    %893 = vmatprep.subr.bf16.mxu0 0
    %894 = vmatpush1.bf16.msra.mxu0 %v891
    %895 = vmatprep.subr.bf16.mxu0 0
    %896 = vmatpush1.bf16.msra.mxu0 0
    %897 = vmatprep.subr.bf16.mxu0 0
    %898 = vmatpush1.bf16.msra.mxu0 0
    %899 = vmatprep.subr.bf16.mxu0 0
    %900 = vmatpush1.bf16.msra.mxu0 0
    %901 = vmatprep.subr.bf16.mxu0 0
    %902 = vmatpush1.bf16.msra.mxu0 0
    %903 = vmatprep.subr.bf16.mxu0 0
    %904 = vmatpush1.bf16.msra.mxu0 0
    %905 = vmatprep.subr.bf16.mxu0 0
    %906 = vmatpush1.bf16.msra.mxu0 0
    %907 = vmatprep.subr.bf16.mxu0 0
    %908 = vmatpush1.bf16.msra.mxu0 0
    %909 = vmatprep.subr.bf16.mxu0 0
    %910 = vmatpush1.bf16.msra.mxu0 0
    %911 = vmatprep.subr.bf16.mxu0 0
    %912 = vmatpush1.bf16.msra.mxu0 0
    %913 = vmatprep.subr.bf16.mxu0 0
    %914 = vmatpush1.bf16.msra.mxu0 0
    %915 = vmatprep.subr.bf16.mxu0 0
    %916 = vmatpush1.bf16.msra.mxu0 0
    %917 = vmatprep.subr.bf16.mxu0 0
    %918 = vmatpush1.bf16.msra.mxu0 0
    %919 = vmatprep.subr.bf16.mxu0 0
    %920 = vmatpush1.bf16.msra.mxu0 0
    %921 = vmatprep.subr.bf16.mxu0 0
    %922 = vmatpush1.bf16.msra.mxu0 0
    %923 = vmatprep.subr.bf16.mxu0 0
    %924 = vmatpush1.bf16.msra.mxu0 0
    %925 = vmatprep.mubr.bf16.mxu0 0
    %926 = vmatmul.mubr.bf16.gmra.mrb[0].mxu0 %v888
    %v927 = vpop.f32.mrb[0].mxu0
    %v928 = vadd.f32 0.0, %v927
    %v929 = vpop.f32.mrb[0].mxu0
    %v930 = vpop.f32.mrb[0].mxu0
    %v931 = vpop.f32.mrb[0].mxu0
    %932 = vdwg.mxu0
    %934 = vrot.lane.b32.xlu0 %v636, 8
    %v935 = vpop.permute.xlu0 %934
    %938 = vrot.lane.b32.xlu0 %v782, 16
    %v939 = vpop.permute.xlu0 %938
    %942 = vrot.lane.b32.xlu0 %v928, 24
    %v943 = vpop.permute.xlu0 %942
    %v945 = vsel %vm380, %v490, %v935
    %vm946 = vcmask 130048
    %v947 = vsel %vm946, %v945, %v939
    %vm948 = vcmask 195584
    %v949 = vsel %vm948, %v947, %v943
    %951 = vrot.lane.b32.xlu0 %v339, 96
    %v952 = vpop.permute.xlu0 %951
    %954 = vxpose.xlu0.b32.start [1/16] %v952, 128
    %955 = vxpose.xlu0.b32.cont [2/16] 0.0, 128
    %956 = vxpose.xlu0.b32.cont [3/16] 0.0, 128
    %957 = vxpose.xlu0.b32.cont [4/16] 0.0, 128
    %958 = vxpose.xlu0.b32.cont [5/16] 0.0, 128
    %959 = vxpose.xlu0.b32.cont [6/16] 0.0, 128
    %960 = vxpose.xlu0.b32.cont [7/16] 0.0, 128
    %961 = vxpose.xlu0.b32.cont [8/16] 0.0, 128
    %962 = vxpose.xlu0.b32.cont [9/16] 0.0, 128
    %963 = vxpose.xlu0.b32.cont [10/16] 0.0, 128
    %964 = vxpose.xlu0.b32.cont [11/16] 0.0, 128
    %965 = vxpose.xlu0.b32.cont [12/16] 0.0, 128
    %966 = vxpose.xlu0.b32.cont [13/16] 0.0, 128
    %967 = vxpose.xlu0.b32.cont [14/16] 0.0, 128
    %968 = vxpose.xlu0.b32.cont [15/16] 0.0, 128
    %969 = vxpose.xlu0.b32.end [16/16] 0.0, 128
    %v970 = vpop.trf.xlu0
    %v971 = vpop.trf.xlu0
    %v972 = vpop.trf.xlu0
    %v973 = vpop.trf.xlu0
    %v974 = vpop.trf.xlu0
    %v975 = vpop.trf.xlu0
    %v976 = vpop.trf.xlu0
    %v977 = vpop.trf.xlu0
    %v978 = vpop.trf.xlu0
    %v979 = vpop.trf.xlu0
    %v980 = vpop.trf.xlu0
    %v981 = vpop.trf.xlu0
    %v982 = vpop.trf.xlu0
    %v983 = vpop.trf.xlu0
    %v984 = vpop.trf.xlu0
    %v985 = vpop.trf.xlu0
    %v986 = vpack.c.bf16 %v339, %v339
    %v987 = vpack.c.bf16 %v970, %v970
    %v989 = vsel %vm380, %v986, 0
    %v992 = vsel %vm384, %v987, 0
    %994 = vmatprep.subr.bf16.mxu0 0
    %995 = vmatpush1.bf16.msra.mxu0 %v992
    %996 = vmatprep.subr.bf16.mxu0 0
    %997 = vmatpush1.bf16.msra.mxu0 0
    %998 = vmatprep.subr.bf16.mxu0 0
    %999 = vmatpush1.bf16.msra.mxu0 0
    %1000 = vmatprep.subr.bf16.mxu0 0
    %1001 = vmatpush1.bf16.msra.mxu0 0
    %1002 = vmatprep.subr.bf16.mxu0 0
    %1003 = vmatpush1.bf16.msra.mxu0 0
    %1004 = vmatprep.subr.bf16.mxu0 0
    %1005 = vmatpush1.bf16.msra.mxu0 0
    %1006 = vmatprep.subr.bf16.mxu0 0
    %1007 = vmatpush1.bf16.msra.mxu0 0
    %1008 = vmatprep.subr.bf16.mxu0 0
    %1009 = vmatpush1.bf16.msra.mxu0 0
    %1010 = vmatprep.subr.bf16.mxu0 0
    %1011 = vmatpush1.bf16.msra.mxu0 0
    %1012 = vmatprep.subr.bf16.mxu0 0
    %1013 = vmatpush1.bf16.msra.mxu0 0
    %1014 = vmatprep.subr.bf16.mxu0 0
    %1015 = vmatpush1.bf16.msra.mxu0 0
    %1016 = vmatprep.subr.bf16.mxu0 0
    %1017 = vmatpush1.bf16.msra.mxu0 0
    %1018 = vmatprep.subr.bf16.mxu0 0
    %1019 = vmatpush1.bf16.msra.mxu0 0
    %1020 = vmatprep.subr.bf16.mxu0 0
    %1021 = vmatpush1.bf16.msra.mxu0 0
    %1022 = vmatprep.subr.bf16.mxu0 0
    %1023 = vmatpush1.bf16.msra.mxu0 0
    %1024 = vmatprep.subr.bf16.mxu0 0
    %1025 = vmatpush1.bf16.msra.mxu0 0
    %1026 = vmatprep.mubr.bf16.mxu0 0
    %1027 = vmatmul.mubr.bf16.gmra.mrb[0].mxu0 %v989
    %v1028 = vpop.f32.mrb[0].mxu0
    %v1029 = vadd.f32 0.0, %v1028
    %v1030 = vpop.f32.mrb[0].mxu0
    %v1031 = vpop.f32.mrb[0].mxu0
    %v1032 = vpop.f32.mrb[0].mxu0
    %1033 = vdwg.mxu0
    %v1034 = vmul.f32 %v1029, 0.35355338
    %v1035 = vlaneseq
    %v1036 = vshrl.u32 %v1035, 7
    %v1037 = vsub.s32 1, %v1036
    %v1038 = vrot.slane %v283, %v1037
    %v1039 = vadd.f32 %v1034, %v1038
    %v1040 = vsel %vm380, %v1039, -inf
    %1041 = vmax.xlane.f32.xlu0 %v1040
    %v1042 = vpop.xlane.xlu0 %1041
    %v1043 = vsub.f32 %v1039, %v1042
    %v1044 = vmul.f32 %v1043, 1.442695
    %v1045 = vpow.pop %v1044
    %v1046 = vsel %vm380, %v1045, 0.0
    %1047 = vadd.xlane.f32.xlu0 %v1046
    %v1048 = vpop.xlane.xlu0 %1047
    %v1049 = vrcp.pop %v1048
    %v1050 = vmul.f32 %v1045, %v1049
    %v1051 = vpack.c.bf16 %v1050, %v1050
    %1053 = vrot.lane.b32.xlu0 %v986, 64
    %v1054 = vpop.permute.xlu0 %1053
    %v1056 = vsel %vm380, %v1051, 0
    %v1059 = vsel %vm384, %v1054, 0
    %1061 = vmatprep.subr.bf16.mxu0 0
    %1062 = vmatpush1.bf16.msra.mxu0 %v1059
    %1063 = vmatprep.subr.bf16.mxu0 0
    %1064 = vmatpush1.bf16.msra.mxu0 0
    %1065 = vmatprep.subr.bf16.mxu0 0
    %1066 = vmatpush1.bf16.msra.mxu0 0
    %1067 = vmatprep.subr.bf16.mxu0 0
    %1068 = vmatpush1.bf16.msra.mxu0 0
    %1069 = vmatprep.subr.bf16.mxu0 0
    %1070 = vmatpush1.bf16.msra.mxu0 0
    %1071 = vmatprep.subr.bf16.mxu0 0
    %1072 = vmatpush1.bf16.msra.mxu0 0
    %1073 = vmatprep.subr.bf16.mxu0 0
    %1074 = vmatpush1.bf16.msra.mxu0 0
    %1075 = vmatprep.subr.bf16.mxu0 0
    %1076 = vmatpush1.bf16.msra.mxu0 0
    %1077 = vmatprep.subr.bf16.mxu0 0
    %1078 = vmatpush1.bf16.msra.mxu0 0
    %1079 = vmatprep.subr.bf16.mxu0 0
    %1080 = vmatpush1.bf16.msra.mxu0 0
    %1081 = vmatprep.subr.bf16.mxu0 0
    %1082 = vmatpush1.bf16.msra.mxu0 0
    %1083 = vmatprep.subr.bf16.mxu0 0
    %1084 = vmatpush1.bf16.msra.mxu0 0
    %1085 = vmatprep.subr.bf16.mxu0 0
    %1086 = vmatpush1.bf16.msra.mxu0 0
    %1087 = vmatprep.subr.bf16.mxu0 0
    %1088 = vmatpush1.bf16.msra.mxu0 0
    %1089 = vmatprep.subr.bf16.mxu0 0
    %1090 = vmatpush1.bf16.msra.mxu0 0
    %1091 = vmatprep.subr.bf16.mxu0 0
    %1092 = vmatpush1.bf16.msra.mxu0 0
    %1093 = vmatprep.mubr.bf16.mxu0 0
    %1094 = vmatmul.mubr.bf16.gmra.mrb[0].mxu0 %v1056
    %v1095 = vpop.f32.mrb[0].mxu0
    %v1096 = vadd.f32 0.0, %v1095
    %v1097 = vpop.f32.mrb[0].mxu0
    %v1098 = vpop.f32.mrb[0].mxu0
    %v1099 = vpop.f32.mrb[0].mxu0
    %1100 = vdwg.mxu0
    %1101 = vrot.lane.b32.xlu0 %v339, 88
    %v1102 = vpop.permute.xlu0 %1101
    %1104 = vxpose.xlu0.b32.start [1/16] %v1102, 128
    %1105 = vxpose.xlu0.b32.cont [2/16] 0.0, 128
    %1106 = vxpose.xlu0.b32.cont [3/16] 0.0, 128
    %1107 = vxpose.xlu0.b32.cont [4/16] 0.0, 128
    %1108 = vxpose.xlu0.b32.cont [5/16] 0.0, 128
    %1109 = vxpose.xlu0.b32.cont [6/16] 0.0, 128
    %1110 = vxpose.xlu0.b32.cont [7/16] 0.0, 128
    %1111 = vxpose.xlu0.b32.cont [8/16] 0.0, 128
    %1112 = vxpose.xlu0.b32.cont [9/16] 0.0, 128
    %1113 = vxpose.xlu0.b32.cont [10/16] 0.0, 128
    %1114 = vxpose.xlu0.b32.cont [11/16] 0.0, 128
    %1115 = vxpose.xlu0.b32.cont [12/16] 0.0, 128
    %1116 = vxpose.xlu0.b32.cont [13/16] 0.0, 128
    %1117 = vxpose.xlu0.b32.cont [14/16] 0.0, 128
    %1118 = vxpose.xlu0.b32.cont [15/16] 0.0, 128
    %1119 = vxpose.xlu0.b32.end [16/16] 0.0, 128
    %v1120 = vpop.trf.xlu0
    %v1121 = vpop.trf.xlu0
    %v1122 = vpop.trf.xlu0
    %v1123 = vpop.trf.xlu0
    %v1124 = vpop.trf.xlu0
    %v1125 = vpop.trf.xlu0
    %v1126 = vpop.trf.xlu0
    %v1127 = vpop.trf.xlu0
    %v1128 = vpop.trf.xlu0
    %v1129 = vpop.trf.xlu0
    %v1130 = vpop.trf.xlu0
    %v1131 = vpop.trf.xlu0
    %v1132 = vpop.trf.xlu0
    %v1133 = vpop.trf.xlu0
    %v1134 = vpop.trf.xlu0
    %v1135 = vpop.trf.xlu0
    %v1136 = vpack.c.bf16 %v1120, %v1120
    %1137 = vrot.lane.b32.xlu0 %v986, 120
    %v1138 = vpop.permute.xlu0 %1137
    %v1140 = vsel %vm380, %v1138, 0
    %v1143 = vsel %vm384, %v1136, 0
    %1145 = vmatprep.subr.bf16.mxu0 0
    %1146 = vmatpush1.bf16.msra.mxu0 %v1143
    %1147 = vmatprep.subr.bf16.mxu0 0
    %1148 = vmatpush1.bf16.msra.mxu0 0
    %1149 = vmatprep.subr.bf16.mxu0 0
    %1150 = vmatpush1.bf16.msra.mxu0 0
    %1151 = vmatprep.subr.bf16.mxu0 0
    %1152 = vmatpush1.bf16.msra.mxu0 0
    %1153 = vmatprep.subr.bf16.mxu0 0
    %1154 = vmatpush1.bf16.msra.mxu0 0
    %1155 = vmatprep.subr.bf16.mxu0 0
    %1156 = vmatpush1.bf16.msra.mxu0 0
    %1157 = vmatprep.subr.bf16.mxu0 0
    %1158 = vmatpush1.bf16.msra.mxu0 0
    %1159 = vmatprep.subr.bf16.mxu0 0
    %1160 = vmatpush1.bf16.msra.mxu0 0
    %1161 = vmatprep.subr.bf16.mxu0 0
    %1162 = vmatpush1.bf16.msra.mxu0 0
    %1163 = vmatprep.subr.bf16.mxu0 0
    %1164 = vmatpush1.bf16.msra.mxu0 0
    %1165 = vmatprep.subr.bf16.mxu0 0
    %1166 = vmatpush1.bf16.msra.mxu0 0
    %1167 = vmatprep.subr.bf16.mxu0 0
    %1168 = vmatpush1.bf16.msra.mxu0 0
    %1169 = vmatprep.subr.bf16.mxu0 0
    %1170 = vmatpush1.bf16.msra.mxu0 0
    %1171 = vmatprep.subr.bf16.mxu0 0
    %1172 = vmatpush1.bf16.msra.mxu0 0
    %1173 = vmatprep.subr.bf16.mxu0 0
    %1174 = vmatpush1.bf16.msra.mxu0 0
    %1175 = vmatprep.subr.bf16.mxu0 0
    %1176 = vmatpush1.bf16.msra.mxu0 0
    %1177 = vmatprep.mubr.bf16.mxu0 0
    %1178 = vmatmul.mubr.bf16.gmra.mrb[0].mxu0 %v1140
    %v1179 = vpop.f32.mrb[0].mxu0
    %v1180 = vadd.f32 0.0, %v1179
    %v1181 = vpop.f32.mrb[0].mxu0
    %v1182 = vpop.f32.mrb[0].mxu0
    %v1183 = vpop.f32.mrb[0].mxu0
    %1184 = vdwg.mxu0
    %v1185 = vmul.f32 %v1180, 0.35355338
    %v1186 = vadd.f32 %v1185, %v1038
    %v1187 = vsel %vm380, %v1186, -inf
    %1188 = vmax.xlane.f32.xlu0 %v1187
    %v1189 = vpop.xlane.xlu0 %1188
    %v1190 = vsub.f32 %v1186, %v1189
    %v1191 = vmul.f32 %v1190, 1.442695
    %v1192 = vpow.pop %v1191
    %v1193 = vsel %vm380, %v1192, 0.0
    %1194 = vadd.xlane.f32.xlu0 %v1193
    %v1195 = vpop.xlane.xlu0 %1194
    %v1196 = vrcp.pop %v1195
    %v1197 = vmul.f32 %v1192, %v1196
    %v1198 = vpack.c.bf16 %v1197, %v1197
    %1199 = vrot.lane.b32.xlu0 %v986, 56
    %v1200 = vpop.permute.xlu0 %1199
    %v1202 = vsel %vm380, %v1198, 0
    %v1205 = vsel %vm384, %v1200, 0
    %1207 = vmatprep.subr.bf16.mxu0 0
    %1208 = vmatpush1.bf16.msra.mxu0 %v1205
    %1209 = vmatprep.subr.bf16.mxu0 0
    %1210 = vmatpush1.bf16.msra.mxu0 0
    %1211 = vmatprep.subr.bf16.mxu0 0
    %1212 = vmatpush1.bf16.msra.mxu0 0
    %1213 = vmatprep.subr.bf16.mxu0 0
    %1214 = vmatpush1.bf16.msra.mxu0 0
    %1215 = vmatprep.subr.bf16.mxu0 0
    %1216 = vmatpush1.bf16.msra.mxu0 0
    %1217 = vmatprep.subr.bf16.mxu0 0
    %1218 = vmatpush1.bf16.msra.mxu0 0
    %1219 = vmatprep.subr.bf16.mxu0 0
    %1220 = vmatpush1.bf16.msra.mxu0 0
    %1221 = vmatprep.subr.bf16.mxu0 0
    %1222 = vmatpush1.bf16.msra.mxu0 0
    %1223 = vmatprep.subr.bf16.mxu0 0
    %1224 = vmatpush1.bf16.msra.mxu0 0
    %1225 = vmatprep.subr.bf16.mxu0 0
    %1226 = vmatpush1.bf16.msra.mxu0 0
    %1227 = vmatprep.subr.bf16.mxu0 0
    %1228 = vmatpush1.bf16.msra.mxu0 0
    %1229 = vmatprep.subr.bf16.mxu0 0
    %1230 = vmatpush1.bf16.msra.mxu0 0
    %1231 = vmatprep.subr.bf16.mxu0 0
    %1232 = vmatpush1.bf16.msra.mxu0 0
    %1233 = vmatprep.subr.bf16.mxu0 0
    %1234 = vmatpush1.bf16.msra.mxu0 0
    %1235 = vmatprep.subr.bf16.mxu0 0
    %1236 = vmatpush1.bf16.msra.mxu0 0
    %1237 = vmatprep.subr.bf16.mxu0 0
    %1238 = vmatpush1.bf16.msra.mxu0 0
    %1239 = vmatprep.mubr.bf16.mxu0 0
    %1240 = vmatmul.mubr.bf16.gmra.mrb[0].mxu0 %v1202
    %v1241 = vpop.f32.mrb[0].mxu0
    %v1242 = vadd.f32 0.0, %v1241
    %v1243 = vpop.f32.mrb[0].mxu0
    %v1244 = vpop.f32.mrb[0].mxu0
    %v1245 = vpop.f32.mrb[0].mxu0
    %1246 = vdwg.mxu0
    %1247 = vrot.lane.b32.xlu0 %v339, 80
    %v1248 = vpop.permute.xlu0 %1247
    %1250 = vxpose.xlu0.b32.start [1/16] %v1248, 128
    %1251 = vxpose.xlu0.b32.cont [2/16] 0.0, 128
    %1252 = vxpose.xlu0.b32.cont [3/16] 0.0, 128
    %1253 = vxpose.xlu0.b32.cont [4/16] 0.0, 128
    %1254 = vxpose.xlu0.b32.cont [5/16] 0.0, 128
    %1255 = vxpose.xlu0.b32.cont [6/16] 0.0, 128
    %1256 = vxpose.xlu0.b32.cont [7/16] 0.0, 128
    %1257 = vxpose.xlu0.b32.cont [8/16] 0.0, 128
    %1258 = vxpose.xlu0.b32.cont [9/16] 0.0, 128
    %1259 = vxpose.xlu0.b32.cont [10/16] 0.0, 128
    %1260 = vxpose.xlu0.b32.cont [11/16] 0.0, 128
    %1261 = vxpose.xlu0.b32.cont [12/16] 0.0, 128
    %1262 = vxpose.xlu0.b32.cont [13/16] 0.0, 128
    %1263 = vxpose.xlu0.b32.cont [14/16] 0.0, 128
    %1264 = vxpose.xlu0.b32.cont [15/16] 0.0, 128
    %1265 = vxpose.xlu0.b32.end [16/16] 0.0, 128
    %v1266 = vpop.trf.xlu0
    %v1267 = vpop.trf.xlu0
    %v1268 = vpop.trf.xlu0
    %v1269 = vpop.trf.xlu0
    %v1270 = vpop.trf.xlu0
    %v1271 = vpop.trf.xlu0
    %v1272 = vpop.trf.xlu0
    %v1273 = vpop.trf.xlu0
    %v1274 = vpop.trf.xlu0
    %v1275 = vpop.trf.xlu0
    %v1276 = vpop.trf.xlu0
    %v1277 = vpop.trf.xlu0
    %v1278 = vpop.trf.xlu0
    %v1279 = vpop.trf.xlu0
    %v1280 = vpop.trf.xlu0
    %v1281 = vpop.trf.xlu0
    %v1282 = vpack.c.bf16 %v1266, %v1266
    %1283 = vrot.lane.b32.xlu0 %v986, 112
    %v1284 = vpop.permute.xlu0 %1283
    %v1286 = vsel %vm380, %v1284, 0
    %v1289 = vsel %vm384, %v1282, 0
    %1291 = vmatprep.subr.bf16.mxu0 0
    %1292 = vmatpush1.bf16.msra.mxu0 %v1289
    %1293 = vmatprep.subr.bf16.mxu0 0
    %1294 = vmatpush1.bf16.msra.mxu0 0
    %1295 = vmatprep.subr.bf16.mxu0 0
    %1296 = vmatpush1.bf16.msra.mxu0 0
    %1297 = vmatprep.subr.bf16.mxu0 0
    %1298 = vmatpush1.bf16.msra.mxu0 0
    %1299 = vmatprep.subr.bf16.mxu0 0
    %1300 = vmatpush1.bf16.msra.mxu0 0
    %1301 = vmatprep.subr.bf16.mxu0 0
    %1302 = vmatpush1.bf16.msra.mxu0 0
    %1303 = vmatprep.subr.bf16.mxu0 0
    %1304 = vmatpush1.bf16.msra.mxu0 0
    %1305 = vmatprep.subr.bf16.mxu0 0
    %1306 = vmatpush1.bf16.msra.mxu0 0
    %1307 = vmatprep.subr.bf16.mxu0 0
    %1308 = vmatpush1.bf16.msra.mxu0 0
    %1309 = vmatprep.subr.bf16.mxu0 0
    %1310 = vmatpush1.bf16.msra.mxu0 0
    %1311 = vmatprep.subr.bf16.mxu0 0
    %1312 = vmatpush1.bf16.msra.mxu0 0
    %1313 = vmatprep.subr.bf16.mxu0 0
    %1314 = vmatpush1.bf16.msra.mxu0 0
    %1315 = vmatprep.subr.bf16.mxu0 0
    %1316 = vmatpush1.bf16.msra.mxu0 0
    %1317 = vmatprep.subr.bf16.mxu0 0
    %1318 = vmatpush1.bf16.msra.mxu0 0
    %1319 = vmatprep.subr.bf16.mxu0 0
    %1320 = vmatpush1.bf16.msra.mxu0 0
    %1321 = vmatprep.subr.bf16.mxu0 0
    %1322 = vmatpush1.bf16.msra.mxu0 0
    %1323 = vmatprep.mubr.bf16.mxu0 0
    %1324 = vmatmul.mubr.bf16.gmra.mrb[0].mxu0 %v1286
    %v1325 = vpop.f32.mrb[0].mxu0
    %v1326 = vadd.f32 0.0, %v1325
    %v1327 = vpop.f32.mrb[0].mxu0
    %v1328 = vpop.f32.mrb[0].mxu0
    %v1329 = vpop.f32.mrb[0].mxu0
    %1330 = vdwg.mxu0
    %v1331 = vmul.f32 %v1326, 0.35355338
    %v1332 = vadd.f32 %v1331, %v1038
    %v1333 = vsel %vm380, %v1332, -inf
    %1334 = vmax.xlane.f32.xlu0 %v1333
    %v1335 = vpop.xlane.xlu0 %1334
    %v1336 = vsub.f32 %v1332, %v1335
    %v1337 = vmul.f32 %v1336, 1.442695
    %v1338 = vpow.pop %v1337
    %v1339 = vsel %vm380, %v1338, 0.0
    %1340 = vadd.xlane.f32.xlu0 %v1339
    %v1341 = vpop.xlane.xlu0 %1340
    %v1342 = vrcp.pop %v1341
    %v1343 = vmul.f32 %v1338, %v1342
    %v1344 = vpack.c.bf16 %v1343, %v1343
    %1345 = vrot.lane.b32.xlu0 %v986, 48
    %v1346 = vpop.permute.xlu0 %1345
    %v1348 = vsel %vm380, %v1344, 0
    %v1351 = vsel %vm384, %v1346, 0
    %1353 = vmatprep.subr.bf16.mxu0 0
    %1354 = vmatpush1.bf16.msra.mxu0 %v1351
    %1355 = vmatprep.subr.bf16.mxu0 0
    %1356 = vmatpush1.bf16.msra.mxu0 0
    %1357 = vmatprep.subr.bf16.mxu0 0
    %1358 = vmatpush1.bf16.msra.mxu0 0
    %1359 = vmatprep.subr.bf16.mxu0 0
    %1360 = vmatpush1.bf16.msra.mxu0 0
    %1361 = vmatprep.subr.bf16.mxu0 0
    %1362 = vmatpush1.bf16.msra.mxu0 0
    %1363 = vmatprep.subr.bf16.mxu0 0
    %1364 = vmatpush1.bf16.msra.mxu0 0
    %1365 = vmatprep.subr.bf16.mxu0 0
    %1366 = vmatpush1.bf16.msra.mxu0 0
    %1367 = vmatprep.subr.bf16.mxu0 0
    %1368 = vmatpush1.bf16.msra.mxu0 0
    %1369 = vmatprep.subr.bf16.mxu0 0
    %1370 = vmatpush1.bf16.msra.mxu0 0
    %1371 = vmatprep.subr.bf16.mxu0 0
    %1372 = vmatpush1.bf16.msra.mxu0 0
    %1373 = vmatprep.subr.bf16.mxu0 0
    %1374 = vmatpush1.bf16.msra.mxu0 0
    %1375 = vmatprep.subr.bf16.mxu0 0
    %1376 = vmatpush1.bf16.msra.mxu0 0
    %1377 = vmatprep.subr.bf16.mxu0 0
    %1378 = vmatpush1.bf16.msra.mxu0 0
    %1379 = vmatprep.subr.bf16.mxu0 0
    %1380 = vmatpush1.bf16.msra.mxu0 0
    %1381 = vmatprep.subr.bf16.mxu0 0
    %1382 = vmatpush1.bf16.msra.mxu0 0
    %1383 = vmatprep.subr.bf16.mxu0 0
    %1384 = vmatpush1.bf16.msra.mxu0 0
    %1385 = vmatprep.mubr.bf16.mxu0 0
    %1386 = vmatmul.mubr.bf16.gmra.mrb[0].mxu0 %v1348
    %v1387 = vpop.f32.mrb[0].mxu0
    %v1388 = vadd.f32 0.0, %v1387
    %v1389 = vpop.f32.mrb[0].mxu0
    %v1390 = vpop.f32.mrb[0].mxu0
    %v1391 = vpop.f32.mrb[0].mxu0
    %1392 = vdwg.mxu0
    %1393 = vrot.lane.b32.xlu0 %v339, 72
    %v1394 = vpop.permute.xlu0 %1393
    %1396 = vxpose.xlu0.b32.start [1/16] %v1394, 128
    %1397 = vxpose.xlu0.b32.cont [2/16] 0.0, 128
    %1398 = vxpose.xlu0.b32.cont [3/16] 0.0, 128
    %1399 = vxpose.xlu0.b32.cont [4/16] 0.0, 128
    %1400 = vxpose.xlu0.b32.cont [5/16] 0.0, 128
    %1401 = vxpose.xlu0.b32.cont [6/16] 0.0, 128
    %1402 = vxpose.xlu0.b32.cont [7/16] 0.0, 128
    %1403 = vxpose.xlu0.b32.cont [8/16] 0.0, 128
    %1404 = vxpose.xlu0.b32.cont [9/16] 0.0, 128
    %1405 = vxpose.xlu0.b32.cont [10/16] 0.0, 128
    %1406 = vxpose.xlu0.b32.cont [11/16] 0.0, 128
    %1407 = vxpose.xlu0.b32.cont [12/16] 0.0, 128
    %1408 = vxpose.xlu0.b32.cont [13/16] 0.0, 128
    %1409 = vxpose.xlu0.b32.cont [14/16] 0.0, 128
    %1410 = vxpose.xlu0.b32.cont [15/16] 0.0, 128
    %1411 = vxpose.xlu0.b32.end [16/16] 0.0, 128
    %v1412 = vpop.trf.xlu0
    %v1413 = vpop.trf.xlu0
    %v1414 = vpop.trf.xlu0
    %v1415 = vpop.trf.xlu0
    %v1416 = vpop.trf.xlu0
    %v1417 = vpop.trf.xlu0
    %v1418 = vpop.trf.xlu0
    %v1419 = vpop.trf.xlu0
    %v1420 = vpop.trf.xlu0
    %v1421 = vpop.trf.xlu0
    %v1422 = vpop.trf.xlu0
    %v1423 = vpop.trf.xlu0
    %v1424 = vpop.trf.xlu0
    %v1425 = vpop.trf.xlu0
    %v1426 = vpop.trf.xlu0
    %v1427 = vpop.trf.xlu0
    %v1428 = vpack.c.bf16 %v1412, %v1412
    %1429 = vrot.lane.b32.xlu0 %v986, 104
    %v1430 = vpop.permute.xlu0 %1429
    %v1432 = vsel %vm380, %v1430, 0
    %v1435 = vsel %vm384, %v1428, 0
    %1437 = vmatprep.subr.bf16.mxu0 0
    %1438 = vmatpush1.bf16.msra.mxu0 %v1435
    %1439 = vmatprep.subr.bf16.mxu0 0
    %1440 = vmatpush1.bf16.msra.mxu0 0
    %1441 = vmatprep.subr.bf16.mxu0 0
    %1442 = vmatpush1.bf16.msra.mxu0 0
    %1443 = vmatprep.subr.bf16.mxu0 0
    %1444 = vmatpush1.bf16.msra.mxu0 0
    %1445 = vmatprep.subr.bf16.mxu0 0
    %1446 = vmatpush1.bf16.msra.mxu0 0
    %1447 = vmatprep.subr.bf16.mxu0 0
    %1448 = vmatpush1.bf16.msra.mxu0 0
    %1449 = vmatprep.subr.bf16.mxu0 0
    %1450 = vmatpush1.bf16.msra.mxu0 0
    %1451 = vmatprep.subr.bf16.mxu0 0
    %1452 = vmatpush1.bf16.msra.mxu0 0
    %1453 = vmatprep.subr.bf16.mxu0 0
    %1454 = vmatpush1.bf16.msra.mxu0 0
    %1455 = vmatprep.subr.bf16.mxu0 0
    %1456 = vmatpush1.bf16.msra.mxu0 0
    %1457 = vmatprep.subr.bf16.mxu0 0
    %1458 = vmatpush1.bf16.msra.mxu0 0
    %1459 = vmatprep.subr.bf16.mxu0 0
    %1460 = vmatpush1.bf16.msra.mxu0 0
    %1461 = vmatprep.subr.bf16.mxu0 0
    %1462 = vmatpush1.bf16.msra.mxu0 0
    %1463 = vmatprep.subr.bf16.mxu0 0
    %1464 = vmatpush1.bf16.msra.mxu0 0
    %1465 = vmatprep.subr.bf16.mxu0 0
    %1466 = vmatpush1.bf16.msra.mxu0 0
    %1467 = vmatprep.subr.bf16.mxu0 0
    %1468 = vmatpush1.bf16.msra.mxu0 0
    %1469 = vmatprep.mubr.bf16.mxu0 0
    %1470 = vmatmul.mubr.bf16.gmra.mrb[0].mxu0 %v1432
    %v1471 = vpop.f32.mrb[0].mxu0
    %v1472 = vadd.f32 0.0, %v1471
    %v1473 = vpop.f32.mrb[0].mxu0
    %v1474 = vpop.f32.mrb[0].mxu0
    %v1475 = vpop.f32.mrb[0].mxu0
    %1476 = vdwg.mxu0
    %v1477 = vmul.f32 %v1472, 0.35355338
    %v1478 = vadd.f32 %v1477, %v1038
    %v1479 = vsel %vm380, %v1478, -inf
    %1480 = vmax.xlane.f32.xlu0 %v1479
    %v1481 = vpop.xlane.xlu0 %1480
    %v1482 = vsub.f32 %v1478, %v1481
    %v1483 = vmul.f32 %v1482, 1.442695
    %v1484 = vpow.pop %v1483
    %v1485 = vsel %vm380, %v1484, 0.0
    %1486 = vadd.xlane.f32.xlu0 %v1485
    %v1487 = vpop.xlane.xlu0 %1486
    %v1488 = vrcp.pop %v1487
    %v1489 = vmul.f32 %v1484, %v1488
    %v1490 = vpack.c.bf16 %v1489, %v1489
    %1491 = vrot.lane.b32.xlu0 %v986, 40
    %v1492 = vpop.permute.xlu0 %1491
    %v1494 = vsel %vm380, %v1490, 0
    %v1497 = vsel %vm384, %v1492, 0
    %1499 = vmatprep.subr.bf16.mxu0 0
    %1500 = vmatpush1.bf16.msra.mxu0 %v1497
    %1501 = vmatprep.subr.bf16.mxu0 0
    %1502 = vmatpush1.bf16.msra.mxu0 0
    %1503 = vmatprep.subr.bf16.mxu0 0
    %1504 = vmatpush1.bf16.msra.mxu0 0
    %1505 = vmatprep.subr.bf16.mxu0 0
    %1506 = vmatpush1.bf16.msra.mxu0 0
    %1507 = vmatprep.subr.bf16.mxu0 0
    %1508 = vmatpush1.bf16.msra.mxu0 0
    %1509 = vmatprep.subr.bf16.mxu0 0
    %1510 = vmatpush1.bf16.msra.mxu0 0
    %1511 = vmatprep.subr.bf16.mxu0 0
    %1512 = vmatpush1.bf16.msra.mxu0 0
    %1513 = vmatprep.subr.bf16.mxu0 0
    %1514 = vmatpush1.bf16.msra.mxu0 0
    %1515 = vmatprep.subr.bf16.mxu0 0
    %1516 = vmatpush1.bf16.msra.mxu0 0
    %1517 = vmatprep.subr.bf16.mxu0 0
    %1518 = vmatpush1.bf16.msra.mxu0 0
    %1519 = vmatprep.subr.bf16.mxu0 0
    %1520 = vmatpush1.bf16.msra.mxu0 0
    %1521 = vmatprep.subr.bf16.mxu0 0
    %1522 = vmatpush1.bf16.msra.mxu0 0
    %1523 = vmatprep.subr.bf16.mxu0 0
    %1524 = vmatpush1.bf16.msra.mxu0 0
    %1525 = vmatprep.subr.bf16.mxu0 0
    %1526 = vmatpush1.bf16.msra.mxu0 0
    %1527 = vmatprep.subr.bf16.mxu0 0
    %1528 = vmatpush1.bf16.msra.mxu0 0
    %1529 = vmatprep.subr.bf16.mxu0 0
    %1530 = vmatpush1.bf16.msra.mxu0 0
    %1531 = vmatprep.mubr.bf16.mxu0 0
    %1532 = vmatmul.mubr.bf16.gmra.mrb[0].mxu0 %v1494
    %v1533 = vpop.f32.mrb[0].mxu0
    %v1534 = vadd.f32 0.0, %v1533
    %v1535 = vpop.f32.mrb[0].mxu0
    %v1536 = vpop.f32.mrb[0].mxu0
    %v1537 = vpop.f32.mrb[0].mxu0
    %1538 = vdwg.mxu0
    %1540 = vrot.lane.b32.xlu0 %v1242, 8
    %v1541 = vpop.permute.xlu0 %1540
    %1544 = vrot.lane.b32.xlu0 %v1388, 16
    %v1545 = vpop.permute.xlu0 %1544
    %1548 = vrot.lane.b32.xlu0 %v1534, 24
    %v1549 = vpop.permute.xlu0 %1548
    %v1551 = vsel %vm380, %v1096, %v1541
    %v1552 = vsel %vm946, %v1551, %v1545
    %v1553 = vsel %vm948, %v1552, %v1549
    %v1554 = vld [vmem:[%s6] sm:$0xff]
    %v1555 = vld [vmem:[%s6 + $0x8] sm:$0xff]
    %v1556 = vld [vmem:[%s6 + $0x10] sm:$0xff]
    %v1557 = vld [vmem:[%s6 + $0x18] sm:$0xff]
    %v1558 = vpack.c.bf16 %v1553, %v949
    %v1559 = vpack.c.bf16 %v1555, %v1554
    %v1560 = vpack.c.bf16 %v1557, %v1556
    %v1561 = vld [vmem:[#allocation11] sm:$0x1]
    %v1563 = vlaneseq
    %v1564 = vshrl.u32 %v1563, 7
    %v1565 = vsub.s32 0, %v1564
    %v1566 = vrot.slane %v1561, %v1565
    %v1569 = vsel %vm239, %v1558, 0
    %1571 = vmatprep.subr.bf16.mxu0 0
    %1572 = vmatpush1.bf16.msra.mxu0 %v1559
    %1573 = vmatprep.subr.bf16.mxu0 0
    %1574 = vmatpush1.bf16.msra.mxu0 %v1560
    %1575 = vmatprep.subr.bf16.mxu0 0
    %1576 = vmatpush1.bf16.msra.mxu0 0
    %1577 = vmatprep.subr.bf16.mxu0 0
    %1578 = vmatpush1.bf16.msra.mxu0 0
    %1579 = vmatprep.subr.bf16.mxu0 0
    %1580 = vmatpush1.bf16.msra.mxu0 0
    %1581 = vmatprep.subr.bf16.mxu0 0
    %1582 = vmatpush1.bf16.msra.mxu0 0
    %1583 = vmatprep.subr.bf16.mxu0 0
    %1584 = vmatpush1.bf16.msra.mxu0 0
    %1585 = vmatprep.subr.bf16.mxu0 0
    %1586 = vmatpush1.bf16.msra.mxu0 0
    %1587 = vmatprep.subr.bf16.mxu0 0
    %1588 = vmatpush1.bf16.msra.mxu0 0
    %1589 = vmatprep.subr.bf16.mxu0 0
    %1590 = vmatpush1.bf16.msra.mxu0 0
    %1591 = vmatprep.subr.bf16.mxu0 0
    %1592 = vmatpush1.bf16.msra.mxu0 0
    %1593 = vmatprep.subr.bf16.mxu0 0
    %1594 = vmatpush1.bf16.msra.mxu0 0
    %1595 = vmatprep.subr.bf16.mxu0 0
    %1596 = vmatpush1.bf16.msra.mxu0 0
    %1597 = vmatprep.subr.bf16.mxu0 0
    %1598 = vmatpush1.bf16.msra.mxu0 0
    %1599 = vmatprep.subr.bf16.mxu0 0
    %1600 = vmatpush1.bf16.msra.mxu0 0
    %1601 = vmatprep.subr.bf16.mxu0 0
    %1602 = vmatpush1.bf16.msra.mxu0 0
    %1603 = vmatprep.mubr.bf16.mxu0 0
    %1604 = vmatmul.mubr.bf16.gmra.mrb[0].mxu0 %v1569
    %v1605 = vpop.f32.mrb[0].mxu0
    %v1606 = vadd.f32 %v1566, %v1605
    %v1607 = vpop.f32.mrb[0].mxu0
    %v1608 = vpop.f32.mrb[0].mxu0
    %v1609 = vadd.f32 %v1566, %v1608
    %v1610 = vpop.f32.mrb[0].mxu0
    %1611 = vdwg.mxu0
    %v1612 = vadd.f32 %v1606, %v281
    %v1613 = vadd.f32 %v1609, %v282
    %v1614 = vld [vmem:[#allocation13] sm:$0x1]
    %v1615 = vld [vmem:[#allocation14] sm:$0x1]
    %v1616 = vsel %vm239, %v1612, 0.0
    %1617 = vadd.xlane.f32.xlu0 %v1616
    %v1618 = vpop.xlane.xlu0 %1617
    %v1619 = vsel %vm239, %v1613, 0.0
    %1620 = vadd.xlane.f32.xlu0 %v1619
    %v1621 = vpop.xlane.xlu0 %1620
    %v1622 = vmul.f32 %v1618, %v246
    %v1623 = vmul.f32 %v1621, %v246
    %v1624 = vsub.f32 %v1612, %v1622
    %v1625 = vsub.f32 %v1613, %v1623
    %v1626 = vmul.f32 %v1624, %v1624
    %v1627 = vmul.f32 %v1625, %v1625
    %v1628 = vsel %vm239, %v1626, 0.0
    %1629 = vadd.xlane.f32.xlu0 %v1628
    %v1630 = vpop.xlane.xlu0 %1629
    %v1631 = vsel %vm239, %v1627, 0.0
    %1632 = vadd.xlane.f32.xlu0 %v1631
    %v1633 = vpop.xlane.xlu0 %1632
    %v1634 = vmul.f32 %v1630, %v246
    %v1635 = vmul.f32 %v1633, %v246
    %v1636 = vadd.f32 %v1634, 1e-12
    %v1637 = vadd.f32 %v1635, 1e-12
    %v1638 = vrsqrt.pop %v1636
    %v1639 = vrsqrt.pop %v1637
    %v1640 = vmul.f32 %v1624, %v1638
    %v1641 = vmul.f32 %v1625, %v1639
    %v1643 = vlaneseq
    %v1644 = vshrl.u32 %v1643, 7
    %v1645 = vsub.s32 0, %v1644
    %v1646 = vrot.slane %v1614, %v1645
    %v1648 = vmul.f32 %v1640, %v1646
    %v1649 = vmul.f32 %v1641, %v1646
    %v1651 = vlaneseq
    %v1652 = vshrl.u32 %v1651, 7
    %v1653 = vsub.s32 0, %v1652
    %v1654 = vrot.slane %v1615, %v1653
    %v1656 = vadd.f32 %v1648, %v1654
    %v1657 = vadd.f32 %v1649, %v1654
    %v1658 = vld [vmem:[%s10] sm:$0xff]
    %v1659 = vld [vmem:[%s10 + $0x8] sm:$0xff]
    %v1660 = vld [vmem:[%s10 + $0x10] sm:$0xff]
    %v1661 = vld [vmem:[%s10 + $0x18] sm:$0xff]
    %v1662 = vpack.c.bf16 %v1657, %v1656
    %v1663 = vpack.c.bf16 %v1659, %v1658
    %v1664 = vpack.c.bf16 %v1661, %v1660
    %v1665 = vld [vmem:[#allocation16] sm:$0x1]
    %v1667 = vlaneseq
    %v1668 = vshrl.u32 %v1667, 7
    %v1669 = vsub.s32 0, %v1668
    %v1670 = vrot.slane %v1665, %v1669
    %v1673 = vsel %vm239, %v1662, 0
    %1675 = vmatprep.subr.bf16.mxu0 0
    %1676 = vmatpush1.bf16.msra.mxu0 %v1663
    %1677 = vmatprep.subr.bf16.mxu0 0
    %1678 = vmatpush1.bf16.msra.mxu0 %v1664
    %1679 = vmatprep.subr.bf16.mxu0 0
    %1680 = vmatpush1.bf16.msra.mxu0 0
    %1681 = vmatprep.subr.bf16.mxu0 0
    %1682 = vmatpush1.bf16.msra.mxu0 0
    %1683 = vmatprep.subr.bf16.mxu0 0
    %1684 = vmatpush1.bf16.msra.mxu0 0
    %1685 = vmatprep.subr.bf16.mxu0 0
    %1686 = vmatpush1.bf16.msra.mxu0 0
    %1687 = vmatprep.subr.bf16.mxu0 0
    %1688 = vmatpush1.bf16.msra.mxu0 0
    %1689 = vmatprep.subr.bf16.mxu0 0
    %1690 = vmatpush1.bf16.msra.mxu0 0
    %1691 = vmatprep.subr.bf16.mxu0 0
    %1692 = vmatpush1.bf16.msra.mxu0 0
    %1693 = vmatprep.subr.bf16.mxu0 0
    %1694 = vmatpush1.bf16.msra.mxu0 0
    %1695 = vmatprep.subr.bf16.mxu0 0
    %1696 = vmatpush1.bf16.msra.mxu0 0
    %1697 = vmatprep.subr.bf16.mxu0 0
    %1698 = vmatpush1.bf16.msra.mxu0 0
    %1699 = vmatprep.subr.bf16.mxu0 0
    %1700 = vmatpush1.bf16.msra.mxu0 0
    %1701 = vmatprep.subr.bf16.mxu0 0
    %1702 = vmatpush1.bf16.msra.mxu0 0
    %1703 = vmatprep.subr.bf16.mxu0 0
    %1704 = vmatpush1.bf16.msra.mxu0 0
    %1705 = vmatprep.subr.bf16.mxu0 0
    %1706 = vmatpush1.bf16.msra.mxu0 0
    %1707 = vmatprep.mubr.bf16.mxu0 0
    %1708 = vmatmul.mubr.bf16.gmra.mrb[0].mxu0 %v1673
    %v1709 = vpop.f32.mrb[0].mxu0
    %v1710 = vadd.f32 %v1670, %v1709
    %v1711 = vpop.f32.mrb[0].mxu0
    %v1712 = vpop.f32.mrb[0].mxu0
    %v1713 = vadd.f32 %v1670, %v1712
    %v1714 = vpop.f32.mrb[0].mxu0
    %1715 = vdwg.mxu0
    %v1716 = vmul.f32 %v1710, 0.5
    %v1717 = vmul.f32 %v1713, 0.5
    %v1718 = vmul.f32 %v1710, 0.044715
    %v1719 = vmul.f32 %v1713, 0.044715
    %v1720 = vmul.f32 %v1718, %v1710
    %v1721 = vmul.f32 %v1719, %v1713
    %v1722 = vmul.f32 %v1720, %v1710
    %v1723 = vmul.f32 %v1721, %v1713
    %v1724 = vadd.f32 %v1710, %v1722
    %v1725 = vadd.f32 %v1713, %v1723
    %v1726 = vmul.f32 %v1724, 0.7978846
    %v1727 = vmul.f32 %v1725, 0.7978846
    %v1728 = vtanh.pop %v1726
    %v1729 = vtanh.pop %v1727
    %v1730 = vadd.f32 %v1728, 1.0
    %v1731 = vadd.f32 %v1729, 1.0
    %v1732 = vmul.f32 %v1716, %v1730
    %v1733 = vmul.f32 %v1717, %v1731
    %v1734 = vld [vmem:[%s12] sm:$0xff]
    %v1735 = vld [vmem:[%s12 + $0x8] sm:$0xff]
    %v1736 = vld [vmem:[%s12 + $0x10] sm:$0xff]
    %v1737 = vld [vmem:[%s12 + $0x18] sm:$0xff]
    %v1738 = vld [vmem:[%s12 + $0x20] sm:$0xff]
    %v1739 = vld [vmem:[%s12 + $0x28] sm:$0xff]
    %v1740 = vld [vmem:[%s12 + $0x30] sm:$0xff]
    %v1741 = vld [vmem:[%s12 + $0x38] sm:$0xff]
    %v1742 = vpack.c.bf16 %v1733, %v1732
    %v1743 = vpack.c.bf16 %v1735, %v1734
    %v1744 = vpack.c.bf16 %v1737, %v1736
    %v1745 = vpack.c.bf16 %v1739, %v1738
    %v1746 = vpack.c.bf16 %v1741, %v1740
    %v1747 = vld [vmem:[#allocation17] sm:$0x1]
    %v1749 = vlaneseq
    %v1750 = vshrl.u32 %v1749, 7
    %v1751 = vsub.s32 0, %v1750
    %v1752 = vrot.slane %v1747, %v1751
    %vm1754 = vcmask 523264
    %v1756 = vsel %vm1754, %v1742, 0
    %1758 = vmatprep.subr.bf16.mxu0 0
    %1759 = vmatpush1.bf16.msra.mxu0 %v1743
    %1760 = vmatprep.subr.bf16.mxu0 0
    %1761 = vmatpush1.bf16.msra.mxu0 %v1744
    %1762 = vmatprep.subr.bf16.mxu0 0
    %1763 = vmatpush1.bf16.msra.mxu0 %v1745
    %1764 = vmatprep.subr.bf16.mxu0 0
    %1765 = vmatpush1.bf16.msra.mxu0 %v1746
    %1766 = vmatprep.subr.bf16.mxu0 0
    %1767 = vmatpush1.bf16.msra.mxu0 0
    %1768 = vmatprep.subr.bf16.mxu0 0
    %1769 = vmatpush1.bf16.msra.mxu0 0
    %1770 = vmatprep.subr.bf16.mxu0 0
    %1771 = vmatpush1.bf16.msra.mxu0 0
    %1772 = vmatprep.subr.bf16.mxu0 0
    %1773 = vmatpush1.bf16.msra.mxu0 0
    %1774 = vmatprep.subr.bf16.mxu0 0
    %1775 = vmatpush1.bf16.msra.mxu0 0
    %1776 = vmatprep.subr.bf16.mxu0 0
    %1777 = vmatpush1.bf16.msra.mxu0 0
    %1778 = vmatprep.subr.bf16.mxu0 0
    %1779 = vmatpush1.bf16.msra.mxu0 0
    %1780 = vmatprep.subr.bf16.mxu0 0
    %1781 = vmatpush1.bf16.msra.mxu0 0
    %1782 = vmatprep.subr.bf16.mxu0 0
    %1783 = vmatpush1.bf16.msra.mxu0 0
    %1784 = vmatprep.subr.bf16.mxu0 0
    %1785 = vmatpush1.bf16.msra.mxu0 0
    %1786 = vmatprep.subr.bf16.mxu0 0
    %1787 = vmatpush1.bf16.msra.mxu0 0
    %1788 = vmatprep.subr.bf16.mxu0 0
    %1789 = vmatpush1.bf16.msra.mxu0 0
    %1790 = vmatprep.mubr.bf16.mxu0 0
    %1791 = vmatmul.mubr.bf16.gmra.mrb[0].mxu0 %v1756
    %v1792 = vpop.f32.mrb[0].mxu0
    %v1793 = vadd.f32 %v1752, %v1792
    %v1794 = vpop.f32.mrb[0].mxu0
    %v1795 = vpop.f32.mrb[0].mxu0
    %v1796 = vadd.f32 %v1752, %v1795
    %v1797 = vpop.f32.mrb[0].mxu0
    %1798 = vdwg.mxu0
    %v1799 = vadd.f32 %v1793, %v1656
    %v1800 = vadd.f32 %v1796, %v1657
    %v1801 = vld [vmem:[#allocation19] sm:$0x1]
    %v1802 = vld [vmem:[#allocation20] sm:$0x1]
    %v1803 = vsel %vm239, %v1799, 0.0
    %1804 = vadd.xlane.f32.xlu0 %v1803
    %v1805 = vpop.xlane.xlu0 %1804
    %v1806 = vsel %vm239, %v1800, 0.0
    %1807 = vadd.xlane.f32.xlu0 %v1806
    %v1808 = vpop.xlane.xlu0 %1807
    %v1809 = vmul.f32 %v1805, %v246
    %v1810 = vmul.f32 %v1808, %v246
    %v1811 = vsub.f32 %v1799, %v1809
    %v1812 = vsub.f32 %v1800, %v1810
    %v1813 = vmul.f32 %v1811, %v1811
    %v1814 = vmul.f32 %v1812, %v1812
    %v1815 = vsel %vm239, %v1813, 0.0
    %1816 = vadd.xlane.f32.xlu0 %v1815
    %v1817 = vpop.xlane.xlu0 %1816
    %v1818 = vsel %vm239, %v1814, 0.0
    %1819 = vadd.xlane.f32.xlu0 %v1818
    %v1820 = vpop.xlane.xlu0 %1819
    %v1821 = vmul.f32 %v1817, %v246
    %v1822 = vmul.f32 %v1820, %v246
    %v1823 = vadd.f32 %v1821, 1e-12
    %v1824 = vadd.f32 %v1822, 1e-12
    %v1825 = vrsqrt.pop %v1823
    %v1826 = vrsqrt.pop %v1824
    %v1827 = vmul.f32 %v1811, %v1825
    %v1828 = vmul.f32 %v1812, %v1826
    %v1830 = vlaneseq
    %v1831 = vshrl.u32 %v1830, 7
    %v1832 = vsub.s32 0, %v1831
    %v1833 = vrot.slane %v1801, %v1832
    %v1835 = vmul.f32 %v1827, %v1833
    %v1836 = vmul.f32 %v1828, %v1833
    %v1838 = vlaneseq
    %v1839 = vshrl.u32 %v1838, 7
    %v1840 = vsub.s32 0, %v1839
    %v1841 = vrot.slane %v1802, %v1840
    %v1843 = vadd.f32 %v1835, %v1841
    %v1844 = vadd.f32 %v1836, %v1841
    %s1845 = scalar_lea.vmem %s4, 32
    %v1846 = vld [vmem:[%s1845] sm:$0xff]
    %v1847 = vld [vmem:[%s1845 + $0x8] sm:$0xff]
    %v1848 = vld [vmem:[%s1845 + $0x10] sm:$0xff]
    %v1849 = vld [vmem:[%s1845 + $0x18] sm:$0xff]
    %v1850 = vpack.c.bf16 %v1844, %v1843
    %v1851 = vpack.c.bf16 %v1847, %v1846
    %v1852 = vpack.c.bf16 %v1849, %v1848
    %s1853 = scalar_lea.vmem [#allocation10], 1
    %v1854 = vld [vmem:[%s1853] sm:$0x1]
    %v1856 = vlaneseq
    %v1857 = vshrl.u32 %v1856, 7
    %v1858 = vsub.s32 0, %v1857
    %v1859 = vrot.slane %v1854, %v1858
    %v1862 = vsel %vm239, %v1850, 0
    %1864 = vmatprep.subr.bf16.mxu0 0
    %1865 = vmatpush1.bf16.msra.mxu0 %v1851
    %1866 = vmatprep.subr.bf16.mxu0 0
    %1867 = vmatpush1.bf16.msra.mxu0 %v1852
    %1868 = vmatprep.subr.bf16.mxu0 0
    %1869 = vmatpush1.bf16.msra.mxu0 0
    %1870 = vmatprep.subr.bf16.mxu0 0
    %1871 = vmatpush1.bf16.msra.mxu0 0
    %1872 = vmatprep.subr.bf16.mxu0 0
    %1873 = vmatpush1.bf16.msra.mxu0 0
    %1874 = vmatprep.subr.bf16.mxu0 0
    %1875 = vmatpush1.bf16.msra.mxu0 0
    %1876 = vmatprep.subr.bf16.mxu0 0
    %1877 = vmatpush1.bf16.msra.mxu0 0
    %1878 = vmatprep.subr.bf16.mxu0 0
    %1879 = vmatpush1.bf16.msra.mxu0 0
    %1880 = vmatprep.subr.bf16.mxu0 0
    %1881 = vmatpush1.bf16.msra.mxu0 0
    %1882 = vmatprep.subr.bf16.mxu0 0
    %1883 = vmatpush1.bf16.msra.mxu0 0
    %1884 = vmatprep.subr.bf16.mxu0 0
    %1885 = vmatpush1.bf16.msra.mxu0 0
    %1886 = vmatprep.subr.bf16.mxu0 0
    %1887 = vmatpush1.bf16.msra.mxu0 0
    %1888 = vmatprep.subr.bf16.mxu0 0
    %1889 = vmatpush1.bf16.msra.mxu0 0
    %1890 = vmatprep.subr.bf16.mxu0 0
    %1891 = vmatpush1.bf16.msra.mxu0 0
    %1892 = vmatprep.subr.bf16.mxu0 0
    %1893 = vmatpush1.bf16.msra.mxu0 0
    %1894 = vmatprep.subr.bf16.mxu0 0
    %1895 = vmatpush1.bf16.msra.mxu0 0
    %1896 = vmatprep.mubr.bf16.mxu0 0
    %1897 = vmatmul.mubr.bf16.gmra.mrb[0].mxu0 %v1862
    %v1898 = vpop.f32.mrb[0].mxu0
    %v1899 = vadd.f32 %v1859, %v1898
    %v1900 = vpop.f32.mrb[0].mxu0
    %v1901 = vpop.f32.mrb[0].mxu0
    %v1902 = vadd.f32 %v1859, %v1901
    %v1903 = vpop.f32.mrb[0].mxu0
    %1904 = vdwg.mxu0
    %1906 = vrot.lane.b32.xlu0 %v1899, 96
    %v1907 = vpop.permute.xlu0 %1906
    %1909 = vxpose.xlu0.b32.start [1/16] %v1907, 128
    %1910 = vxpose.xlu0.b32.cont [2/16] 0.0, 128
    %1911 = vxpose.xlu0.b32.cont [3/16] 0.0, 128
    %1912 = vxpose.xlu0.b32.cont [4/16] 0.0, 128
    %1913 = vxpose.xlu0.b32.cont [5/16] 0.0, 128
    %1914 = vxpose.xlu0.b32.cont [6/16] 0.0, 128
    %1915 = vxpose.xlu0.b32.cont [7/16] 0.0, 128
    %1916 = vxpose.xlu0.b32.cont [8/16] 0.0, 128
    %1917 = vxpose.xlu0.b32.cont [9/16] 0.0, 128
    %1918 = vxpose.xlu0.b32.cont [10/16] 0.0, 128
    %1919 = vxpose.xlu0.b32.cont [11/16] 0.0, 128
    %1920 = vxpose.xlu0.b32.cont [12/16] 0.0, 128
    %1921 = vxpose.xlu0.b32.cont [13/16] 0.0, 128
    %1922 = vxpose.xlu0.b32.cont [14/16] 0.0, 128
    %1923 = vxpose.xlu0.b32.cont [15/16] 0.0, 128
    %1924 = vxpose.xlu0.b32.end [16/16] 0.0, 128
    %v1925 = vpop.trf.xlu0
    %v1926 = vpop.trf.xlu0
    %v1927 = vpop.trf.xlu0
    %v1928 = vpop.trf.xlu0
    %v1929 = vpop.trf.xlu0
    %v1930 = vpop.trf.xlu0
    %v1931 = vpop.trf.xlu0
    %v1932 = vpop.trf.xlu0
    %v1933 = vpop.trf.xlu0
    %v1934 = vpop.trf.xlu0
    %v1935 = vpop.trf.xlu0
    %v1936 = vpop.trf.xlu0
    %v1937 = vpop.trf.xlu0
    %v1938 = vpop.trf.xlu0
    %v1939 = vpop.trf.xlu0
    %v1940 = vpop.trf.xlu0
    %v1941 = vpack.c.bf16 %v1899, %v1899
    %v1942 = vpack.c.bf16 %v1925, %v1925
    %v1944 = vsel %vm380, %v1941, 0
    %v1947 = vsel %vm384, %v1942, 0
    %1949 = vmatprep.subr.bf16.mxu0 0
    %1950 = vmatpush1.bf16.msra.mxu0 %v1947
    %1951 = vmatprep.subr.bf16.mxu0 0
    %1952 = vmatpush1.bf16.msra.mxu0 0
    %1953 = vmatprep.subr.bf16.mxu0 0
    %1954 = vmatpush1.bf16.msra.mxu0 0
    %1955 = vmatprep.subr.bf16.mxu0 0
    %1956 = vmatpush1.bf16.msra.mxu0 0
    %1957 = vmatprep.subr.bf16.mxu0 0
    %1958 = vmatpush1.bf16.msra.mxu0 0
    %1959 = vmatprep.subr.bf16.mxu0 0
    %1960 = vmatpush1.bf16.msra.mxu0 0
    %1961 = vmatprep.subr.bf16.mxu0 0
    %1962 = vmatpush1.bf16.msra.mxu0 0
    %1963 = vmatprep.subr.bf16.mxu0 0
    %1964 = vmatpush1.bf16.msra.mxu0 0
    %1965 = vmatprep.subr.bf16.mxu0 0
    %1966 = vmatpush1.bf16.msra.mxu0 0
    %1967 = vmatprep.subr.bf16.mxu0 0
    %1968 = vmatpush1.bf16.msra.mxu0 0
    %1969 = vmatprep.subr.bf16.mxu0 0
    %1970 = vmatpush1.bf16.msra.mxu0 0
    %1971 = vmatprep.subr.bf16.mxu0 0
    %1972 = vmatpush1.bf16.msra.mxu0 0
    %1973 = vmatprep.subr.bf16.mxu0 0
    %1974 = vmatpush1.bf16.msra.mxu0 0
    %1975 = vmatprep.subr.bf16.mxu0 0
    %1976 = vmatpush1.bf16.msra.mxu0 0
    %1977 = vmatprep.subr.bf16.mxu0 0
    %1978 = vmatpush1.bf16.msra.mxu0 0
    %1979 = vmatprep.subr.bf16.mxu0 0
    %1980 = vmatpush1.bf16.msra.mxu0 0
    %1981 = vmatprep.mubr.bf16.mxu0 0
    %1982 = vmatmul.mubr.bf16.gmra.mrb[0].mxu0 %v1944
    %v1983 = vpop.f32.mrb[0].mxu0
    %v1984 = vadd.f32 0.0, %v1983
    %v1985 = vpop.f32.mrb[0].mxu0
    %v1986 = vpop.f32.mrb[0].mxu0
    %v1987 = vpop.f32.mrb[0].mxu0
    %1988 = vdwg.mxu0
    %v1989 = vmul.f32 %v1984, 0.35355338
    %v1990 = vadd.f32 %v1989, %v432
    %v1991 = vsel %vm380, %v1990, -inf
    %1992 = vmax.xlane.f32.xlu0 %v1991
    %v1993 = vpop.xlane.xlu0 %1992
    %v1994 = vsub.f32 %v1990, %v1993
    %v1995 = vmul.f32 %v1994, 1.442695
    %v1996 = vpow.pop %v1995
    %v1997 = vsel %vm380, %v1996, 0.0
    %1998 = vadd.xlane.f32.xlu0 %v1997
    %v1999 = vpop.xlane.xlu0 %1998
    %v2000 = vrcp.pop %v1999
    %v2001 = vmul.f32 %v1996, %v2000
    %v2002 = vpack.c.bf16 %v2001, %v2001
    %2004 = vrot.lane.b32.xlu0 %v1941, 64
    %v2005 = vpop.permute.xlu0 %2004
    %v2007 = vsel %vm380, %v2002, 0
    %v2010 = vsel %vm384, %v2005, 0
    %2012 = vmatprep.subr.bf16.mxu0 0
    %2013 = vmatpush1.bf16.msra.mxu0 %v2010
    %2014 = vmatprep.subr.bf16.mxu0 0
    %2015 = vmatpush1.bf16.msra.mxu0 0
    %2016 = vmatprep.subr.bf16.mxu0 0
    %2017 = vmatpush1.bf16.msra.mxu0 0
    %2018 = vmatprep.subr.bf16.mxu0 0
    %2019 = vmatpush1.bf16.msra.mxu0 0
    %2020 = vmatprep.subr.bf16.mxu0 0
    %2021 = vmatpush1.bf16.msra.mxu0 0
    %2022 = vmatprep.subr.bf16.mxu0 0
    %2023 = vmatpush1.bf16.msra.mxu0 0
    %2024 = vmatprep.subr.bf16.mxu0 0
    %2025 = vmatpush1.bf16.msra.mxu0 0
    %2026 = vmatprep.subr.bf16.mxu0 0
    %2027 = vmatpush1.bf16.msra.mxu0 0
    %2028 = vmatprep.subr.bf16.mxu0 0
    %2029 = vmatpush1.bf16.msra.mxu0 0
    %2030 = vmatprep.subr.bf16.mxu0 0
    %2031 = vmatpush1.bf16.msra.mxu0 0
    %2032 = vmatprep.subr.bf16.mxu0 0
    %2033 = vmatpush1.bf16.msra.mxu0 0
    %2034 = vmatprep.subr.bf16.mxu0 0
    %2035 = vmatpush1.bf16.msra.mxu0 0
    %2036 = vmatprep.subr.bf16.mxu0 0
    %2037 = vmatpush1.bf16.msra.mxu0 0
    %2038 = vmatprep.subr.bf16.mxu0 0
    %2039 = vmatpush1.bf16.msra.mxu0 0
    %2040 = vmatprep.subr.bf16.mxu0 0
    %2041 = vmatpush1.bf16.msra.mxu0 0
    %2042 = vmatprep.subr.bf16.mxu0 0
    %2043 = vmatpush1.bf16.msra.mxu0 0
    %2044 = vmatprep.mubr.bf16.mxu0 0
    %2045 = vmatmul.mubr.bf16.gmra.mrb[0].mxu0 %v2007
    %v2046 = vpop.f32.mrb[0].mxu0
    %v2047 = vadd.f32 0.0, %v2046
    %v2048 = vpop.f32.mrb[0].mxu0
    %v2049 = vpop.f32.mrb[0].mxu0
    %v2050 = vpop.f32.mrb[0].mxu0
    %2051 = vdwg.mxu0
    %2052 = vrot.lane.b32.xlu0 %v1899, 88
    %v2053 = vpop.permute.xlu0 %2052
    %2055 = vxpose.xlu0.b32.start [1/16] %v2053, 128
    %2056 = vxpose.xlu0.b32.cont [2/16] 0.0, 128
    %2057 = vxpose.xlu0.b32.cont [3/16] 0.0, 128
    %2058 = vxpose.xlu0.b32.cont [4/16] 0.0, 128
    %2059 = vxpose.xlu0.b32.cont [5/16] 0.0, 128
    %2060 = vxpose.xlu0.b32.cont [6/16] 0.0, 128
    %2061 = vxpose.xlu0.b32.cont [7/16] 0.0, 128
    %2062 = vxpose.xlu0.b32.cont [8/16] 0.0, 128
    %2063 = vxpose.xlu0.b32.cont [9/16] 0.0, 128
    %2064 = vxpose.xlu0.b32.cont [10/16] 0.0, 128
    %2065 = vxpose.xlu0.b32.cont [11/16] 0.0, 128
    %2066 = vxpose.xlu0.b32.cont [12/16] 0.0, 128
    %2067 = vxpose.xlu0.b32.cont [13/16] 0.0, 128
    %2068 = vxpose.xlu0.b32.cont [14/16] 0.0, 128
    %2069 = vxpose.xlu0.b32.cont [15/16] 0.0, 128
    %2070 = vxpose.xlu0.b32.end [16/16] 0.0, 128
    %v2071 = vpop.trf.xlu0
    %v2072 = vpop.trf.xlu0
    %v2073 = vpop.trf.xlu0
    %v2074 = vpop.trf.xlu0
    %v2075 = vpop.trf.xlu0
    %v2076 = vpop.trf.xlu0
    %v2077 = vpop.trf.xlu0
    %v2078 = vpop.trf.xlu0
    %v2079 = vpop.trf.xlu0
    %v2080 = vpop.trf.xlu0
    %v2081 = vpop.trf.xlu0
    %v2082 = vpop.trf.xlu0
    %v2083 = vpop.trf.xlu0
    %v2084 = vpop.trf.xlu0
    %v2085 = vpop.trf.xlu0
    %v2086 = vpop.trf.xlu0
    %v2087 = vpack.c.bf16 %v2071, %v2071
    %2088 = vrot.lane.b32.xlu0 %v1941, 120
    %v2089 = vpop.permute.xlu0 %2088
    %v2091 = vsel %vm380, %v2089, 0
    %v2094 = vsel %vm384, %v2087, 0
    %2096 = vmatprep.subr.bf16.mxu0 0
    %2097 = vmatpush1.bf16.msra.mxu0 %v2094
    %2098 = vmatprep.subr.bf16.mxu0 0
    %2099 = vmatpush1.bf16.msra.mxu0 0
    %2100 = vmatprep.subr.bf16.mxu0 0
    %2101 = vmatpush1.bf16.msra.mxu0 0
    %2102 = vmatprep.subr.bf16.mxu0 0
    %2103 = vmatpush1.bf16.msra.mxu0 0
    %2104 = vmatprep.subr.bf16.mxu0 0
    %2105 = vmatpush1.bf16.msra.mxu0 0
    %2106 = vmatprep.subr.bf16.mxu0 0
    %2107 = vmatpush1.bf16.msra.mxu0 0
    %2108 = vmatprep.subr.bf16.mxu0 0
    %2109 = vmatpush1.bf16.msra.mxu0 0
    %2110 = vmatprep.subr.bf16.mxu0 0
    %2111 = vmatpush1.bf16.msra.mxu0 0
    %2112 = vmatprep.subr.bf16.mxu0 0
    %2113 = vmatpush1.bf16.msra.mxu0 0
    %2114 = vmatprep.subr.bf16.mxu0 0
    %2115 = vmatpush1.bf16.msra.mxu0 0
    %2116 = vmatprep.subr.bf16.mxu0 0
    %2117 = vmatpush1.bf16.msra.mxu0 0
    %2118 = vmatprep.subr.bf16.mxu0 0
    %2119 = vmatpush1.bf16.msra.mxu0 0
    %2120 = vmatprep.subr.bf16.mxu0 0
    %2121 = vmatpush1.bf16.msra.mxu0 0
    %2122 = vmatprep.subr.bf16.mxu0 0
    %2123 = vmatpush1.bf16.msra.mxu0 0
    %2124 = vmatprep.subr.bf16.mxu0 0
    %2125 = vmatpush1.bf16.msra.mxu0 0
    %2126 = vmatprep.subr.bf16.mxu0 0
    %2127 = vmatpush1.bf16.msra.mxu0 0
    %2128 = vmatprep.mubr.bf16.mxu0 0
    %2129 = vmatmul.mubr.bf16.gmra.mrb[0].mxu0 %v2091
    %v2130 = vpop.f32.mrb[0].mxu0
    %v2131 = vadd.f32 0.0, %v2130
    %v2132 = vpop.f32.mrb[0].mxu0
    %v2133 = vpop.f32.mrb[0].mxu0
    %v2134 = vpop.f32.mrb[0].mxu0
    %2135 = vdwg.mxu0
    %v2136 = vmul.f32 %v2131, 0.35355338
    %v2137 = vadd.f32 %v2136, %v432
    %v2138 = vsel %vm380, %v2137, -inf
    %2139 = vmax.xlane.f32.xlu0 %v2138
    %v2140 = vpop.xlane.xlu0 %2139
    %v2141 = vsub.f32 %v2137, %v2140
    %v2142 = vmul.f32 %v2141, 1.442695
    %v2143 = vpow.pop %v2142
    %v2144 = vsel %vm380, %v2143, 0.0
    %2145 = vadd.xlane.f32.xlu0 %v2144
    %v2146 = vpop.xlane.xlu0 %2145
    %v2147 = vrcp.pop %v2146
    %v2148 = vmul.f32 %v2143, %v2147
    %v2149 = vpack.c.bf16 %v2148, %v2148
    %2150 = vrot.lane.b32.xlu0 %v1941, 56
    %v2151 = vpop.permute.xlu0 %2150
    %v2153 = vsel %vm380, %v2149, 0
    %v2156 = vsel %vm384, %v2151, 0
    %2158 = vmatprep.subr.bf16.mxu0 0
    %2159 = vmatpush1.bf16.msra.mxu0 %v2156
    %2160 = vmatprep.subr.bf16.mxu0 0
    %2161 = vmatpush1.bf16.msra.mxu0 0
    %2162 = vmatprep.subr.bf16.mxu0 0
    %2163 = vmatpush1.bf16.msra.mxu0 0
    %2164 = vmatprep.subr.bf16.mxu0 0
    %2165 = vmatpush1.bf16.msra.mxu0 0
    %2166 = vmatprep.subr.bf16.mxu0 0
    %2167 = vmatpush1.bf16.msra.mxu0 0
    %2168 = vmatprep.subr.bf16.mxu0 0
    %2169 = vmatpush1.bf16.msra.mxu0 0
    %2170 = vmatprep.subr.bf16.mxu0 0
    %2171 = vmatpush1.bf16.msra.mxu0 0
    %2172 = vmatprep.subr.bf16.mxu0 0
    %2173 = vmatpush1.bf16.msra.mxu0 0
    %2174 = vmatprep.subr.bf16.mxu0 0
    %2175 = vmatpush1.bf16.msra.mxu0 0
    %2176 = vmatprep.subr.bf16.mxu0 0
    %2177 = vmatpush1.bf16.msra.mxu0 0
    %2178 = vmatprep.subr.bf16.mxu0 0
    %2179 = vmatpush1.bf16.msra.mxu0 0
    %2180 = vmatprep.subr.bf16.mxu0 0
    %2181 = vmatpush1.bf16.msra.mxu0 0
    %2182 = vmatprep.subr.bf16.mxu0 0
    %2183 = vmatpush1.bf16.msra.mxu0 0
    %2184 = vmatprep.subr.bf16.mxu0 0
    %2185 = vmatpush1.bf16.msra.mxu0 0
    %2186 = vmatprep.subr.bf16.mxu0 0
    %2187 = vmatpush1.bf16.msra.mxu0 0
    %2188 = vmatprep.subr.bf16.mxu0 0
    %2189 = vmatpush1.bf16.msra.mxu0 0
    %2190 = vmatprep.mubr.bf16.mxu0 0
    %2191 = vmatmul.mubr.bf16.gmra.mrb[0].mxu0 %v2153
    %v2192 = vpop.f32.mrb[0].mxu0
    %v2193 = vadd.f32 0.0, %v2192
    %v2194 = vpop.f32.mrb[0].mxu0
    %v2195 = vpop.f32.mrb[0].mxu0
    %v2196 = vpop.f32.mrb[0].mxu0
    %2197 = vdwg.mxu0
    %2198 = vrot.lane.b32.xlu0 %v1899, 80
    %v2199 = vpop.permute.xlu0 %2198
    %2201 = vxpose.xlu0.b32.start [1/16] %v2199, 128
    %2202 = vxpose.xlu0.b32.cont [2/16] 0.0, 128
    %2203 = vxpose.xlu0.b32.cont [3/16] 0.0, 128
    %2204 = vxpose.xlu0.b32.cont [4/16] 0.0, 128
    %2205 = vxpose.xlu0.b32.cont [5/16] 0.0, 128
    %2206 = vxpose.xlu0.b32.cont [6/16] 0.0, 128
    %2207 = vxpose.xlu0.b32.cont [7/16] 0.0, 128
    %2208 = vxpose.xlu0.b32.cont [8/16] 0.0, 128
    %2209 = vxpose.xlu0.b32.cont [9/16] 0.0, 128
    %2210 = vxpose.xlu0.b32.cont [10/16] 0.0, 128
    %2211 = vxpose.xlu0.b32.cont [11/16] 0.0, 128
    %2212 = vxpose.xlu0.b32.cont [12/16] 0.0, 128
    %2213 = vxpose.xlu0.b32.cont [13/16] 0.0, 128
    %2214 = vxpose.xlu0.b32.cont [14/16] 0.0, 128
    %2215 = vxpose.xlu0.b32.cont [15/16] 0.0, 128
    %2216 = vxpose.xlu0.b32.end [16/16] 0.0, 128
    %v2217 = vpop.trf.xlu0
    %v2218 = vpop.trf.xlu0
    %v2219 = vpop.trf.xlu0
    %v2220 = vpop.trf.xlu0
    %v2221 = vpop.trf.xlu0
    %v2222 = vpop.trf.xlu0
    %v2223 = vpop.trf.xlu0
    %v2224 = vpop.trf.xlu0
    %v2225 = vpop.trf.xlu0
    %v2226 = vpop.trf.xlu0
    %v2227 = vpop.trf.xlu0
    %v2228 = vpop.trf.xlu0
    %v2229 = vpop.trf.xlu0
    %v2230 = vpop.trf.xlu0
    %v2231 = vpop.trf.xlu0
    %v2232 = vpop.trf.xlu0
    %v2233 = vpack.c.bf16 %v2217, %v2217
    %2234 = vrot.lane.b32.xlu0 %v1941, 112
    %v2235 = vpop.permute.xlu0 %2234
    %v2237 = vsel %vm380, %v2235, 0
    %v2240 = vsel %vm384, %v2233, 0
    %2242 = vmatprep.subr.bf16.mxu0 0
    %2243 = vmatpush1.bf16.msra.mxu0 %v2240
    %2244 = vmatprep.subr.bf16.mxu0 0
    %2245 = vmatpush1.bf16.msra.mxu0 0
    %2246 = vmatprep.subr.bf16.mxu0 0
    %2247 = vmatpush1.bf16.msra.mxu0 0
    %2248 = vmatprep.subr.bf16.mxu0 0
    %2249 = vmatpush1.bf16.msra.mxu0 0
    %2250 = vmatprep.subr.bf16.mxu0 0
    %2251 = vmatpush1.bf16.msra.mxu0 0
    %2252 = vmatprep.subr.bf16.mxu0 0
    %2253 = vmatpush1.bf16.msra.mxu0 0
    %2254 = vmatprep.subr.bf16.mxu0 0
    %2255 = vmatpush1.bf16.msra.mxu0 0
    %2256 = vmatprep.subr.bf16.mxu0 0
    %2257 = vmatpush1.bf16.msra.mxu0 0
    %2258 = vmatprep.subr.bf16.mxu0 0
    %2259 = vmatpush1.bf16.msra.mxu0 0
    %2260 = vmatprep.subr.bf16.mxu0 0
    %2261 = vmatpush1.bf16.msra.mxu0 0
    %2262 = vmatprep.subr.bf16.mxu0 0
    %2263 = vmatpush1.bf16.msra.mxu0 0
    %2264 = vmatprep.subr.bf16.mxu0 0
    %2265 = vmatpush1.bf16.msra.mxu0 0
    %2266 = vmatprep.subr.bf16.mxu0 0
    %2267 = vmatpush1.bf16.msra.mxu0 0
    %2268 = vmatprep.subr.bf16.mxu0 0
    %2269 = vmatpush1.bf16.msra.mxu0 0
    %2270 = vmatprep.subr.bf16.mxu0 0
    %2271 = vmatpush1.bf16.msra.mxu0 0
    %2272 = vmatprep.subr.bf16.mxu0 0
    %2273 = vmatpush1.bf16.msra.mxu0 0
    %2274 = vmatprep.mubr.bf16.mxu0 0
    %2275 = vmatmul.mubr.bf16.gmra.mrb[0].mxu0 %v2237
    %v2276 = vpop.f32.mrb[0].mxu0
    %v2277 = vadd.f32 0.0, %v2276
    %v2278 = vpop.f32.mrb[0].mxu0
    %v2279 = vpop.f32.mrb[0].mxu0
    %v2280 = vpop.f32.mrb[0].mxu0
    %2281 = vdwg.mxu0
    %v2282 = vmul.f32 %v2277, 0.35355338
    %v2283 = vadd.f32 %v2282, %v432
    %v2284 = vsel %vm380, %v2283, -inf
    %2285 = vmax.xlane.f32.xlu0 %v2284
    %v2286 = vpop.xlane.xlu0 %2285
    %v2287 = vsub.f32 %v2283, %v2286
    %v2288 = vmul.f32 %v2287, 1.442695
    %v2289 = vpow.pop %v2288
    %v2290 = vsel %vm380, %v2289, 0.0
    %2291 = vadd.xlane.f32.xlu0 %v2290
    %v2292 = vpop.xlane.xlu0 %2291
    %v2293 = vrcp.pop %v2292
    %v2294 = vmul.f32 %v2289, %v2293
    %v2295 = vpack.c.bf16 %v2294, %v2294
    %2296 = vrot.lane.b32.xlu0 %v1941, 48
    %v2297 = vpop.permute.xlu0 %2296
    %v2299 = vsel %vm380, %v2295, 0
    %v2302 = vsel %vm384, %v2297, 0
    %2304 = vmatprep.subr.bf16.mxu0 0
    %2305 = vmatpush1.bf16.msra.mxu0 %v2302
    %2306 = vmatprep.subr.bf16.mxu0 0
    %2307 = vmatpush1.bf16.msra.mxu0 0
    %2308 = vmatprep.subr.bf16.mxu0 0
    %2309 = vmatpush1.bf16.msra.mxu0 0
    %2310 = vmatprep.subr.bf16.mxu0 0
    %2311 = vmatpush1.bf16.msra.mxu0 0
    %2312 = vmatprep.subr.bf16.mxu0 0
    %2313 = vmatpush1.bf16.msra.mxu0 0
    %2314 = vmatprep.subr.bf16.mxu0 0
    %2315 = vmatpush1.bf16.msra.mxu0 0
    %2316 = vmatprep.subr.bf16.mxu0 0
    %2317 = vmatpush1.bf16.msra.mxu0 0
    %2318 = vmatprep.subr.bf16.mxu0 0
    %2319 = vmatpush1.bf16.msra.mxu0 0
    %2320 = vmatprep.subr.bf16.mxu0 0
    %2321 = vmatpush1.bf16.msra.mxu0 0
    %2322 = vmatprep.subr.bf16.mxu0 0
    %2323 = vmatpush1.bf16.msra.mxu0 0
    %2324 = vmatprep.subr.bf16.mxu0 0
    %2325 = vmatpush1.bf16.msra.mxu0 0
    %2326 = vmatprep.subr.bf16.mxu0 0
    %2327 = vmatpush1.bf16.msra.mxu0 0
    %2328 = vmatprep.subr.bf16.mxu0 0
    %2329 = vmatpush1.bf16.msra.mxu0 0
    %2330 = vmatprep.subr.bf16.mxu0 0
    %2331 = vmatpush1.bf16.msra.mxu0 0
    %2332 = vmatprep.subr.bf16.mxu0 0
    %2333 = vmatpush1.bf16.msra.mxu0 0
    %2334 = vmatprep.subr.bf16.mxu0 0
    %2335 = vmatpush1.bf16.msra.mxu0 0
    %2336 = vmatprep.mubr.bf16.mxu0 0
    %2337 = vmatmul.mubr.bf16.gmra.mrb[0].mxu0 %v2299
    %v2338 = vpop.f32.mrb[0].mxu0
    %v2339 = vadd.f32 0.0, %v2338
    %v2340 = vpop.f32.mrb[0].mxu0
    %v2341 = vpop.f32.mrb[0].mxu0
    %v2342 = vpop.f32.mrb[0].mxu0
    %2343 = vdwg.mxu0
    %2344 = vrot.lane.b32.xlu0 %v1899, 72
    %v2345 = vpop.permute.xlu0 %2344
    %2347 = vxpose.xlu0.b32.start [1/16] %v2345, 128
    %2348 = vxpose.xlu0.b32.cont [2/16] 0.0, 128
    %2349 = vxpose.xlu0.b32.cont [3/16] 0.0, 128
    %2350 = vxpose.xlu0.b32.cont [4/16] 0.0, 128
    %2351 = vxpose.xlu0.b32.cont [5/16] 0.0, 128
    %2352 = vxpose.xlu0.b32.cont [6/16] 0.0, 128
    %2353 = vxpose.xlu0.b32.cont [7/16] 0.0, 128
    %2354 = vxpose.xlu0.b32.cont [8/16] 0.0, 128
    %2355 = vxpose.xlu0.b32.cont [9/16] 0.0, 128
    %2356 = vxpose.xlu0.b32.cont [10/16] 0.0, 128
    %2357 = vxpose.xlu0.b32.cont [11/16] 0.0, 128
    %2358 = vxpose.xlu0.b32.cont [12/16] 0.0, 128
    %2359 = vxpose.xlu0.b32.cont [13/16] 0.0, 128
    %2360 = vxpose.xlu0.b32.cont [14/16] 0.0, 128
    %2361 = vxpose.xlu0.b32.cont [15/16] 0.0, 128
    %2362 = vxpose.xlu0.b32.end [16/16] 0.0, 128
    %v2363 = vpop.trf.xlu0
    %v2364 = vpop.trf.xlu0
    %v2365 = vpop.trf.xlu0
    %v2366 = vpop.trf.xlu0
    %v2367 = vpop.trf.xlu0
    %v2368 = vpop.trf.xlu0
    %v2369 = vpop.trf.xlu0
    %v2370 = vpop.trf.xlu0
    %v2371 = vpop.trf.xlu0
    %v2372 = vpop.trf.xlu0
    %v2373 = vpop.trf.xlu0
    %v2374 = vpop.trf.xlu0
    %v2375 = vpop.trf.xlu0
    %v2376 = vpop.trf.xlu0
    %v2377 = vpop.trf.xlu0
    %v2378 = vpop.trf.xlu0
    %v2379 = vpack.c.bf16 %v2363, %v2363
    %2380 = vrot.lane.b32.xlu0 %v1941, 104
    %v2381 = vpop.permute.xlu0 %2380
    %v2383 = vsel %vm380, %v2381, 0
    %v2386 = vsel %vm384, %v2379, 0
    %2388 = vmatprep.subr.bf16.mxu0 0
    %2389 = vmatpush1.bf16.msra.mxu0 %v2386
    %2390 = vmatprep.subr.bf16.mxu0 0
    %2391 = vmatpush1.bf16.msra.mxu0 0
    %2392 = vmatprep.subr.bf16.mxu0 0
    %2393 = vmatpush1.bf16.msra.mxu0 0
    %2394 = vmatprep.subr.bf16.mxu0 0
    %2395 = vmatpush1.bf16.msra.mxu0 0
    %2396 = vmatprep.subr.bf16.mxu0 0
    %2397 = vmatpush1.bf16.msra.mxu0 0
    %2398 = vmatprep.subr.bf16.mxu0 0
    %2399 = vmatpush1.bf16.msra.mxu0 0
    %2400 = vmatprep.subr.bf16.mxu0 0
    %2401 = vmatpush1.bf16.msra.mxu0 0
    %2402 = vmatprep.subr.bf16.mxu0 0
    %2403 = vmatpush1.bf16.msra.mxu0 0
    %2404 = vmatprep.subr.bf16.mxu0 0
    %2405 = vmatpush1.bf16.msra.mxu0 0
    %2406 = vmatprep.subr.bf16.mxu0 0
    %2407 = vmatpush1.bf16.msra.mxu0 0
    %2408 = vmatprep.subr.bf16.mxu0 0
    %2409 = vmatpush1.bf16.msra.mxu0 0
    %2410 = vmatprep.subr.bf16.mxu0 0
    %2411 = vmatpush1.bf16.msra.mxu0 0
    %2412 = vmatprep.subr.bf16.mxu0 0
    %2413 = vmatpush1.bf16.msra.mxu0 0
    %2414 = vmatprep.subr.bf16.mxu0 0
    %2415 = vmatpush1.bf16.msra.mxu0 0
    %2416 = vmatprep.subr.bf16.mxu0 0
    %2417 = vmatpush1.bf16.msra.mxu0 0
    %2418 = vmatprep.subr.bf16.mxu0 0
    %2419 = vmatpush1.bf16.msra.mxu0 0
    %2420 = vmatprep.mubr.bf16.mxu0 0
    %2421 = vmatmul.mubr.bf16.gmra.mrb[0].mxu0 %v2383
    %v2422 = vpop.f32.mrb[0].mxu0
    %v2423 = vadd.f32 0.0, %v2422
    %v2424 = vpop.f32.mrb[0].mxu0
    %v2425 = vpop.f32.mrb[0].mxu0
    %v2426 = vpop.f32.mrb[0].mxu0
    %2427 = vdwg.mxu0
    %v2428 = vmul.f32 %v2423, 0.35355338
    %v2429 = vadd.f32 %v2428, %v432
    %v2430 = vsel %vm380, %v2429, -inf
    %2431 = vmax.xlane.f32.xlu0 %v2430
    %v2432 = vpop.xlane.xlu0 %2431
    %v2433 = vsub.f32 %v2429, %v2432
    %v2434 = vmul.f32 %v2433, 1.442695
    %v2435 = vpow.pop %v2434
    %v2436 = vsel %vm380, %v2435, 0.0
    %2437 = vadd.xlane.f32.xlu0 %v2436
    %v2438 = vpop.xlane.xlu0 %2437
    %v2439 = vrcp.pop %v2438
    %v2440 = vmul.f32 %v2435, %v2439
    %v2441 = vpack.c.bf16 %v2440, %v2440
    %2442 = vrot.lane.b32.xlu0 %v1941, 40
    %v2443 = vpop.permute.xlu0 %2442
    %v2445 = vsel %vm380, %v2441, 0
    %v2448 = vsel %vm384, %v2443, 0
    %2450 = vmatprep.subr.bf16.mxu0 0
    %2451 = vmatpush1.bf16.msra.mxu0 %v2448
    %2452 = vmatprep.subr.bf16.mxu0 0
    %2453 = vmatpush1.bf16.msra.mxu0 0
    %2454 = vmatprep.subr.bf16.mxu0 0
    %2455 = vmatpush1.bf16.msra.mxu0 0
    %2456 = vmatprep.subr.bf16.mxu0 0
    %2457 = vmatpush1.bf16.msra.mxu0 0
    %2458 = vmatprep.subr.bf16.mxu0 0
    %2459 = vmatpush1.bf16.msra.mxu0 0
    %2460 = vmatprep.subr.bf16.mxu0 0
    %2461 = vmatpush1.bf16.msra.mxu0 0
    %2462 = vmatprep.subr.bf16.mxu0 0
    %2463 = vmatpush1.bf16.msra.mxu0 0
    %2464 = vmatprep.subr.bf16.mxu0 0
    %2465 = vmatpush1.bf16.msra.mxu0 0
    %2466 = vmatprep.subr.bf16.mxu0 0
    %2467 = vmatpush1.bf16.msra.mxu0 0
    %2468 = vmatprep.subr.bf16.mxu0 0
    %2469 = vmatpush1.bf16.msra.mxu0 0
    %2470 = vmatprep.subr.bf16.mxu0 0
    %2471 = vmatpush1.bf16.msra.mxu0 0
    %2472 = vmatprep.subr.bf16.mxu0 0
    %2473 = vmatpush1.bf16.msra.mxu0 0
    %2474 = vmatprep.subr.bf16.mxu0 0
    %2475 = vmatpush1.bf16.msra.mxu0 0
    %2476 = vmatprep.subr.bf16.mxu0 0
    %2477 = vmatpush1.bf16.msra.mxu0 0
    %2478 = vmatprep.subr.bf16.mxu0 0
    %2479 = vmatpush1.bf16.msra.mxu0 0
    %2480 = vmatprep.subr.bf16.mxu0 0
    %2481 = vmatpush1.bf16.msra.mxu0 0
    %2482 = vmatprep.mubr.bf16.mxu0 0
    %2483 = vmatmul.mubr.bf16.gmra.mrb[0].mxu0 %v2445
    %v2484 = vpop.f32.mrb[0].mxu0
    %v2485 = vadd.f32 0.0, %v2484
    %v2486 = vpop.f32.mrb[0].mxu0
    %v2487 = vpop.f32.mrb[0].mxu0
    %v2488 = vpop.f32.mrb[0].mxu0
    %2489 = vdwg.mxu0
    %2491 = vrot.lane.b32.xlu0 %v2193, 8
    %v2492 = vpop.permute.xlu0 %2491
    %2495 = vrot.lane.b32.xlu0 %v2339, 16
    %v2496 = vpop.permute.xlu0 %2495
    %2499 = vrot.lane.b32.xlu0 %v2485, 24
    %v2500 = vpop.permute.xlu0 %2499
    %v2502 = vsel %vm380, %v2047, %v2492
    %v2503 = vsel %vm946, %v2502, %v2496
    %v2504 = vsel %vm948, %v2503, %v2500
    %2506 = vrot.lane.b32.xlu0 %v1902, 96
    %v2507 = vpop.permute.xlu0 %2506
    %2509 = vxpose.xlu0.b32.start [1/16] %v2507, 128
    %2510 = vxpose.xlu0.b32.cont [2/16] 0.0, 128
    %2511 = vxpose.xlu0.b32.cont [3/16] 0.0, 128
    %2512 = vxpose.xlu0.b32.cont [4/16] 0.0, 128
    %2513 = vxpose.xlu0.b32.cont [5/16] 0.0, 128
    %2514 = vxpose.xlu0.b32.cont [6/16] 0.0, 128
    %2515 = vxpose.xlu0.b32.cont [7/16] 0.0, 128
    %2516 = vxpose.xlu0.b32.cont [8/16] 0.0, 128
    %2517 = vxpose.xlu0.b32.cont [9/16] 0.0, 128
    %2518 = vxpose.xlu0.b32.cont [10/16] 0.0, 128
    %2519 = vxpose.xlu0.b32.cont [11/16] 0.0, 128
    %2520 = vxpose.xlu0.b32.cont [12/16] 0.0, 128
    %2521 = vxpose.xlu0.b32.cont [13/16] 0.0, 128
    %2522 = vxpose.xlu0.b32.cont [14/16] 0.0, 128
    %2523 = vxpose.xlu0.b32.cont [15/16] 0.0, 128
    %2524 = vxpose.xlu0.b32.end [16/16] 0.0, 128
    %v2525 = vpop.trf.xlu0
    %v2526 = vpop.trf.xlu0
    %v2527 = vpop.trf.xlu0
    %v2528 = vpop.trf.xlu0
    %v2529 = vpop.trf.xlu0
    %v2530 = vpop.trf.xlu0
    %v2531 = vpop.trf.xlu0
    %v2532 = vpop.trf.xlu0
    %v2533 = vpop.trf.xlu0
    %v2534 = vpop.trf.xlu0
    %v2535 = vpop.trf.xlu0
    %v2536 = vpop.trf.xlu0
    %v2537 = vpop.trf.xlu0
    %v2538 = vpop.trf.xlu0
    %v2539 = vpop.trf.xlu0
    %v2540 = vpop.trf.xlu0
    %v2541 = vpack.c.bf16 %v1902, %v1902
    %v2542 = vpack.c.bf16 %v2525, %v2525
    %v2544 = vsel %vm380, %v2541, 0
    %v2547 = vsel %vm384, %v2542, 0
    %2549 = vmatprep.subr.bf16.mxu0 0
    %2550 = vmatpush1.bf16.msra.mxu0 %v2547
    %2551 = vmatprep.subr.bf16.mxu0 0
    %2552 = vmatpush1.bf16.msra.mxu0 0
    %2553 = vmatprep.subr.bf16.mxu0 0
    %2554 = vmatpush1.bf16.msra.mxu0 0
    %2555 = vmatprep.subr.bf16.mxu0 0
    %2556 = vmatpush1.bf16.msra.mxu0 0
    %2557 = vmatprep.subr.bf16.mxu0 0
    %2558 = vmatpush1.bf16.msra.mxu0 0
    %2559 = vmatprep.subr.bf16.mxu0 0
    %2560 = vmatpush1.bf16.msra.mxu0 0
    %2561 = vmatprep.subr.bf16.mxu0 0
    %2562 = vmatpush1.bf16.msra.mxu0 0
    %2563 = vmatprep.subr.bf16.mxu0 0
    %2564 = vmatpush1.bf16.msra.mxu0 0
    %2565 = vmatprep.subr.bf16.mxu0 0
    %2566 = vmatpush1.bf16.msra.mxu0 0
    %2567 = vmatprep.subr.bf16.mxu0 0
    %2568 = vmatpush1.bf16.msra.mxu0 0
    %2569 = vmatprep.subr.bf16.mxu0 0
    %2570 = vmatpush1.bf16.msra.mxu0 0
    %2571 = vmatprep.subr.bf16.mxu0 0
    %2572 = vmatpush1.bf16.msra.mxu0 0
    %2573 = vmatprep.subr.bf16.mxu0 0
    %2574 = vmatpush1.bf16.msra.mxu0 0
    %2575 = vmatprep.subr.bf16.mxu0 0
    %2576 = vmatpush1.bf16.msra.mxu0 0
    %2577 = vmatprep.subr.bf16.mxu0 0
    %2578 = vmatpush1.bf16.msra.mxu0 0
    %2579 = vmatprep.subr.bf16.mxu0 0
    %2580 = vmatpush1.bf16.msra.mxu0 0
    %2581 = vmatprep.mubr.bf16.mxu0 0
    %2582 = vmatmul.mubr.bf16.gmra.mrb[0].mxu0 %v2544
    %v2583 = vpop.f32.mrb[0].mxu0
    %v2584 = vadd.f32 0.0, %v2583
    %v2585 = vpop.f32.mrb[0].mxu0
    %v2586 = vpop.f32.mrb[0].mxu0
    %v2587 = vpop.f32.mrb[0].mxu0
    %2588 = vdwg.mxu0
    %v2589 = vmul.f32 %v2584, 0.35355338
    %v2590 = vadd.f32 %v2589, %v1038
    %v2591 = vsel %vm380, %v2590, -inf
    %2592 = vmax.xlane.f32.xlu0 %v2591
    %v2593 = vpop.xlane.xlu0 %2592
    %v2594 = vsub.f32 %v2590, %v2593
    %v2595 = vmul.f32 %v2594, 1.442695
    %v2596 = vpow.pop %v2595
    %v2597 = vsel %vm380, %v2596, 0.0
    %2598 = vadd.xlane.f32.xlu0 %v2597
    %v2599 = vpop.xlane.xlu0 %2598
    %v2600 = vrcp.pop %v2599
    %v2601 = vmul.f32 %v2596, %v2600
    %v2602 = vpack.c.bf16 %v2601, %v2601
    %2604 = vrot.lane.b32.xlu0 %v2541, 64
    %v2605 = vpop.permute.xlu0 %2604
    %v2607 = vsel %vm380, %v2602, 0
    %v2610 = vsel %vm384, %v2605, 0
    %2612 = vmatprep.subr.bf16.mxu0 0
    %2613 = vmatpush1.bf16.msra.mxu0 %v2610
    %2614 = vmatprep.subr.bf16.mxu0 0
    %2615 = vmatpush1.bf16.msra.mxu0 0
    %2616 = vmatprep.subr.bf16.mxu0 0
    %2617 = vmatpush1.bf16.msra.mxu0 0
    %2618 = vmatprep.subr.bf16.mxu0 0
    %2619 = vmatpush1.bf16.msra.mxu0 0
    %2620 = vmatprep.subr.bf16.mxu0 0
    %2621 = vmatpush1.bf16.msra.mxu0 0
    %2622 = vmatprep.subr.bf16.mxu0 0
    %2623 = vmatpush1.bf16.msra.mxu0 0
    %2624 = vmatprep.subr.bf16.mxu0 0
    %2625 = vmatpush1.bf16.msra.mxu0 0
    %2626 = vmatprep.subr.bf16.mxu0 0
    %2627 = vmatpush1.bf16.msra.mxu0 0
    %2628 = vmatprep.subr.bf16.mxu0 0
    %2629 = vmatpush1.bf16.msra.mxu0 0
    %2630 = vmatprep.subr.bf16.mxu0 0
    %2631 = vmatpush1.bf16.msra.mxu0 0
    %2632 = vmatprep.subr.bf16.mxu0 0
    %2633 = vmatpush1.bf16.msra.mxu0 0
    %2634 = vmatprep.subr.bf16.mxu0 0
    %2635 = vmatpush1.bf16.msra.mxu0 0
    %2636 = vmatprep.subr.bf16.mxu0 0
    %2637 = vmatpush1.bf16.msra.mxu0 0
    %2638 = vmatprep.subr.bf16.mxu0 0
    %2639 = vmatpush1.bf16.msra.mxu0 0
    %2640 = vmatprep.subr.bf16.mxu0 0
    %2641 = vmatpush1.bf16.msra.mxu0 0
    %2642 = vmatprep.subr.bf16.mxu0 0
    %2643 = vmatpush1.bf16.msra.mxu0 0
    %2644 = vmatprep.mubr.bf16.mxu0 0
    %2645 = vmatmul.mubr.bf16.gmra.mrb[0].mxu0 %v2607
    %v2646 = vpop.f32.mrb[0].mxu0
    %v2647 = vadd.f32 0.0, %v2646
    %v2648 = vpop.f32.mrb[0].mxu0
    %v2649 = vpop.f32.mrb[0].mxu0
    %v2650 = vpop.f32.mrb[0].mxu0
    %2651 = vdwg.mxu0
    %2652 = vrot.lane.b32.xlu0 %v1902, 88
    %v2653 = vpop.permute.xlu0 %2652
    %2655 = vxpose.xlu0.b32.start [1/16] %v2653, 128
    %2656 = vxpose.xlu0.b32.cont [2/16] 0.0, 128
    %2657 = vxpose.xlu0.b32.cont [3/16] 0.0, 128
    %2658 = vxpose.xlu0.b32.cont [4/16] 0.0, 128
    %2659 = vxpose.xlu0.b32.cont [5/16] 0.0, 128
    %2660 = vxpose.xlu0.b32.cont [6/16] 0.0, 128
    %2661 = vxpose.xlu0.b32.cont [7/16] 0.0, 128
    %2662 = vxpose.xlu0.b32.cont [8/16] 0.0, 128
    %2663 = vxpose.xlu0.b32.cont [9/16] 0.0, 128
    %2664 = vxpose.xlu0.b32.cont [10/16] 0.0, 128
    %2665 = vxpose.xlu0.b32.cont [11/16] 0.0, 128
    %2666 = vxpose.xlu0.b32.cont [12/16] 0.0, 128
    %2667 = vxpose.xlu0.b32.cont [13/16] 0.0, 128
    %2668 = vxpose.xlu0.b32.cont [14/16] 0.0, 128
    %2669 = vxpose.xlu0.b32.cont [15/16] 0.0, 128
    %2670 = vxpose.xlu0.b32.end [16/16] 0.0, 128
    %v2671 = vpop.trf.xlu0
    %v2672 = vpop.trf.xlu0
    %v2673 = vpop.trf.xlu0
    %v2674 = vpop.trf.xlu0
    %v2675 = vpop.trf.xlu0
    %v2676 = vpop.trf.xlu0
    %v2677 = vpop.trf.xlu0
    %v2678 = vpop.trf.xlu0
    %v2679 = vpop.trf.xlu0
    %v2680 = vpop.trf.xlu0
    %v2681 = vpop.trf.xlu0
    %v2682 = vpop.trf.xlu0
    %v2683 = vpop.trf.xlu0
    %v2684 = vpop.trf.xlu0
    %v2685 = vpop.trf.xlu0
    %v2686 = vpop.trf.xlu0
    %v2687 = vpack.c.bf16 %v2671, %v2671
    %2688 = vrot.lane.b32.xlu0 %v2541, 120
    %v2689 = vpop.permute.xlu0 %2688
    %v2691 = vsel %vm380, %v2689, 0
    %v2694 = vsel %vm384, %v2687, 0
    %2696 = vmatprep.subr.bf16.mxu0 0
    %2697 = vmatpush1.bf16.msra.mxu0 %v2694
    %2698 = vmatprep.subr.bf16.mxu0 0
    %2699 = vmatpush1.bf16.msra.mxu0 0
    %2700 = vmatprep.subr.bf16.mxu0 0
    %2701 = vmatpush1.bf16.msra.mxu0 0
    %2702 = vmatprep.subr.bf16.mxu0 0
    %2703 = vmatpush1.bf16.msra.mxu0 0
    %2704 = vmatprep.subr.bf16.mxu0 0
    %2705 = vmatpush1.bf16.msra.mxu0 0
    %2706 = vmatprep.subr.bf16.mxu0 0
    %2707 = vmatpush1.bf16.msra.mxu0 0
    %2708 = vmatprep.subr.bf16.mxu0 0
    %2709 = vmatpush1.bf16.msra.mxu0 0
    %2710 = vmatprep.subr.bf16.mxu0 0
    %2711 = vmatpush1.bf16.msra.mxu0 0
    %2712 = vmatprep.subr.bf16.mxu0 0
    %2713 = vmatpush1.bf16.msra.mxu0 0
    %2714 = vmatprep.subr.bf16.mxu0 0
    %2715 = vmatpush1.bf16.msra.mxu0 0
    %2716 = vmatprep.subr.bf16.mxu0 0
    %2717 = vmatpush1.bf16.msra.mxu0 0
    %2718 = vmatprep.subr.bf16.mxu0 0
    %2719 = vmatpush1.bf16.msra.mxu0 0
    %2720 = vmatprep.subr.bf16.mxu0 0
    %2721 = vmatpush1.bf16.msra.mxu0 0
    %2722 = vmatprep.subr.bf16.mxu0 0
    %2723 = vmatpush1.bf16.msra.mxu0 0
    %2724 = vmatprep.subr.bf16.mxu0 0
    %2725 = vmatpush1.bf16.msra.mxu0 0
    %2726 = vmatprep.subr.bf16.mxu0 0
    %2727 = vmatpush1.bf16.msra.mxu0 0
    %2728 = vmatprep.mubr.bf16.mxu0 0
    %2729 = vmatmul.mubr.bf16.gmra.mrb[0].mxu0 %v2691
    %v2730 = vpop.f32.mrb[0].mxu0
    %v2731 = vadd.f32 0.0, %v2730
    %v2732 = vpop.f32.mrb[0].mxu0
    %v2733 = vpop.f32.mrb[0].mxu0
    %v2734 = vpop.f32.mrb[0].mxu0
    %2735 = vdwg.mxu0
    %v2736 = vmul.f32 %v2731, 0.35355338
    %v2737 = vadd.f32 %v2736, %v1038
    %v2738 = vsel %vm380, %v2737, -inf
    %2739 = vmax.xlane.f32.xlu0 %v2738
    %v2740 = vpop.xlane.xlu0 %2739
    %v2741 = vsub.f32 %v2737, %v2740
    %v2742 = vmul.f32 %v2741, 1.442695
    %v2743 = vpow.pop %v2742
    %v2744 = vsel %vm380, %v2743, 0.0
    %2745 = vadd.xlane.f32.xlu0 %v2744
    %v2746 = vpop.xlane.xlu0 %2745
    %v2747 = vrcp.pop %v2746
    %v2748 = vmul.f32 %v2743, %v2747
    %v2749 = vpack.c.bf16 %v2748, %v2748
    %2750 = vrot.lane.b32.xlu0 %v2541, 56
    %v2751 = vpop.permute.xlu0 %2750
    %v2753 = vsel %vm380, %v2749, 0
    %v2756 = vsel %vm384, %v2751, 0
    %2758 = vmatprep.subr.bf16.mxu0 0
    %2759 = vmatpush1.bf16.msra.mxu0 %v2756
    %2760 = vmatprep.subr.bf16.mxu0 0
    %2761 = vmatpush1.bf16.msra.mxu0 0
    %2762 = vmatprep.subr.bf16.mxu0 0
    %2763 = vmatpush1.bf16.msra.mxu0 0
    %2764 = vmatprep.subr.bf16.mxu0 0
    %2765 = vmatpush1.bf16.msra.mxu0 0
    %2766 = vmatprep.subr.bf16.mxu0 0
    %2767 = vmatpush1.bf16.msra.mxu0 0
    %2768 = vmatprep.subr.bf16.mxu0 0
    %2769 = vmatpush1.bf16.msra.mxu0 0
    %2770 = vmatprep.subr.bf16.mxu0 0
    %2771 = vmatpush1.bf16.msra.mxu0 0
    %2772 = vmatprep.subr.bf16.mxu0 0
    %2773 = vmatpush1.bf16.msra.mxu0 0
    %2774 = vmatprep.subr.bf16.mxu0 0
    %2775 = vmatpush1.bf16.msra.mxu0 0
    %2776 = vmatprep.subr.bf16.mxu0 0
    %2777 = vmatpush1.bf16.msra.mxu0 0
    %2778 = vmatprep.subr.bf16.mxu0 0
    %2779 = vmatpush1.bf16.msra.mxu0 0
    %2780 = vmatprep.subr.bf16.mxu0 0
    %2781 = vmatpush1.bf16.msra.mxu0 0
    %2782 = vmatprep.subr.bf16.mxu0 0
    %2783 = vmatpush1.bf16.msra.mxu0 0
    %2784 = vmatprep.subr.bf16.mxu0 0
    %2785 = vmatpush1.bf16.msra.mxu0 0
    %2786 = vmatprep.subr.bf16.mxu0 0
    %2787 = vmatpush1.bf16.msra.mxu0 0
    %2788 = vmatprep.subr.bf16.mxu0 0
    %2789 = vmatpush1.bf16.msra.mxu0 0
    %2790 = vmatprep.mubr.bf16.mxu0 0
    %2791 = vmatmul.mubr.bf16.gmra.mrb[0].mxu0 %v2753
    %v2792 = vpop.f32.mrb[0].mxu0
    %v2793 = vadd.f32 0.0, %v2792
    %v2794 = vpop.f32.mrb[0].mxu0
    %v2795 = vpop.f32.mrb[0].mxu0
    %v2796 = vpop.f32.mrb[0].mxu0
    %2797 = vdwg.mxu0
    %2798 = vrot.lane.b32.xlu0 %v1902, 80
    %v2799 = vpop.permute.xlu0 %2798
    %2801 = vxpose.xlu0.b32.start [1/16] %v2799, 128
    %2802 = vxpose.xlu0.b32.cont [2/16] 0.0, 128
    %2803 = vxpose.xlu0.b32.cont [3/16] 0.0, 128
    %2804 = vxpose.xlu0.b32.cont [4/16] 0.0, 128
    %2805 = vxpose.xlu0.b32.cont [5/16] 0.0, 128
    %2806 = vxpose.xlu0.b32.cont [6/16] 0.0, 128
    %2807 = vxpose.xlu0.b32.cont [7/16] 0.0, 128
    %2808 = vxpose.xlu0.b32.cont [8/16] 0.0, 128
    %2809 = vxpose.xlu0.b32.cont [9/16] 0.0, 128
    %2810 = vxpose.xlu0.b32.cont [10/16] 0.0, 128
    %2811 = vxpose.xlu0.b32.cont [11/16] 0.0, 128
    %2812 = vxpose.xlu0.b32.cont [12/16] 0.0, 128
    %2813 = vxpose.xlu0.b32.cont [13/16] 0.0, 128
    %2814 = vxpose.xlu0.b32.cont [14/16] 0.0, 128
    %2815 = vxpose.xlu0.b32.cont [15/16] 0.0, 128
    %2816 = vxpose.xlu0.b32.end [16/16] 0.0, 128
    %v2817 = vpop.trf.xlu0
    %v2818 = vpop.trf.xlu0
    %v2819 = vpop.trf.xlu0
    %v2820 = vpop.trf.xlu0
    %v2821 = vpop.trf.xlu0
    %v2822 = vpop.trf.xlu0
    %v2823 = vpop.trf.xlu0
    %v2824 = vpop.trf.xlu0
    %v2825 = vpop.trf.xlu0
    %v2826 = vpop.trf.xlu0
    %v2827 = vpop.trf.xlu0
    %v2828 = vpop.trf.xlu0
    %v2829 = vpop.trf.xlu0
    %v2830 = vpop.trf.xlu0
    %v2831 = vpop.trf.xlu0
    %v2832 = vpop.trf.xlu0
    %v2833 = vpack.c.bf16 %v2817, %v2817
    %2834 = vrot.lane.b32.xlu0 %v2541, 112
    %v2835 = vpop.permute.xlu0 %2834
    %v2837 = vsel %vm380, %v2835, 0
    %v2840 = vsel %vm384, %v2833, 0
    %2842 = vmatprep.subr.bf16.mxu0 0
    %2843 = vmatpush1.bf16.msra.mxu0 %v2840
    %2844 = vmatprep.subr.bf16.mxu0 0
    %2845 = vmatpush1.bf16.msra.mxu0 0
    %2846 = vmatprep.subr.bf16.mxu0 0
    %2847 = vmatpush1.bf16.msra.mxu0 0
    %2848 = vmatprep.subr.bf16.mxu0 0
    %2849 = vmatpush1.bf16.msra.mxu0 0
    %2850 = vmatprep.subr.bf16.mxu0 0
    %2851 = vmatpush1.bf16.msra.mxu0 0
    %2852 = vmatprep.subr.bf16.mxu0 0
    %2853 = vmatpush1.bf16.msra.mxu0 0
    %2854 = vmatprep.subr.bf16.mxu0 0
    %2855 = vmatpush1.bf16.msra.mxu0 0
    %2856 = vmatprep.subr.bf16.mxu0 0
    %2857 = vmatpush1.bf16.msra.mxu0 0
    %2858 = vmatprep.subr.bf16.mxu0 0
    %2859 = vmatpush1.bf16.msra.mxu0 0
    %2860 = vmatprep.subr.bf16.mxu0 0
    %2861 = vmatpush1.bf16.msra.mxu0 0
    %2862 = vmatprep.subr.bf16.mxu0 0
    %2863 = vmatpush1.bf16.msra.mxu0 0
    %2864 = vmatprep.subr.bf16.mxu0 0
    %2865 = vmatpush1.bf16.msra.mxu0 0
    %2866 = vmatprep.subr.bf16.mxu0 0
    %2867 = vmatpush1.bf16.msra.mxu0 0
    %2868 = vmatprep.subr.bf16.mxu0 0
    %2869 = vmatpush1.bf16.msra.mxu0 0
    %2870 = vmatprep.subr.bf16.mxu0 0
    %2871 = vmatpush1.bf16.msra.mxu0 0
    %2872 = vmatprep.subr.bf16.mxu0 0
    %2873 = vmatpush1.bf16.msra.mxu0 0
    %2874 = vmatprep.mubr.bf16.mxu0 0
    %2875 = vmatmul.mubr.bf16.gmra.mrb[0].mxu0 %v2837
    %v2876 = vpop.f32.mrb[0].mxu0
    %v2877 = vadd.f32 0.0, %v2876
    %v2878 = vpop.f32.mrb[0].mxu0
    %v2879 = vpop.f32.mrb[0].mxu0
    %v2880 = vpop.f32.mrb[0].mxu0
    %2881 = vdwg.mxu0
    %v2882 = vmul.f32 %v2877, 0.35355338
    %v2883 = vadd.f32 %v2882, %v1038
    %v2884 = vsel %vm380, %v2883, -inf
    %2885 = vmax.xlane.f32.xlu0 %v2884
    %v2886 = vpop.xlane.xlu0 %2885
    %v2887 = vsub.f32 %v2883, %v2886
    %v2888 = vmul.f32 %v2887, 1.442695
    %v2889 = vpow.pop %v2888
    %v2890 = vsel %vm380, %v2889, 0.0
    %2891 = vadd.xlane.f32.xlu0 %v2890
    %v2892 = vpop.xlane.xlu0 %2891
    %v2893 = vrcp.pop %v2892
    %v2894 = vmul.f32 %v2889, %v2893
    %v2895 = vpack.c.bf16 %v2894, %v2894
    %2896 = vrot.lane.b32.xlu0 %v2541, 48
    %v2897 = vpop.permute.xlu0 %2896
    %v2899 = vsel %vm380, %v2895, 0
    %v2902 = vsel %vm384, %v2897, 0
    %2904 = vmatprep.subr.bf16.mxu0 0
    %2905 = vmatpush1.bf16.msra.mxu0 %v2902
    %2906 = vmatprep.subr.bf16.mxu0 0
    %2907 = vmatpush1.bf16.msra.mxu0 0
    %2908 = vmatprep.subr.bf16.mxu0 0
    %2909 = vmatpush1.bf16.msra.mxu0 0
    %2910 = vmatprep.subr.bf16.mxu0 0
    %2911 = vmatpush1.bf16.msra.mxu0 0
    %2912 = vmatprep.subr.bf16.mxu0 0
    %2913 = vmatpush1.bf16.msra.mxu0 0
    %2914 = vmatprep.subr.bf16.mxu0 0
    %2915 = vmatpush1.bf16.msra.mxu0 0
    %2916 = vmatprep.subr.bf16.mxu0 0
    %2917 = vmatpush1.bf16.msra.mxu0 0
    %2918 = vmatprep.subr.bf16.mxu0 0
    %2919 = vmatpush1.bf16.msra.mxu0 0
    %2920 = vmatprep.subr.bf16.mxu0 0
    %2921 = vmatpush1.bf16.msra.mxu0 0
    %2922 = vmatprep.subr.bf16.mxu0 0
    %2923 = vmatpush1.bf16.msra.mxu0 0
    %2924 = vmatprep.subr.bf16.mxu0 0
    %2925 = vmatpush1.bf16.msra.mxu0 0
    %2926 = vmatprep.subr.bf16.mxu0 0
    %2927 = vmatpush1.bf16.msra.mxu0 0
    %2928 = vmatprep.subr.bf16.mxu0 0
    %2929 = vmatpush1.bf16.msra.mxu0 0
    %2930 = vmatprep.subr.bf16.mxu0 0
    %2931 = vmatpush1.bf16.msra.mxu0 0
    %2932 = vmatprep.subr.bf16.mxu0 0
    %2933 = vmatpush1.bf16.msra.mxu0 0
    %2934 = vmatprep.subr.bf16.mxu0 0
    %2935 = vmatpush1.bf16.msra.mxu0 0
    %2936 = vmatprep.mubr.bf16.mxu0 0
    %2937 = vmatmul.mubr.bf16.gmra.mrb[0].mxu0 %v2899
    %v2938 = vpop.f32.mrb[0].mxu0
    %v2939 = vadd.f32 0.0, %v2938
    %v2940 = vpop.f32.mrb[0].mxu0
    %v2941 = vpop.f32.mrb[0].mxu0
    %v2942 = vpop.f32.mrb[0].mxu0
    %2943 = vdwg.mxu0
    %2944 = vrot.lane.b32.xlu0 %v1902, 72
    %v2945 = vpop.permute.xlu0 %2944
    %2947 = vxpose.xlu0.b32.start [1/16] %v2945, 128
    %2948 = vxpose.xlu0.b32.cont [2/16] 0.0, 128
    %2949 = vxpose.xlu0.b32.cont [3/16] 0.0, 128
    %2950 = vxpose.xlu0.b32.cont [4/16] 0.0, 128
    %2951 = vxpose.xlu0.b32.cont [5/16] 0.0, 128
    %2952 = vxpose.xlu0.b32.cont [6/16] 0.0, 128
    %2953 = vxpose.xlu0.b32.cont [7/16] 0.0, 128
    %2954 = vxpose.xlu0.b32.cont [8/16] 0.0, 128
    %2955 = vxpose.xlu0.b32.cont [9/16] 0.0, 128
    %2956 = vxpose.xlu0.b32.cont [10/16] 0.0, 128
    %2957 = vxpose.xlu0.b32.cont [11/16] 0.0, 128
    %2958 = vxpose.xlu0.b32.cont [12/16] 0.0, 128
    %2959 = vxpose.xlu0.b32.cont [13/16] 0.0, 128
    %2960 = vxpose.xlu0.b32.cont [14/16] 0.0, 128
    %2961 = vxpose.xlu0.b32.cont [15/16] 0.0, 128
    %2962 = vxpose.xlu0.b32.end [16/16] 0.0, 128
    %v2963 = vpop.trf.xlu0
    %v2964 = vpop.trf.xlu0
    %v2965 = vpop.trf.xlu0
    %v2966 = vpop.trf.xlu0
    %v2967 = vpop.trf.xlu0
    %v2968 = vpop.trf.xlu0
    %v2969 = vpop.trf.xlu0
    %v2970 = vpop.trf.xlu0
    %v2971 = vpop.trf.xlu0
    %v2972 = vpop.trf.xlu0
    %v2973 = vpop.trf.xlu0
    %v2974 = vpop.trf.xlu0
    %v2975 = vpop.trf.xlu0
    %v2976 = vpop.trf.xlu0
    %v2977 = vpop.trf.xlu0
    %v2978 = vpop.trf.xlu0
    %v2979 = vpack.c.bf16 %v2963, %v2963
    %2980 = vrot.lane.b32.xlu0 %v2541, 104
    %v2981 = vpop.permute.xlu0 %2980
    %v2983 = vsel %vm380, %v2981, 0
    %v2986 = vsel %vm384, %v2979, 0
    %2988 = vmatprep.subr.bf16.mxu0 0
    %2989 = vmatpush1.bf16.msra.mxu0 %v2986
    %2990 = vmatprep.subr.bf16.mxu0 0
    %2991 = vmatpush1.bf16.msra.mxu0 0
    %2992 = vmatprep.subr.bf16.mxu0 0
    %2993 = vmatpush1.bf16.msra.mxu0 0
    %2994 = vmatprep.subr.bf16.mxu0 0
    %2995 = vmatpush1.bf16.msra.mxu0 0
    %2996 = vmatprep.subr.bf16.mxu0 0
    %2997 = vmatpush1.bf16.msra.mxu0 0
    %2998 = vmatprep.subr.bf16.mxu0 0
    %2999 = vmatpush1.bf16.msra.mxu0 0
    %3000 = vmatprep.subr.bf16.mxu0 0
    %3001 = vmatpush1.bf16.msra.mxu0 0
    %3002 = vmatprep.subr.bf16.mxu0 0
    %3003 = vmatpush1.bf16.msra.mxu0 0
    %3004 = vmatprep.subr.bf16.mxu0 0
    %3005 = vmatpush1.bf16.msra.mxu0 0
    %3006 = vmatprep.subr.bf16.mxu0 0
    %3007 = vmatpush1.bf16.msra.mxu0 0
    %3008 = vmatprep.subr.bf16.mxu0 0
    %3009 = vmatpush1.bf16.msra.mxu0 0
    %3010 = vmatprep.subr.bf16.mxu0 0
    %3011 = vmatpush1.bf16.msra.mxu0 0
    %3012 = vmatprep.subr.bf16.mxu0 0
    %3013 = vmatpush1.bf16.msra.mxu0 0
    %3014 = vmatprep.subr.bf16.mxu0 0
    %3015 = vmatpush1.bf16.msra.mxu0 0
    %3016 = vmatprep.subr.bf16.mxu0 0
    %3017 = vmatpush1.bf16.msra.mxu0 0
    %3018 = vmatprep.subr.bf16.mxu0 0
    %3019 = vmatpush1.bf16.msra.mxu0 0
    %3020 = vmatprep.mubr.bf16.mxu0 0
    %3021 = vmatmul.mubr.bf16.gmra.mrb[0].mxu0 %v2983
    %v3022 = vpop.f32.mrb[0].mxu0
    %v3023 = vadd.f32 0.0, %v3022
    %v3024 = vpop.f32.mrb[0].mxu0
    %v3025 = vpop.f32.mrb[0].mxu0
    %v3026 = vpop.f32.mrb[0].mxu0
    %3027 = vdwg.mxu0
    %v3028 = vmul.f32 %v3023, 0.35355338
    %v3029 = vadd.f32 %v3028, %v1038
    %v3030 = vsel %vm380, %v3029, -inf
    %3031 = vmax.xlane.f32.xlu0 %v3030
    %v3032 = vpop.xlane.xlu0 %3031
    %v3033 = vsub.f32 %v3029, %v3032
    %v3034 = vmul.f32 %v3033, 1.442695
    %v3035 = vpow.pop %v3034
    %v3036 = vsel %vm380, %v3035, 0.0
    %3037 = vadd.xlane.f32.xlu0 %v3036
    %v3038 = vpop.xlane.xlu0 %3037
    %v3039 = vrcp.pop %v3038
    %v3040 = vmul.f32 %v3035, %v3039
    %v3041 = vpack.c.bf16 %v3040, %v3040
    %3042 = vrot.lane.b32.xlu0 %v2541, 40
    %v3043 = vpop.permute.xlu0 %3042
    %v3045 = vsel %vm380, %v3041, 0
    %v3048 = vsel %vm384, %v3043, 0
    %3050 = vmatprep.subr.bf16.mxu0 0
    %3051 = vmatpush1.bf16.msra.mxu0 %v3048
    %3052 = vmatprep.subr.bf16.mxu0 0
    %3053 = vmatpush1.bf16.msra.mxu0 0
    %3054 = vmatprep.subr.bf16.mxu0 0
    %3055 = vmatpush1.bf16.msra.mxu0 0
    %3056 = vmatprep.subr.bf16.mxu0 0
    %3057 = vmatpush1.bf16.msra.mxu0 0
    %3058 = vmatprep.subr.bf16.mxu0 0
    %3059 = vmatpush1.bf16.msra.mxu0 0
    %3060 = vmatprep.subr.bf16.mxu0 0
    %3061 = vmatpush1.bf16.msra.mxu0 0
    %3062 = vmatprep.subr.bf16.mxu0 0
    %3063 = vmatpush1.bf16.msra.mxu0 0
    %3064 = vmatprep.subr.bf16.mxu0 0
    %3065 = vmatpush1.bf16.msra.mxu0 0
    %3066 = vmatprep.subr.bf16.mxu0 0
    %3067 = vmatpush1.bf16.msra.mxu0 0
    %3068 = vmatprep.subr.bf16.mxu0 0
    %3069 = vmatpush1.bf16.msra.mxu0 0
    %3070 = vmatprep.subr.bf16.mxu0 0
    %3071 = vmatpush1.bf16.msra.mxu0 0
    %3072 = vmatprep.subr.bf16.mxu0 0
    %3073 = vmatpush1.bf16.msra.mxu0 0
    %3074 = vmatprep.subr.bf16.mxu0 0
    %3075 = vmatpush1.bf16.msra.mxu0 0
    %3076 = vmatprep.subr.bf16.mxu0 0
    %3077 = vmatpush1.bf16.msra.mxu0 0
    %3078 = vmatprep.subr.bf16.mxu0 0
    %3079 = vmatpush1.bf16.msra.mxu0 0
    %3080 = vmatprep.subr.bf16.mxu0 0
    %3081 = vmatpush1.bf16.msra.mxu0 0
    %3082 = vmatprep.mubr.bf16.mxu0 0
    %3083 = vmatmul.mubr.bf16.gmra.mrb[0].mxu0 %v3045
    %v3084 = vpop.f32.mrb[0].mxu0
    %v3085 = vadd.f32 0.0, %v3084
    %v3086 = vpop.f32.mrb[0].mxu0
    %v3087 = vpop.f32.mrb[0].mxu0
    %v3088 = vpop.f32.mrb[0].mxu0
    %3089 = vdwg.mxu0
    %3091 = vrot.lane.b32.xlu0 %v2793, 8
    %v3092 = vpop.permute.xlu0 %3091
    %3095 = vrot.lane.b32.xlu0 %v2939, 16
    %v3096 = vpop.permute.xlu0 %3095
    %3099 = vrot.lane.b32.xlu0 %v3085, 24
    %v3100 = vpop.permute.xlu0 %3099
    %v3102 = vsel %vm380, %v2647, %v3092
    %v3103 = vsel %vm946, %v3102, %v3096
    %v3104 = vsel %vm948, %v3103, %v3100
    %s3105 = scalar_lea.vmem %s6, 32
    %v3106 = vld [vmem:[%s3105] sm:$0xff]
    %v3107 = vld [vmem:[%s3105 + $0x8] sm:$0xff]
    %v3108 = vld [vmem:[%s3105 + $0x10] sm:$0xff]
    %v3109 = vld [vmem:[%s3105 + $0x18] sm:$0xff]
    %v3110 = vpack.c.bf16 %v3104, %v2504
    %v3111 = vpack.c.bf16 %v3107, %v3106
    %v3112 = vpack.c.bf16 %v3109, %v3108
    %s3113 = scalar_lea.vmem [#allocation11], 1
    %v3114 = vld [vmem:[%s3113] sm:$0x1]
    %v3116 = vlaneseq
    %v3117 = vshrl.u32 %v3116, 7
    %v3118 = vsub.s32 0, %v3117
    %v3119 = vrot.slane %v3114, %v3118
    %v3122 = vsel %vm239, %v3110, 0
    %3124 = vmatprep.subr.bf16.mxu0 0
    %3125 = vmatpush1.bf16.msra.mxu0 %v3111
    %3126 = vmatprep.subr.bf16.mxu0 0
    %3127 = vmatpush1.bf16.msra.mxu0 %v3112
    %3128 = vmatprep.subr.bf16.mxu0 0
    %3129 = vmatpush1.bf16.msra.mxu0 0
    %3130 = vmatprep.subr.bf16.mxu0 0
    %3131 = vmatpush1.bf16.msra.mxu0 0
    %3132 = vmatprep.subr.bf16.mxu0 0
    %3133 = vmatpush1.bf16.msra.mxu0 0
    %3134 = vmatprep.subr.bf16.mxu0 0
    %3135 = vmatpush1.bf16.msra.mxu0 0
    %3136 = vmatprep.subr.bf16.mxu0 0
    %3137 = vmatpush1.bf16.msra.mxu0 0
    %3138 = vmatprep.subr.bf16.mxu0 0
    %3139 = vmatpush1.bf16.msra.mxu0 0
    %3140 = vmatprep.subr.bf16.mxu0 0
    %3141 = vmatpush1.bf16.msra.mxu0 0
    %3142 = vmatprep.subr.bf16.mxu0 0
    %3143 = vmatpush1.bf16.msra.mxu0 0
    %3144 = vmatprep.subr.bf16.mxu0 0
    %3145 = vmatpush1.bf16.msra.mxu0 0
    %3146 = vmatprep.subr.bf16.mxu0 0
    %3147 = vmatpush1.bf16.msra.mxu0 0
    %3148 = vmatprep.subr.bf16.mxu0 0
    %3149 = vmatpush1.bf16.msra.mxu0 0
    %3150 = vmatprep.subr.bf16.mxu0 0
    %3151 = vmatpush1.bf16.msra.mxu0 0
    %3152 = vmatprep.subr.bf16.mxu0 0
    %3153 = vmatpush1.bf16.msra.mxu0 0
    %3154 = vmatprep.subr.bf16.mxu0 0
    %3155 = vmatpush1.bf16.msra.mxu0 0
    %3156 = vmatprep.mubr.bf16.mxu0 0
    %3157 = vmatmul.mubr.bf16.gmra.mrb[0].mxu0 %v3122
    %v3158 = vpop.f32.mrb[0].mxu0
    %v3159 = vadd.f32 %v3119, %v3158
    %v3160 = vpop.f32.mrb[0].mxu0
    %v3161 = vpop.f32.mrb[0].mxu0
    %v3162 = vadd.f32 %v3119, %v3161
    %v3163 = vpop.f32.mrb[0].mxu0
    %3164 = vdwg.mxu0
    %v3165 = vadd.f32 %v3159, %v1843
    %v3166 = vadd.f32 %v3162, %v1844
    %s3167 = scalar_lea.vmem [#allocation13], 1
    %v3168 = vld [vmem:[%s3167] sm:$0x1]
    %s3169 = scalar_lea.vmem [#allocation14], 1
    %v3170 = vld [vmem:[%s3169] sm:$0x1]
    %v3171 = vsel %vm239, %v3165, 0.0
    %3172 = vadd.xlane.f32.xlu0 %v3171
    %v3173 = vpop.xlane.xlu0 %3172
    %v3174 = vsel %vm239, %v3166, 0.0
    %3175 = vadd.xlane.f32.xlu0 %v3174
    %v3176 = vpop.xlane.xlu0 %3175
    %v3177 = vmul.f32 %v3173, %v246
    %v3178 = vmul.f32 %v3176, %v246
    %v3179 = vsub.f32 %v3165, %v3177
    %v3180 = vsub.f32 %v3166, %v3178
    %v3181 = vmul.f32 %v3179, %v3179
    %v3182 = vmul.f32 %v3180, %v3180
    %v3183 = vsel %vm239, %v3181, 0.0
    %3184 = vadd.xlane.f32.xlu0 %v3183
    %v3185 = vpop.xlane.xlu0 %3184
    %v3186 = vsel %vm239, %v3182, 0.0
    %3187 = vadd.xlane.f32.xlu0 %v3186
    %v3188 = vpop.xlane.xlu0 %3187
    %v3189 = vmul.f32 %v3185, %v246
    %v3190 = vmul.f32 %v3188, %v246
    %v3191 = vadd.f32 %v3189, 1e-12
    %v3192 = vadd.f32 %v3190, 1e-12
    %v3193 = vrsqrt.pop %v3191
    %v3194 = vrsqrt.pop %v3192
    %v3195 = vmul.f32 %v3179, %v3193
    %v3196 = vmul.f32 %v3180, %v3194
    %v3198 = vlaneseq
    %v3199 = vshrl.u32 %v3198, 7
    %v3200 = vsub.s32 0, %v3199
    %v3201 = vrot.slane %v3168, %v3200
    %v3203 = vmul.f32 %v3195, %v3201
    %v3204 = vmul.f32 %v3196, %v3201
    %v3206 = vlaneseq
    %v3207 = vshrl.u32 %v3206, 7
    %v3208 = vsub.s32 0, %v3207
    %v3209 = vrot.slane %v3170, %v3208
    %v3211 = vadd.f32 %v3203, %v3209
    %v3212 = vadd.f32 %v3204, %v3209
    %s3213 = scalar_lea.vmem %s10, 32
    %v3214 = vld [vmem:[%s3213] sm:$0xff]
    %v3215 = vld [vmem:[%s3213 + $0x8] sm:$0xff]
    %v3216 = vld [vmem:[%s3213 + $0x10] sm:$0xff]
    %v3217 = vld [vmem:[%s3213 + $0x18] sm:$0xff]
    %v3218 = vpack.c.bf16 %v3212, %v3211
    %v3219 = vpack.c.bf16 %v3215, %v3214
    %v3220 = vpack.c.bf16 %v3217, %v3216
    %s3221 = scalar_lea.vmem [#allocation16], 1
    %v3222 = vld [vmem:[%s3221] sm:$0x1]
    %v3224 = vlaneseq
    %v3225 = vshrl.u32 %v3224, 7
    %v3226 = vsub.s32 0, %v3225
    %v3227 = vrot.slane %v3222, %v3226
    %v3230 = vsel %vm239, %v3218, 0
    %3232 = vmatprep.subr.bf16.mxu0 0
    %3233 = vmatpush1.bf16.msra.mxu0 %v3219
    %3234 = vmatprep.subr.bf16.mxu0 0
    %3235 = vmatpush1.bf16.msra.mxu0 %v3220
    %3236 = vmatprep.subr.bf16.mxu0 0
    %3237 = vmatpush1.bf16.msra.mxu0 0
    %3238 = vmatprep.subr.bf16.mxu0 0
    %3239 = vmatpush1.bf16.msra.mxu0 0
    %3240 = vmatprep.subr.bf16.mxu0 0
    %3241 = vmatpush1.bf16.msra.mxu0 0
    %3242 = vmatprep.subr.bf16.mxu0 0
    %3243 = vmatpush1.bf16.msra.mxu0 0
    %3244 = vmatprep.subr.bf16.mxu0 0
    %3245 = vmatpush1.bf16.msra.mxu0 0
    %3246 = vmatprep.subr.bf16.mxu0 0
    %3247 = vmatpush1.bf16.msra.mxu0 0
    %3248 = vmatprep.subr.bf16.mxu0 0
    %3249 = vmatpush1.bf16.msra.mxu0 0
    %3250 = vmatprep.subr.bf16.mxu0 0
    %3251 = vmatpush1.bf16.msra.mxu0 0
    %3252 = vmatprep.subr.bf16.mxu0 0
    %3253 = vmatpush1.bf16.msra.mxu0 0
    %3254 = vmatprep.subr.bf16.mxu0 0
    %3255 = vmatpush1.bf16.msra.mxu0 0
    %3256 = vmatprep.subr.bf16.mxu0 0
    %3257 = vmatpush1.bf16.msra.mxu0 0
    %3258 = vmatprep.subr.bf16.mxu0 0
    %3259 = vmatpush1.bf16.msra.mxu0 0
    %3260 = vmatprep.subr.bf16.mxu0 0
    %3261 = vmatpush1.bf16.msra.mxu0 0
    %3262 = vmatprep.subr.bf16.mxu0 0
    %3263 = vmatpush1.bf16.msra.mxu0 0
    %3264 = vmatprep.mubr.bf16.mxu0 0
    %3265 = vmatmul.mubr.bf16.gmra.mrb[0].mxu0 %v3230
    %v3266 = vpop.f32.mrb[0].mxu0
    %v3267 = vadd.f32 %v3227, %v3266
    %v3268 = vpop.f32.mrb[0].mxu0
    %v3269 = vpop.f32.mrb[0].mxu0
    %v3270 = vadd.f32 %v3227, %v3269
    %v3271 = vpop.f32.mrb[0].mxu0
    %3272 = vdwg.mxu0
    %v3273 = vmul.f32 %v3267, 0.5
    %v3274 = vmul.f32 %v3270, 0.5
    %v3275 = vmul.f32 %v3267, 0.044715
    %v3276 = vmul.f32 %v3270, 0.044715
    %v3277 = vmul.f32 %v3275, %v3267
    %v3278 = vmul.f32 %v3276, %v3270
    %v3279 = vmul.f32 %v3277, %v3267
    %v3280 = vmul.f32 %v3278, %v3270
    %v3281 = vadd.f32 %v3267, %v3279
    %v3282 = vadd.f32 %v3270, %v3280
    %v3283 = vmul.f32 %v3281, 0.7978846
    %v3284 = vmul.f32 %v3282, 0.7978846
    %v3285 = vtanh.pop %v3283
    %v3286 = vtanh.pop %v3284
    %v3287 = vadd.f32 %v3285, 1.0
    %v3288 = vadd.f32 %v3286, 1.0
    %v3289 = vmul.f32 %v3273, %v3287
    %v3290 = vmul.f32 %v3274, %v3288
    %s3291 = scalar_lea.vmem %s12, 64
    %v3292 = vld [vmem:[%s3291] sm:$0xff]
    %v3293 = vld [vmem:[%s3291 + $0x8] sm:$0xff]
    %v3294 = vld [vmem:[%s3291 + $0x10] sm:$0xff]
    %v3295 = vld [vmem:[%s3291 + $0x18] sm:$0xff]
    %v3296 = vld [vmem:[%s3291 + $0x20] sm:$0xff]
    %v3297 = vld [vmem:[%s3291 + $0x28] sm:$0xff]
    %v3298 = vld [vmem:[%s3291 + $0x30] sm:$0xff]
    %v3299 = vld [vmem:[%s3291 + $0x38] sm:$0xff]
    %v3300 = vpack.c.bf16 %v3290, %v3289
    %v3301 = vpack.c.bf16 %v3293, %v3292
    %v3302 = vpack.c.bf16 %v3295, %v3294
    %v3303 = vpack.c.bf16 %v3297, %v3296
    %v3304 = vpack.c.bf16 %v3299, %v3298
    %s3305 = scalar_lea.vmem [#allocation17], 1
    %v3306 = vld [vmem:[%s3305] sm:$0x1]
    %v3308 = vlaneseq
    %v3309 = vshrl.u32 %v3308, 7
    %v3310 = vsub.s32 0, %v3309
    %v3311 = vrot.slane %v3306, %v3310
    %v3314 = vsel %vm1754, %v3300, 0
    %3316 = vmatprep.subr.bf16.mxu0 0
    %3317 = vmatpush1.bf16.msra.mxu0 %v3301
    %3318 = vmatprep.subr.bf16.mxu0 0
    %3319 = vmatpush1.bf16.msra.mxu0 %v3302
    %3320 = vmatprep.subr.bf16.mxu0 0
    %3321 = vmatpush1.bf16.msra.mxu0 %v3303
    %3322 = vmatprep.subr.bf16.mxu0 0
    %3323 = vmatpush1.bf16.msra.mxu0 %v3304
    %3324 = vmatprep.subr.bf16.mxu0 0
    %3325 = vmatpush1.bf16.msra.mxu0 0
    %3326 = vmatprep.subr.bf16.mxu0 0
    %3327 = vmatpush1.bf16.msra.mxu0 0
    %3328 = vmatprep.subr.bf16.mxu0 0
    %3329 = vmatpush1.bf16.msra.mxu0 0
    %3330 = vmatprep.subr.bf16.mxu0 0
    %3331 = vmatpush1.bf16.msra.mxu0 0
    %3332 = vmatprep.subr.bf16.mxu0 0
    %3333 = vmatpush1.bf16.msra.mxu0 0
    %3334 = vmatprep.subr.bf16.mxu0 0
    %3335 = vmatpush1.bf16.msra.mxu0 0
    %3336 = vmatprep.subr.bf16.mxu0 0
    %3337 = vmatpush1.bf16.msra.mxu0 0
    %3338 = vmatprep.subr.bf16.mxu0 0
    %3339 = vmatpush1.bf16.msra.mxu0 0
    %3340 = vmatprep.subr.bf16.mxu0 0
    %3341 = vmatpush1.bf16.msra.mxu0 0
    %3342 = vmatprep.subr.bf16.mxu0 0
    %3343 = vmatpush1.bf16.msra.mxu0 0
    %3344 = vmatprep.subr.bf16.mxu0 0
    %3345 = vmatpush1.bf16.msra.mxu0 0
    %3346 = vmatprep.subr.bf16.mxu0 0
    %3347 = vmatpush1.bf16.msra.mxu0 0
    %3348 = vmatprep.mubr.bf16.mxu0 0
    %3349 = vmatmul.mubr.bf16.gmra.mrb[0].mxu0 %v3314
    %v3350 = vpop.f32.mrb[0].mxu0
    %v3351 = vadd.f32 %v3311, %v3350
    %v3352 = vpop.f32.mrb[0].mxu0
    %v3353 = vpop.f32.mrb[0].mxu0
    %v3354 = vadd.f32 %v3311, %v3353
    %v3355 = vpop.f32.mrb[0].mxu0
    %3356 = vdwg.mxu0
    %v3357 = vadd.f32 %v3351, %v3211
    %v3358 = vadd.f32 %v3354, %v3212
    %s3359 = scalar_lea.vmem [#allocation19], 1
    %v3360 = vld [vmem:[%s3359] sm:$0x1]
    %s3361 = scalar_lea.vmem [#allocation20], 1
    %v3362 = vld [vmem:[%s3361] sm:$0x1]
    %v3363 = vsel %vm239, %v3357, 0.0
    %3364 = vadd.xlane.f32.xlu0 %v3363
    %v3365 = vpop.xlane.xlu0 %3364
    %v3366 = vsel %vm239, %v3358, 0.0
    %3367 = vadd.xlane.f32.xlu0 %v3366
    %v3368 = vpop.xlane.xlu0 %3367
    %v3369 = vmul.f32 %v3365, %v246
    %v3370 = vmul.f32 %v3368, %v246
    %v3371 = vsub.f32 %v3357, %v3369
    %v3372 = vsub.f32 %v3358, %v3370
    %v3373 = vmul.f32 %v3371, %v3371
    %v3374 = vmul.f32 %v3372, %v3372
    %v3375 = vsel %vm239, %v3373, 0.0
    %3376 = vadd.xlane.f32.xlu0 %v3375
    %v3377 = vpop.xlane.xlu0 %3376
    %v3378 = vsel %vm239, %v3374, 0.0
    %3379 = vadd.xlane.f32.xlu0 %v3378
    %v3380 = vpop.xlane.xlu0 %3379
    %v3381 = vmul.f32 %v3377, %v246
    %v3382 = vmul.f32 %v3380, %v246
    %v3383 = vadd.f32 %v3381, 1e-12
    %v3384 = vadd.f32 %v3382, 1e-12
    %v3385 = vrsqrt.pop %v3383
    %v3386 = vrsqrt.pop %v3384
    %v3387 = vmul.f32 %v3371, %v3385
    %v3388 = vmul.f32 %v3372, %v3386
    %v3390 = vlaneseq
    %v3391 = vshrl.u32 %v3390, 7
    %v3392 = vsub.s32 0, %v3391
    %v3393 = vrot.slane %v3360, %v3392
    %v3395 = vmul.f32 %v3387, %v3393
    %v3396 = vmul.f32 %v3388, %v3393
    %v3398 = vlaneseq
    %v3399 = vshrl.u32 %v3398, 7
    %v3400 = vsub.s32 0, %v3399
    %v3401 = vrot.slane %v3362, %v3400
    %v3403 = vadd.f32 %v3395, %v3401
    %v3404 = vadd.f32 %v3396, %v3401
    %v3406 = vrot.slane %v3404, 7
    %vm3408 = vcmask 1040384
    %v3409 = vsel %vm3408, %v3403, %v3406
    %v3410 = vld [vmem:[%s16] sm:$0xff]
    %v3411 = vld [vmem:[%s16 + $0x8] sm:$0xff]
    %v3412 = vld [vmem:[%s16 + $0x10] sm:$0xff]
    %v3413 = vld [vmem:[%s16 + $0x18] sm:$0xff]
    %v3414 = vpack.c.bf16 %v3409, %v3409
    %v3415 = vpack.c.bf16 %v3411, %v3410
    %v3416 = vpack.c.bf16 %v3413, %v3412
    %v3417 = vld [vmem:[#allocation22] sm:$0x1]
    %v3419 = vlaneseq
    %v3420 = vshrl.u32 %v3419, 7
    %v3421 = vsub.s32 0, %v3420
    %v3422 = vrot.slane %v3417, %v3421
    %v3425 = vsel %vm239, %v3414, 0
    %3427 = vmatprep.subr.bf16.mxu0 0
    %3428 = vmatpush1.bf16.msra.mxu0 %v3415
    %3429 = vmatprep.subr.bf16.mxu0 0
    %3430 = vmatpush1.bf16.msra.mxu0 %v3416
    %3431 = vmatprep.subr.bf16.mxu0 0
    %3432 = vmatpush1.bf16.msra.mxu0 0
    %3433 = vmatprep.subr.bf16.mxu0 0
    %3434 = vmatpush1.bf16.msra.mxu0 0
    %3435 = vmatprep.subr.bf16.mxu0 0
    %3436 = vmatpush1.bf16.msra.mxu0 0
    %3437 = vmatprep.subr.bf16.mxu0 0
    %3438 = vmatpush1.bf16.msra.mxu0 0
    %3439 = vmatprep.subr.bf16.mxu0 0
    %3440 = vmatpush1.bf16.msra.mxu0 0
    %3441 = vmatprep.subr.bf16.mxu0 0
    %3442 = vmatpush1.bf16.msra.mxu0 0
    %3443 = vmatprep.subr.bf16.mxu0 0
    %3444 = vmatpush1.bf16.msra.mxu0 0
    %3445 = vmatprep.subr.bf16.mxu0 0
    %3446 = vmatpush1.bf16.msra.mxu0 0
    %3447 = vmatprep.subr.bf16.mxu0 0
    %3448 = vmatpush1.bf16.msra.mxu0 0
    %3449 = vmatprep.subr.bf16.mxu0 0
    %3450 = vmatpush1.bf16.msra.mxu0 0
    %3451 = vmatprep.subr.bf16.mxu0 0
    %3452 = vmatpush1.bf16.msra.mxu0 0
    %3453 = vmatprep.subr.bf16.mxu0 0
    %3454 = vmatpush1.bf16.msra.mxu0 0
    %3455 = vmatprep.subr.bf16.mxu0 0
    %3456 = vmatpush1.bf16.msra.mxu0 0
    %3457 = vmatprep.subr.bf16.mxu0 0
    %3458 = vmatpush1.bf16.msra.mxu0 0
    %3459 = vmatprep.mubr.bf16.mxu0 0
    %3460 = vmatmul.mubr.bf16.gmra.mrb[0].mxu0 %v3425
    %v3461 = vpop.f32.mrb[0].mxu0
    %v3462 = vadd.f32 %v3422, %v3461
    %v3463 = vpop.f32.mrb[0].mxu0
    %v3464 = vpop.f32.mrb[0].mxu0
    %v3465 = vpop.f32.mrb[0].mxu0
    %3466 = vdwg.mxu0
    %v3467 = vtanh.pop %v3462
    %v3468 = vld [vmem:[%s18] sm:$0xff]
    %v3469 = vld [vmem:[%s18 + $0x8] sm:$0xff]
    %v3470 = vld [vmem:[%s18 + $0x10] sm:$0xff]
    %v3471 = vld [vmem:[%s18 + $0x18] sm:$0xff]
    %v3472 = vpack.c.bf16 %v3467, %v3467
    %v3473 = vpack.c.bf16 %v3469, %v3468
    %v3474 = vpack.c.bf16 %v3471, %v3470
    %v3475 = vld [vmem:[%s19] sm:$0x1]
    %v3477 = vlaneseq
    %v3478 = vshrl.u32 %v3477, 7
    %v3479 = vsub.s32 0, %v3478
    %v3480 = vrot.slane %v3475, %v3479
    %v3483 = vsel %vm239, %v3472, 0
    %3485 = vmatprep.subr.bf16.mxu0 0
    %3486 = vmatpush1.bf16.msra.mxu0 %v3473
    %3487 = vmatprep.subr.bf16.mxu0 0
    %3488 = vmatpush1.bf16.msra.mxu0 %v3474
    %3489 = vmatprep.subr.bf16.mxu0 0
    %3490 = vmatpush1.bf16.msra.mxu0 0
    %3491 = vmatprep.subr.bf16.mxu0 0
    %3492 = vmatpush1.bf16.msra.mxu0 0
    %3493 = vmatprep.subr.bf16.mxu0 0
    %3494 = vmatpush1.bf16.msra.mxu0 0
    %3495 = vmatprep.subr.bf16.mxu0 0
    %3496 = vmatpush1.bf16.msra.mxu0 0
    %3497 = vmatprep.subr.bf16.mxu0 0
    %3498 = vmatpush1.bf16.msra.mxu0 0
    %3499 = vmatprep.subr.bf16.mxu0 0
    %3500 = vmatpush1.bf16.msra.mxu0 0
    %3501 = vmatprep.subr.bf16.mxu0 0
    %3502 = vmatpush1.bf16.msra.mxu0 0
    %3503 = vmatprep.subr.bf16.mxu0 0
    %3504 = vmatpush1.bf16.msra.mxu0 0
    %3505 = vmatprep.subr.bf16.mxu0 0
    %3506 = vmatpush1.bf16.msra.mxu0 0
    %3507 = vmatprep.subr.bf16.mxu0 0
    %3508 = vmatpush1.bf16.msra.mxu0 0
    %3509 = vmatprep.subr.bf16.mxu0 0
    %3510 = vmatpush1.bf16.msra.mxu0 0
    %3511 = vmatprep.subr.bf16.mxu0 0
    %3512 = vmatpush1.bf16.msra.mxu0 0
    %3513 = vmatprep.subr.bf16.mxu0 0
    %3514 = vmatpush1.bf16.msra.mxu0 0
    %3515 = vmatprep.subr.bf16.mxu0 0
    %3516 = vmatpush1.bf16.msra.mxu0 0
    %3517 = vmatprep.mubr.bf16.mxu0 0
    %3518 = vmatmul.mubr.bf16.gmra.mrb[0].mxu0 %v3483
    %v3519 = vpop.f32.mrb[0].mxu0
    %v3520 = vadd.f32 %v3480, %v3519
    %v3521 = vpop.f32.mrb[0].mxu0
    %v3522 = vpop.f32.mrb[0].mxu0
    %v3523 = vpop.f32.mrb[0].mxu0
    %3524 = vdwg.mxu0
    %3525 = vst [vmem:[#allocation23] sm:$0x3] %v3520
    // Predicated region
    $region134: #{tpu_custom_call.1} parent=1 // pred_check
      _
    $region135: #{tpu_custom_call.1} parent=1 // pred_check_branch
      %3527 = sbr.rel (0) target = $region137
    $region136: #{tpu_custom_call.1} parent=1 // pred_region
      %s3529 = ssub.s32 32, 32
      %3530 = vsyncadd [#allocation4], %s3529
      %s3532 = sshll.u32 [#allocation23], 4
      %s3533 = int_to_ptr.vmem [resolvable:$true] %s3532
      %3535 = dma.vmem_to_hbm [thread:$0]  %s3533, 32, %s20, [#allocation4]
    $region137: #{tpu_custom_call.1} parent=1 // pred_fallthru
      _
    // Predicated region
    $region138: #{tpu_custom_call.1} parent=1 // pred_check
      _
    $region139: #{tpu_custom_call.1} parent=1 // pred_check_branch
      %3537 = sbr.rel (0) target = $region141
    $region140: #{tpu_custom_call.1} parent=1 // pred_region
      %3538 = dma.done [#allocation4], 32
    $region141: #{tpu_custom_call.1} parent=1 // pred_fallthru
      _
    %3539 = vsyncpa [#allocation3], 1
    %3540 = vsyncpa [#allocation6], 1
    %3541 = vsyncpa [#allocation9], 1
    %3542 = vsyncpa [#allocation12], 1
    %3543 = vsyncpa [#allocation15], 1
    %3544 = vsyncpa [#allocation18], 1
    %3545 = vsyncpa [#allocation21], 1
    %3546 = vsyncpa [#allocation4], 1

</llo_original>
